<compile_context>
chip_gen: v6e
topology: v6e:2x2x1
jax: 0.10.0
libtpu: 0.0.40
codegen_flags: <defaults>
</compile_context>

<pallas_src>
import functools
import math

import jax
import jax.numpy as jnp
from jax.experimental import pallas as pl
from jax.experimental.pallas import tpu as pltpu


# ------------------------------ fused decoder-stack kernel ---------------------------

# Packed per-layer "vecs" rows (all length D, f32):
#   0-3  : self-attn  bq, bk, bv, bo        4-5  : LN1 gamma, beta
#   6-9  : cross-attn bq, bk, bv, bo        10-11: LN2 gamma, beta
#   12   : linear2 bias                     13-14: LN3 gamma, beta
#   15   : zero pad (sublane multiple)
_NVEC = 16


def _decoder_stack_kernel(x_ref, mem_ref, attn_w_ref, w1_ref, w2_ref, b1_ref, vecs_ref,
                          o_ref, h_ref, *, nhead, eps, scale):
    """Grid = (batch, layer). One invocation = one decoder layer for one batch element."""
    layer = pl.program_id(1)
    S, D = o_ref.shape
    hd = D // nhead

    # Initialize the resident residual stream from the query input at layer 0.
    @pl.when(layer == 0)
    def _():
        h_ref[...] = x_ref[...].astype(jnp.float32)

    def vrow(i):                                         # (1, D) f32 parameter row
        return vecs_ref[pl.ds(i, 1), :]

    def add_ln(base, delta, gi, bi):
        # LayerNorm(base + delta) with biased variance (PyTorch semantics), f32.
        h = base + delta
        mu = jnp.mean(h, axis=-1, keepdims=True)
        var = jnp.mean(jnp.square(h - mu), axis=-1, keepdims=True)
        return (h - mu) * jax.lax.rsqrt(var + eps) * vrow(gi) + vrow(bi)

    def mha(xq, xkv, wbase, brow):
        # Per-head Q/K/V/Wo weights are separate (D, hd) matrices selected by a static
        # leading-axis index -> no K|V lane split, no per-head slices of activations,
        # no head concat (output projections are accumulated instead).
        xq_b = xq.astype(jnp.bfloat16)
        xkv_b = xkv.astype(jnp.bfloat16)
        bq, bk, bv = vrow(brow), vrow(brow + 1), vrow(brow + 2)
        out = None
        for h in range(nhead):                           # static, tiny head count
            lo = h * hd
            q = jnp.dot(xq_b, attn_w_ref[wbase + h],
                        preferred_element_type=jnp.float32) + bq[:, lo:lo + hd]
            k = jnp.dot(xkv_b, attn_w_ref[wbase + nhead + h],
                        preferred_element_type=jnp.float32) + bk[:, lo:lo + hd]
            v = jnp.dot(xkv_b, attn_w_ref[wbase + 2 * nhead + h],
                        preferred_element_type=jnp.float32) + bv[:, lo:lo + hd]
            s = jax.lax.dot_general(q.astype(jnp.bfloat16), k.astype(jnp.bfloat16),
                                    (((1,), (1,)), ((), ())),
                                    preferred_element_type=jnp.float32) * scale
            m = jnp.max(s, axis=-1, keepdims=True)
            e = jnp.exp(s - m)
            r = pl.reciprocal(jnp.sum(e, axis=-1, keepdims=True), approx=True)
            ctx = jnp.dot((e * r).astype(jnp.bfloat16), v.astype(jnp.bfloat16),
                          preferred_element_type=jnp.float32)
            # Output projection of this head: ctx @ woT_h.T  (woT_h stored as (D, hd)).
            o_h = jax.lax.dot_general(ctx.astype(jnp.bfloat16),
                                      attn_w_ref[wbase + 3 * nhead + h],
                                      (((1,), (1,)), ((), ())),
                                      preferred_element_type=jnp.float32)
            out = o_h if out is None else out + o_h
        return out + vrow(brow + 3)

    x = h_ref[...]                                       # (S, D) f32 residual stream
    mem = mem_ref[...].astype(jnp.float32)               # (Sm, D)

    # self-attention block + residual + norm1
    x = add_ln(x, mha(x, x, 0, 0), 4, 5)
    # cross-attention block + residual + norm2
    x = add_ln(x, mha(x, mem, 4 * nhead, 6), 10, 11)
    # feed-forward block (intermediate stays on-chip) + residual + norm3
    hmid = jnp.maximum(
        jnp.dot(x.astype(jnp.bfloat16), w1_ref[...],
                preferred_element_type=jnp.float32) + b1_ref[...], 0.0)
    ff = jnp.dot(hmid.astype(jnp.bfloat16), w2_ref[...],
                 preferred_element_type=jnp.float32) + vrow(12)
    x = add_ln(x, ff, 13, 14)

    h_ref[...] = x                                       # carry to next layer
    o_ref[...] = x.astype(o_ref.dtype)


def transformer_attention_forward(queries, memory_features, params, nhead, eps=1e-5):
    """queries: (B, Sq, D); memory_features: (B, Sk, D). One pallas_call for all layers."""
    B, S, D = queries.shape
    Sm = memory_features.shape[1]
    L = params["attn_w"].shape[0]
    FF = params["w1"].shape[-1]
    assert D % nhead == 0
    hd = D // nhead
    scale = 1.0 / math.sqrt(hd)

    kernel = functools.partial(_decoder_stack_kernel, nhead=nhead, eps=eps, scale=scale)
    out = pl.pallas_call(
        kernel,
        out_shape=jax.ShapeDtypeStruct((B, S, D), queries.dtype),
        grid=(B, L),
        in_specs=[
            # activations: resident across the layer axis (fetched once per batch)
            pl.BlockSpec((None, S, D), lambda b, l: (b, 0, 0)),          # queries
            pl.BlockSpec((None, Sm, D), lambda b, l: (b, 0, 0)),         # memory
            # per-layer weights (bf16), indexed only by the layer grid axis
            pl.BlockSpec((None, 8 * nhead, D, hd), lambda b, l: (l, 0, 0, 0)),  # attn W
            pl.BlockSpec((None, D, FF), lambda b, l: (l, 0, 0)),         # linear1 W
            pl.BlockSpec((None, FF, D), lambda b, l: (l, 0, 0)),         # linear2 W
            pl.BlockSpec((None, 1, FF), lambda b, l: (l, 0, 0)),         # linear1 bias
            pl.BlockSpec((None, _NVEC, D), lambda b, l: (l, 0, 0)),      # packed biases/LN
        ],
        out_specs=pl.BlockSpec((None, S, D), lambda b, l: (b, 0, 0)),
        scratch_shapes=[pltpu.VMEM((S, D), jnp.float32)],                # residual carry
        compiler_params=pltpu.CompilerParams(
            dimension_semantics=("parallel", "arbitrary"),
            vmem_limit_bytes=32 * 1024 * 1024),
    )(queries, memory_features, params["attn_w"], params["w1"], params["w2"],
      params["b1"], params["vecs"])
    return out  # nn.TransformerDecoder(norm=None): no final norm


# ------------------------------ parameter init --------------------------------

def _xavier_uniform(key, shape):
    fan_out, fan_in = shape  # PyTorch Linear / in_proj weight layout (out, in)
    bound = math.sqrt(6.0 / (fan_in + fan_out))
    return jax.random.uniform(key, shape, jnp.float32, -bound, bound)


def init_params(key, d_model, nhead, num_layers, dim_feedforward=2048):
    D, FF, L, H = d_model, dim_feedforward, num_layers, nhead
    hd = D // H

    def head_cols(w):  # (D, D) -> [H x (D, hd)] split along the output/last axis
        return [w[:, h * hd:(h + 1) * hd] for h in range(H)]

    def pack_attn(k_in, k_out):
        # PyTorch MHA: xavier on the stacked (3D, D) in_proj weight, xavier on out_proj.
        in_proj = _xavier_uniform(k_in, (3 * D, D))
        wq, wk, wv = jnp.split(in_proj, 3, axis=0)      # torch layout (out, in)
        wo = _xavier_uniform(k_out, (D, D))             # torch layout (out, in)
        mats = []
        for w in (wq, wk, wv):
            mats += head_cols(w.T)                      # per-head (D, hd) of x @ w.T
        mats += head_cols(wo)                           # woT_h = wo[:, h*hd:(h+1)*hd]
        return mats                                     # 4*H matrices of (D, hd)

    attn_w, w1s, w2s, b1s, vecs = [], [], [], [], []
    zero = jnp.zeros((D,), jnp.float32)
    one = jnp.ones((D,), jnp.float32)
    for _ in range(L):
        key, k1, k2, k3, k4, k5, k6, k7, k8 = jax.random.split(key, 9)
        mats = pack_attn(k1, k2) + pack_attn(k3, k4)            # self then cross
        attn_w.append(jnp.stack(mats).astype(jnp.bfloat16))     # (8H, D, hd)
        w1s.append(_xavier_uniform(k5, (FF, D)).T.astype(jnp.bfloat16))   # (D, FF)
        w2s.append(_xavier_uniform(k6, (D, FF)).T.astype(jnp.bfloat16))   # (FF, D)
        # Linear biases keep PyTorch's default init (the module's xavier reset only
        # touches params with dim > 1); MHA in_proj / out_proj biases are zeroed.
        b1s.append(jax.random.uniform(k7, (1, FF), jnp.float32,
                                      -1.0 / math.sqrt(D), 1.0 / math.sqrt(D)))
        b2 = jax.random.uniform(k8, (D,), jnp.float32,
                                -1.0 / math.sqrt(FF), 1.0 / math.sqrt(FF))
        vecs.append(jnp.stack([
            zero, zero, zero, zero,   # self-attn bq, bk, bv, bo
            one, zero,                # LN1 gamma, beta
            zero, zero, zero, zero,   # cross-attn bq, bk, bv, bo
            one, zero,                # LN2 gamma, beta
            b2, one, zero,            # linear2 bias, LN3 gamma, beta
            zero,                     # pad to 16 rows
        ]))
    return dict(attn_w=jnp.stack(attn_w),   # (L, 8H, D, hd) bf16
                w1=jnp.stack(w1s),          # (L, D, FF)     bf16
                w2=jnp.stack(w2s),          # (L, FF, D)     bf16
                b1=jnp.stack(b1s),          # (L, 1, FF)     f32
                vecs=jnp.stack(vecs))       # (L, 16, D)     f32


# ----------------------------------- main -------------------------------------

if __name__ == "__main__":
    B, S_Q, S_MEM = 2, 8, 8
    D_MODEL, NHEAD, NUM_LAYERS = 32, 2, 5
    DIM_FF = 2048  # nn.TransformerDecoderLayer default

    root = jax.random.PRNGKey(0)
    k_q, k_m, k_p = jax.random.split(root, 3)
    queries = jax.random.normal(k_q, (B, S_Q, D_MODEL), jnp.float32)
    memory_features = jax.random.normal(k_m, (B, S_MEM, D_MODEL), jnp.float32)
    params = init_params(k_p, D_MODEL, NHEAD, NUM_LAYERS, DIM_FF)

    fwd = jax.jit(functools.partial(transformer_attention_forward, nhead=NHEAD))
    out = jax.block_until_ready(fwd(queries, memory_features, params))
    assert out.shape == (B, S_Q, D_MODEL)
    assert bool(jnp.all(jnp.isfinite(out)))
    print("KERNEL_OK")
</pallas_src>

<mosaic_0001>
module attributes {stable_mosaic.version = 11 : i64} {
  func.func @_decoder_stack_kernel(%arg0: i32, %arg1: i32, %arg2: memref<1x8x32xf32, #tpu.memory_space<vmem>>, %arg3: memref<1x8x32xf32, #tpu.memory_space<vmem>>, %arg4: memref<1x16x32x16xbf16, #tpu.memory_space<vmem>>, %arg5: memref<1x32x2048xbf16, #tpu.memory_space<vmem>>, %arg6: memref<1x2048x32xbf16, #tpu.memory_space<vmem>>, %arg7: memref<1x1x2048xf32, #tpu.memory_space<vmem>>, %arg8: memref<1x16x32xf32, #tpu.memory_space<vmem>>, %arg9: memref<1x8x32xf32, #tpu.memory_space<vmem>>, %arg10: memref<8x32xf32, #tpu.memory_space<vmem>>) attributes {dimension_semantics = [#tpu.dimension_semantics<parallel>, #tpu.dimension_semantics<arbitrary>], iteration_bounds = array<i64: 2, 5>, scalar_prefetch = 0 : i64, scratch_operands = 1 : i64, tpu.core_type = #tpu.core_type<tc>, window_params = [{transform_indices = @transform_0, window_bounds = array<i64: 1, 8, 32>}, {transform_indices = @transform_1, window_bounds = array<i64: 1, 8, 32>}, {transform_indices = @transform_2, window_bounds = array<i64: 1, 16, 32, 16>}, {transform_indices = @transform_3, window_bounds = array<i64: 1, 32, 2048>}, {transform_indices = @transform_4, window_bounds = array<i64: 1, 2048, 32>}, {transform_indices = @transform_5, window_bounds = array<i64: 1, 1, 2048>}, {transform_indices = @transform_6, window_bounds = array<i64: 1, 16, 32>}, {transform_indices = @transform_7, window_bounds = array<i64: 1, 8, 32>}]} {
    %c0_i32 = arith.constant 0 : i32
    %0 = arith.cmpi eq, %arg1, %c0_i32 : i32
    %1 = arith.extui %0 : i1 to i32
    %c0_i32_0 = arith.constant 0 : i32
    %2 = arith.cmpi ne, %1, %c0_i32_0 : i32
    scf.if %2 {
      %c0_166 = arith.constant 0 : index
      %c0_167 = arith.constant 0 : index
      %c0_168 = arith.constant 0 : index
      %295 = vector.load %arg2[%c0_166, %c0_167, %c0_168] : memref<1x8x32xf32, #tpu.memory_space<vmem>>, vector<1x8x32xf32>
      %296 = vector.shape_cast %295 : vector<1x8x32xf32> to vector<8x32xf32>
      %c0_169 = arith.constant 0 : index
      %c0_170 = arith.constant 0 : index
      %297 = vector.load %arg10[%c0_169, %c0_170] : memref<8x32xf32, #tpu.memory_space<vmem>>, vector<8x32xf32>
      tpu.vector_store %arg10[%c0_169, %c0_170], %296 {strides = array<i32>} : memref<8x32xf32, #tpu.memory_space<vmem>>, vector<8x32xf32>,
    } else {
    }
    %c0 = arith.constant 0 : index
    %c0_1 = arith.constant 0 : index
    %3 = vector.load %arg10[%c0, %c0_1] : memref<8x32xf32, #tpu.memory_space<vmem>>, vector<8x32xf32>
    %c0_2 = arith.constant 0 : index
    %c0_3 = arith.constant 0 : index
    %c0_4 = arith.constant 0 : index
    %4 = vector.load %arg3[%c0_2, %c0_3, %c0_4] : memref<1x8x32xf32, #tpu.memory_space<vmem>>, vector<1x8x32xf32>
    %5 = vector.shape_cast %4 : vector<1x8x32xf32> to vector<8x32xf32>
    %6 = arith.truncf %3 : vector<8x32xf32> to vector<8x32xbf16>
    %7 = arith.truncf %3 : vector<8x32xf32> to vector<8x32xbf16>
    %c0_5 = arith.constant 0 : index
    %c0_6 = arith.constant 0 : index
    %c0_7 = arith.constant 0 : index
    %8 = vector.load %arg8[%c0_5, %c0_6, %c0_7] : memref<1x16x32xf32, #tpu.memory_space<vmem>>, vector<1x1x32xf32>
    %9 = vector.shape_cast %8 : vector<1x1x32xf32> to vector<1x32xf32>
    %c0_8 = arith.constant 0 : index
    %c1 = arith.constant 1 : index
    %c0_9 = arith.constant 0 : index
    %10 = vector.load %arg8[%c0_8, %c1, %c0_9] : memref<1x16x32xf32, #tpu.memory_space<vmem>>, vector<1x1x32xf32>
    %11 = vector.shape_cast %10 : vector<1x1x32xf32> to vector<1x32xf32>
    %c0_10 = arith.constant 0 : index
    %c2 = arith.constant 2 : index
    %c0_11 = arith.constant 0 : index
    %12 = vector.load %arg8[%c0_10, %c2, %c0_11] : memref<1x16x32xf32, #tpu.memory_space<vmem>>, vector<1x1x32xf32>
    %13 = vector.shape_cast %12 : vector<1x1x32xf32> to vector<1x32xf32>
    %c0_12 = arith.constant 0 : index
    %c0_13 = arith.constant 0 : index
    %c0_14 = arith.constant 0 : index
    %c0_15 = arith.constant 0 : index
    %14 = vector.load %arg4[%c0_12, %c0_13, %c0_14, %c0_15] : memref<1x16x32x16xbf16, #tpu.memory_space<vmem>>, vector<1x1x32x16xbf16>
    %15 = vector.shape_cast %14 : vector<1x1x32x16xbf16> to vector<32x16xbf16>
    %cst = arith.constant dense<0.000000e+00> : vector<8x16xf32>
    %16 = tpu.matmul %6, %15, %cst {dimension_numbers = #tpu.dot_dimension_numbers<[1], [0], [0], [1], [0, 0, 1, 1], [], []>} : vector<8x32xbf16>, vector<32x16xbf16>, vector<8x16xf32> -> vector<8x16xf32>
    %17 = vector.extract_strided_slice %9 {offsets = [0, 0], sizes = [1, 16], strides = [1, 1]} : vector<1x32xf32> to vector<1x16xf32>
    %18 = vector.broadcast %17 : vector<1x16xf32> to vector<8x16xf32>
    %19 = arith.addf %16, %18 : vector<8x16xf32>
    %c0_16 = arith.constant 0 : index
    %c2_17 = arith.constant 2 : index
    %c0_18 = arith.constant 0 : index
    %c0_19 = arith.constant 0 : index
    %20 = vector.load %arg4[%c0_16, %c2_17, %c0_18, %c0_19] : memref<1x16x32x16xbf16, #tpu.memory_space<vmem>>, vector<1x1x32x16xbf16>
    %21 = vector.shape_cast %20 : vector<1x1x32x16xbf16> to vector<32x16xbf16>
    %cst_20 = arith.constant dense<0.000000e+00> : vector<8x16xf32>
    %22 = tpu.matmul %7, %21, %cst_20 {dimension_numbers = #tpu.dot_dimension_numbers<[1], [0], [0], [1], [0, 0, 1, 1], [], []>} : vector<8x32xbf16>, vector<32x16xbf16>, vector<8x16xf32> -> vector<8x16xf32>
    %23 = vector.extract_strided_slice %11 {offsets = [0, 0], sizes = [1, 16], strides = [1, 1]} : vector<1x32xf32> to vector<1x16xf32>
    %24 = vector.broadcast %23 : vector<1x16xf32> to vector<8x16xf32>
    %25 = arith.addf %22, %24 : vector<8x16xf32>
    %c0_21 = arith.constant 0 : index
    %c4 = arith.constant 4 : index
    %c0_22 = arith.constant 0 : index
    %c0_23 = arith.constant 0 : index
    %26 = vector.load %arg4[%c0_21, %c4, %c0_22, %c0_23] : memref<1x16x32x16xbf16, #tpu.memory_space<vmem>>, vector<1x1x32x16xbf16>
    %27 = vector.shape_cast %26 : vector<1x1x32x16xbf16> to vector<32x16xbf16>
    %cst_24 = arith.constant dense<0.000000e+00> : vector<8x16xf32>
    %28 = tpu.matmul %7, %27, %cst_24 {dimension_numbers = #tpu.dot_dimension_numbers<[1], [0], [0], [1], [0, 0, 1, 1], [], []>} : vector<8x32xbf16>, vector<32x16xbf16>, vector<8x16xf32> -> vector<8x16xf32>
    %29 = vector.extract_strided_slice %13 {offsets = [0, 0], sizes = [1, 16], strides = [1, 1]} : vector<1x32xf32> to vector<1x16xf32>
    %30 = vector.broadcast %29 : vector<1x16xf32> to vector<8x16xf32>
    %31 = arith.addf %28, %30 : vector<8x16xf32>
    %32 = arith.truncf %19 : vector<8x16xf32> to vector<8x16xbf16>
    %33 = arith.truncf %25 : vector<8x16xf32> to vector<8x16xbf16>
    %cst_25 = arith.constant dense<0.000000e+00> : vector<8x8xf32>
    %34 = tpu.matmul %32, %33, %cst_25 {dimension_numbers = #tpu.dot_dimension_numbers<[1], [1], [0], [0], [0, 0, 1, 0], [], []>} : vector<8x16xbf16>, vector<8x16xbf16>, vector<8x8xf32> -> vector<8x8xf32>
    %cst_26 = arith.constant 2.500000e-01 : f32
    %35 = vector.broadcast %cst_26 : f32 to vector<8x8xf32>
    %36 = arith.mulf %34, %35 : vector<8x8xf32>
    %cst_27 = arith.constant dense<0xFF800000> : vector<8xf32>
    %37 = vector.multi_reduction <maximumf>, %36, %cst_27 [1] : vector<8x8xf32> to vector<8xf32>
    %38 = vector.shape_cast %37 : vector<8xf32> to vector<8x1xf32>
    %39 = vector.broadcast %38 : vector<8x1xf32> to vector<8x8xf32>
    %40 = arith.subf %36, %39 : vector<8x8xf32>
    %41 = math.exp %40 : vector<8x8xf32>
    %cst_28 = arith.constant dense<0.000000e+00> : vector<8xf32>
    %42 = vector.multi_reduction <add>, %41, %cst_28 [1] : vector<8x8xf32> to vector<8xf32>
    %43 = vector.shape_cast %42 : vector<8xf32> to vector<8x1xf32>
    %44 = tpu.reciprocal %43 {approx = true} : vector<8x1xf32> -> vector<8x1xf32>
    %45 = vector.broadcast %44 : vector<8x1xf32> to vector<8x8xf32>
    %46 = arith.mulf %41, %45 : vector<8x8xf32>
    %47 = arith.truncf %46 : vector<8x8xf32> to vector<8x8xbf16>
    %48 = arith.truncf %31 : vector<8x16xf32> to vector<8x16xbf16>
    %cst_29 = arith.constant dense<0.000000e+00> : vector<8x16xf32>
    %49 = tpu.matmul %47, %48, %cst_29 {dimension_numbers = #tpu.dot_dimension_numbers<[1], [0], [0], [1], [0, 0, 1, 1], [], []>} : vector<8x8xbf16>, vector<8x16xbf16>, vector<8x16xf32> -> vector<8x16xf32>
    %50 = arith.truncf %49 : vector<8x16xf32> to vector<8x16xbf16>
    %c0_30 = arith.constant 0 : index
    %c6 = arith.constant 6 : index
    %c0_31 = arith.constant 0 : index
    %c0_32 = arith.constant 0 : index
    %51 = vector.load %arg4[%c0_30, %c6, %c0_31, %c0_32] : memref<1x16x32x16xbf16, #tpu.memory_space<vmem>>, vector<1x1x32x16xbf16>
    %52 = vector.shape_cast %51 : vector<1x1x32x16xbf16> to vector<32x16xbf16>
    %cst_33 = arith.constant dense<0.000000e+00> : vector<8x32xf32>
    %53 = tpu.matmul %50, %52, %cst_33 {dimension_numbers = #tpu.dot_dimension_numbers<[1], [1], [0], [0], [0, 0, 1, 0], [], []>} : vector<8x16xbf16>, vector<32x16xbf16>, vector<8x32xf32> -> vector<8x32xf32>
    %c0_34 = arith.constant 0 : index
    %c1_35 = arith.constant 1 : index
    %c0_36 = arith.constant 0 : index
    %c0_37 = arith.constant 0 : index
    %54 = vector.load %arg4[%c0_34, %c1_35, %c0_36, %c0_37] : memref<1x16x32x16xbf16, #tpu.memory_space<vmem>>, vector<1x1x32x16xbf16>
    %55 = vector.shape_cast %54 : vector<1x1x32x16xbf16> to vector<32x16xbf16>
    %cst_38 = arith.constant dense<0.000000e+00> : vector<8x16xf32>
    %56 = tpu.matmul %6, %55, %cst_38 {dimension_numbers = #tpu.dot_dimension_numbers<[1], [0], [0], [1], [0, 0, 1, 1], [], []>} : vector<8x32xbf16>, vector<32x16xbf16>, vector<8x16xf32> -> vector<8x16xf32>
    %57 = vector.extract_strided_slice %9 {offsets = [0, 16], sizes = [1, 16], strides = [1, 1]} : vector<1x32xf32> to vector<1x16xf32>
    %58 = vector.broadcast %57 : vector<1x16xf32> to vector<8x16xf32>
    %59 = arith.addf %56, %58 : vector<8x16xf32>
    %c0_39 = arith.constant 0 : index
    %c3 = arith.constant 3 : index
    %c0_40 = arith.constant 0 : index
    %c0_41 = arith.constant 0 : index
    %60 = vector.load %arg4[%c0_39, %c3, %c0_40, %c0_41] : memref<1x16x32x16xbf16, #tpu.memory_space<vmem>>, vector<1x1x32x16xbf16>
    %61 = vector.shape_cast %60 : vector<1x1x32x16xbf16> to vector<32x16xbf16>
    %cst_42 = arith.constant dense<0.000000e+00> : vector<8x16xf32>
    %62 = tpu.matmul %7, %61, %cst_42 {dimension_numbers = #tpu.dot_dimension_numbers<[1], [0], [0], [1], [0, 0, 1, 1], [], []>} : vector<8x32xbf16>, vector<32x16xbf16>, vector<8x16xf32> -> vector<8x16xf32>
    %63 = vector.extract_strided_slice %11 {offsets = [0, 16], sizes = [1, 16], strides = [1, 1]} : vector<1x32xf32> to vector<1x16xf32>
    %64 = vector.broadcast %63 : vector<1x16xf32> to vector<8x16xf32>
    %65 = arith.addf %62, %64 : vector<8x16xf32>
    %c0_43 = arith.constant 0 : index
    %c5 = arith.constant 5 : index
    %c0_44 = arith.constant 0 : index
    %c0_45 = arith.constant 0 : index
    %66 = vector.load %arg4[%c0_43, %c5, %c0_44, %c0_45] : memref<1x16x32x16xbf16, #tpu.memory_space<vmem>>, vector<1x1x32x16xbf16>
    %67 = vector.shape_cast %66 : vector<1x1x32x16xbf16> to vector<32x16xbf16>
    %cst_46 = arith.constant dense<0.000000e+00> : vector<8x16xf32>
    %68 = tpu.matmul %7, %67, %cst_46 {dimension_numbers = #tpu.dot_dimension_numbers<[1], [0], [0], [1], [0, 0, 1, 1], [], []>} : vector<8x32xbf16>, vector<32x16xbf16>, vector<8x16xf32> -> vector<8x16xf32>
    %69 = vector.extract_strided_slice %13 {offsets = [0, 16], sizes = [1, 16], strides = [1, 1]} : vector<1x32xf32> to vector<1x16xf32>
    %70 = vector.broadcast %69 : vector<1x16xf32> to vector<8x16xf32>
    %71 = arith.addf %68, %70 : vector<8x16xf32>
    %72 = arith.truncf %59 : vector<8x16xf32> to vector<8x16xbf16>
    %73 = arith.truncf %65 : vector<8x16xf32> to vector<8x16xbf16>
    %cst_47 = arith.constant dense<0.000000e+00> : vector<8x8xf32>
    %74 = tpu.matmul %72, %73, %cst_47 {dimension_numbers = #tpu.dot_dimension_numbers<[1], [1], [0], [0], [0, 0, 1, 0], [], []>} : vector<8x16xbf16>, vector<8x16xbf16>, vector<8x8xf32> -> vector<8x8xf32>
    %cst_48 = arith.constant 2.500000e-01 : f32
    %75 = vector.broadcast %cst_48 : f32 to vector<8x8xf32>
    %76 = arith.mulf %74, %75 : vector<8x8xf32>
    %cst_49 = arith.constant dense<0xFF800000> : vector<8xf32>
    %77 = vector.multi_reduction <maximumf>, %76, %cst_49 [1] : vector<8x8xf32> to vector<8xf32>
    %78 = vector.shape_cast %77 : vector<8xf32> to vector<8x1xf32>
    %79 = vector.broadcast %78 : vector<8x1xf32> to vector<8x8xf32>
    %80 = arith.subf %76, %79 : vector<8x8xf32>
    %81 = math.exp %80 : vector<8x8xf32>
    %cst_50 = arith.constant dense<0.000000e+00> : vector<8xf32>
    %82 = vector.multi_reduction <add>, %81, %cst_50 [1] : vector<8x8xf32> to vector<8xf32>
    %83 = vector.shape_cast %82 : vector<8xf32> to vector<8x1xf32>
    %84 = tpu.reciprocal %83 {approx = true} : vector<8x1xf32> -> vector<8x1xf32>
    %85 = vector.broadcast %84 : vector<8x1xf32> to vector<8x8xf32>
    %86 = arith.mulf %81, %85 : vector<8x8xf32>
    %87 = arith.truncf %86 : vector<8x8xf32> to vector<8x8xbf16>
    %88 = arith.truncf %71 : vector<8x16xf32> to vector<8x16xbf16>
    %cst_51 = arith.constant dense<0.000000e+00> : vector<8x16xf32>
    %89 = tpu.matmul %87, %88, %cst_51 {dimension_numbers = #tpu.dot_dimension_numbers<[1], [0], [0], [1], [0, 0, 1, 1], [], []>} : vector<8x8xbf16>, vector<8x16xbf16>, vector<8x16xf32> -> vector<8x16xf32>
    %90 = arith.truncf %89 : vector<8x16xf32> to vector<8x16xbf16>
    %c0_52 = arith.constant 0 : index
    %c7 = arith.constant 7 : index
    %c0_53 = arith.constant 0 : index
    %c0_54 = arith.constant 0 : index
    %91 = vector.load %arg4[%c0_52, %c7, %c0_53, %c0_54] : memref<1x16x32x16xbf16, #tpu.memory_space<vmem>>, vector<1x1x32x16xbf16>
    %92 = vector.shape_cast %91 : vector<1x1x32x16xbf16> to vector<32x16xbf16>
    %cst_55 = arith.constant dense<0.000000e+00> : vector<8x32xf32>
    %93 = tpu.matmul %90, %92, %cst_55 {dimension_numbers = #tpu.dot_dimension_numbers<[1], [1], [0], [0], [0, 0, 1, 0], [], []>} : vector<8x16xbf16>, vector<32x16xbf16>, vector<8x32xf32> -> vector<8x32xf32>
    %94 = arith.addf %53, %93 : vector<8x32xf32>
    %c0_56 = arith.constant 0 : index
    %c3_57 = arith.constant 3 : index
    %c0_58 = arith.constant 0 : index
    %95 = vector.load %arg8[%c0_56, %c3_57, %c0_58] : memref<1x16x32xf32, #tpu.memory_space<vmem>>, vector<1x1x32xf32>
    %96 = vector.shape_cast %95 : vector<1x1x32xf32> to vector<1x32xf32>
    %97 = vector.broadcast %96 : vector<1x32xf32> to vector<8x32xf32>
    %98 = arith.addf %94, %97 : vector<8x32xf32>
    %99 = arith.addf %3, %98 : vector<8x32xf32>
    %cst_59 = arith.constant dense<0.000000e+00> : vector<8xf32>
    %100 = vector.multi_reduction <add>, %99, %cst_59 [1] : vector<8x32xf32> to vector<8xf32>
    %101 = vector.shape_cast %100 : vector<8xf32> to vector<8x1xf32>
    %cst_60 = arith.constant 3.200000e+01 : f32
    %102 = vector.broadcast %cst_60 : f32 to vector<8x1xf32>
    %103 = arith.divf %101, %102 : vector<8x1xf32>
    %104 = vector.broadcast %103 : vector<8x1xf32> to vector<8x32xf32>
    %105 = arith.subf %99, %104 : vector<8x32xf32>
    %106 = arith.mulf %105, %105 : vector<8x32xf32>
    %cst_61 = arith.constant dense<0.000000e+00> : vector<8xf32>
    %107 = vector.multi_reduction <add>, %106, %cst_61 [1] : vector<8x32xf32> to vector<8xf32>
    %108 = vector.shape_cast %107 : vector<8xf32> to vector<8x1xf32>
    %cst_62 = arith.constant 3.200000e+01 : f32
    %109 = vector.broadcast %cst_62 : f32 to vector<8x1xf32>
    %110 = arith.divf %108, %109 : vector<8x1xf32>
    %111 = vector.broadcast %103 : vector<8x1xf32> to vector<8x32xf32>
    %112 = arith.subf %99, %111 : vector<8x32xf32>
    %cst_63 = arith.constant 9.99999974E-6 : f32
    %113 = vector.broadcast %cst_63 : f32 to vector<8x1xf32>
    %114 = arith.addf %110, %113 : vector<8x1xf32>
    %115 = math.rsqrt %114 : vector<8x1xf32>
    %116 = vector.broadcast %115 : vector<8x1xf32> to vector<8x32xf32>
    %117 = arith.mulf %112, %116 : vector<8x32xf32>
    %c0_64 = arith.constant 0 : index
    %c4_65 = arith.constant 4 : index
    %c0_66 = arith.constant 0 : index
    %118 = vector.load %arg8[%c0_64, %c4_65, %c0_66] : memref<1x16x32xf32, #tpu.memory_space<vmem>>, vector<1x1x32xf32>
    %119 = vector.shape_cast %118 : vector<1x1x32xf32> to vector<1x32xf32>
    %120 = vector.broadcast %119 : vector<1x32xf32> to vector<8x32xf32>
    %121 = arith.mulf %117, %120 : vector<8x32xf32>
    %c0_67 = arith.constant 0 : index
    %c5_68 = arith.constant 5 : index
    %c0_69 = arith.constant 0 : index
    %122 = vector.load %arg8[%c0_67, %c5_68, %c0_69] : memref<1x16x32xf32, #tpu.memory_space<vmem>>, vector<1x1x32xf32>
    %123 = vector.shape_cast %122 : vector<1x1x32xf32> to vector<1x32xf32>
    %124 = vector.broadcast %123 : vector<1x32xf32> to vector<8x32xf32>
    %125 = arith.addf %121, %124 : vector<8x32xf32>
    %126 = arith.truncf %125 : vector<8x32xf32> to vector<8x32xbf16>
    %127 = arith.truncf %5 : vector<8x32xf32> to vector<8x32xbf16>
    %c0_70 = arith.constant 0 : index
    %c6_71 = arith.constant 6 : index
    %c0_72 = arith.constant 0 : index
    %128 = vector.load %arg8[%c0_70, %c6_71, %c0_72] : memref<1x16x32xf32, #tpu.memory_space<vmem>>, vector<1x1x32xf32>
    %129 = vector.shape_cast %128 : vector<1x1x32xf32> to vector<1x32xf32>
    %c0_73 = arith.constant 0 : index
    %c7_74 = arith.constant 7 : index
    %c0_75 = arith.constant 0 : index
    %130 = vector.load %arg8[%c0_73, %c7_74, %c0_75] : memref<1x16x32xf32, #tpu.memory_space<vmem>>, vector<1x1x32xf32>
    %131 = vector.shape_cast %130 : vector<1x1x32xf32> to vector<1x32xf32>
    %c0_76 = arith.constant 0 : index
    %c8 = arith.constant 8 : index
    %c0_77 = arith.constant 0 : index
    %132 = vector.load %arg8[%c0_76, %c8, %c0_77] : memref<1x16x32xf32, #tpu.memory_space<vmem>>, vector<1x1x32xf32>
    %133 = vector.shape_cast %132 : vector<1x1x32xf32> to vector<1x32xf32>
    %c0_78 = arith.constant 0 : index
    %c8_79 = arith.constant 8 : index
    %c0_80 = arith.constant 0 : index
    %c0_81 = arith.constant 0 : index
    %134 = vector.load %arg4[%c0_78, %c8_79, %c0_80, %c0_81] : memref<1x16x32x16xbf16, #tpu.memory_space<vmem>>, vector<1x1x32x16xbf16>
    %135 = vector.shape_cast %134 : vector<1x1x32x16xbf16> to vector<32x16xbf16>
    %cst_82 = arith.constant dense<0.000000e+00> : vector<8x16xf32>
    %136 = tpu.matmul %126, %135, %cst_82 {dimension_numbers = #tpu.dot_dimension_numbers<[1], [0], [0], [1], [0, 0, 1, 1], [], []>} : vector<8x32xbf16>, vector<32x16xbf16>, vector<8x16xf32> -> vector<8x16xf32>
    %137 = vector.extract_strided_slice %129 {offsets = [0, 0], sizes = [1, 16], strides = [1, 1]} : vector<1x32xf32> to vector<1x16xf32>
    %138 = vector.broadcast %137 : vector<1x16xf32> to vector<8x16xf32>
    %139 = arith.addf %136, %138 : vector<8x16xf32>
    %c0_83 = arith.constant 0 : index
    %c10 = arith.constant 10 : index
    %c0_84 = arith.constant 0 : index
    %c0_85 = arith.constant 0 : index
    %140 = vector.load %arg4[%c0_83, %c10, %c0_84, %c0_85] : memref<1x16x32x16xbf16, #tpu.memory_space<vmem>>, vector<1x1x32x16xbf16>
    %141 = vector.shape_cast %140 : vector<1x1x32x16xbf16> to vector<32x16xbf16>
    %cst_86 = arith.constant dense<0.000000e+00> : vector<8x16xf32>
    %142 = tpu.matmul %127, %141, %cst_86 {dimension_numbers = #tpu.dot_dimension_numbers<[1], [0], [0], [1], [0, 0, 1, 1], [], []>} : vector<8x32xbf16>, vector<32x16xbf16>, vector<8x16xf32> -> vector<8x16xf32>
    %143 = vector.extract_strided_slice %131 {offsets = [0, 0], sizes = [1, 16], strides = [1, 1]} : vector<1x32xf32> to vector<1x16xf32>
    %144 = vector.broadcast %143 : vector<1x16xf32> to vector<8x16xf32>
    %145 = arith.addf %142, %144 : vector<8x16xf32>
    %c0_87 = arith.constant 0 : index
    %c12 = arith.constant 12 : index
    %c0_88 = arith.constant 0 : index
    %c0_89 = arith.constant 0 : index
    %146 = vector.load %arg4[%c0_87, %c12, %c0_88, %c0_89] : memref<1x16x32x16xbf16, #tpu.memory_space<vmem>>, vector<1x1x32x16xbf16>
    %147 = vector.shape_cast %146 : vector<1x1x32x16xbf16> to vector<32x16xbf16>
    %cst_90 = arith.constant dense<0.000000e+00> : vector<8x16xf32>
    %148 = tpu.matmul %127, %147, %cst_90 {dimension_numbers = #tpu.dot_dimension_numbers<[1], [0], [0], [1], [0, 0, 1, 1], [], []>} : vector<8x32xbf16>, vector<32x16xbf16>, vector<8x16xf32> -> vector<8x16xf32>
    %149 = vector.extract_strided_slice %133 {offsets = [0, 0], sizes = [1, 16], strides = [1, 1]} : vector<1x32xf32> to vector<1x16xf32>
    %150 = vector.broadcast %149 : vector<1x16xf32> to vector<8x16xf32>
    %151 = arith.addf %148, %150 : vector<8x16xf32>
    %152 = arith.truncf %139 : vector<8x16xf32> to vector<8x16xbf16>
    %153 = arith.truncf %145 : vector<8x16xf32> to vector<8x16xbf16>
    %cst_91 = arith.constant dense<0.000000e+00> : vector<8x8xf32>
    %154 = tpu.matmul %152, %153, %cst_91 {dimension_numbers = #tpu.dot_dimension_numbers<[1], [1], [0], [0], [0, 0, 1, 0], [], []>} : vector<8x16xbf16>, vector<8x16xbf16>, vector<8x8xf32> -> vector<8x8xf32>
    %cst_92 = arith.constant 2.500000e-01 : f32
    %155 = vector.broadcast %cst_92 : f32 to vector<8x8xf32>
    %156 = arith.mulf %154, %155 : vector<8x8xf32>
    %cst_93 = arith.constant dense<0xFF800000> : vector<8xf32>
    %157 = vector.multi_reduction <maximumf>, %156, %cst_93 [1] : vector<8x8xf32> to vector<8xf32>
    %158 = vector.shape_cast %157 : vector<8xf32> to vector<8x1xf32>
    %159 = vector.broadcast %158 : vector<8x1xf32> to vector<8x8xf32>
    %160 = arith.subf %156, %159 : vector<8x8xf32>
    %161 = math.exp %160 : vector<8x8xf32>
    %cst_94 = arith.constant dense<0.000000e+00> : vector<8xf32>
    %162 = vector.multi_reduction <add>, %161, %cst_94 [1] : vector<8x8xf32> to vector<8xf32>
    %163 = vector.shape_cast %162 : vector<8xf32> to vector<8x1xf32>
    %164 = tpu.reciprocal %163 {approx = true} : vector<8x1xf32> -> vector<8x1xf32>
    %165 = vector.broadcast %164 : vector<8x1xf32> to vector<8x8xf32>
    %166 = arith.mulf %161, %165 : vector<8x8xf32>
    %167 = arith.truncf %166 : vector<8x8xf32> to vector<8x8xbf16>
    %168 = arith.truncf %151 : vector<8x16xf32> to vector<8x16xbf16>
    %cst_95 = arith.constant dense<0.000000e+00> : vector<8x16xf32>
    %169 = tpu.matmul %167, %168, %cst_95 {dimension_numbers = #tpu.dot_dimension_numbers<[1], [0], [0], [1], [0, 0, 1, 1], [], []>} : vector<8x8xbf16>, vector<8x16xbf16>, vector<8x16xf32> -> vector<8x16xf32>
    %170 = arith.truncf %169 : vector<8x16xf32> to vector<8x16xbf16>
    %c0_96 = arith.constant 0 : index
    %c14 = arith.constant 14 : index
    %c0_97 = arith.constant 0 : index
    %c0_98 = arith.constant 0 : index
    %171 = vector.load %arg4[%c0_96, %c14, %c0_97, %c0_98] : memref<1x16x32x16xbf16, #tpu.memory_space<vmem>>, vector<1x1x32x16xbf16>
    %172 = vector.shape_cast %171 : vector<1x1x32x16xbf16> to vector<32x16xbf16>
    %cst_99 = arith.constant dense<0.000000e+00> : vector<8x32xf32>
    %173 = tpu.matmul %170, %172, %cst_99 {dimension_numbers = #tpu.dot_dimension_numbers<[1], [1], [0], [0], [0, 0, 1, 0], [], []>} : vector<8x16xbf16>, vector<32x16xbf16>, vector<8x32xf32> -> vector<8x32xf32>
    %c0_100 = arith.constant 0 : index
    %c9 = arith.constant 9 : index
    %c0_101 = arith.constant 0 : index
    %c0_102 = arith.constant 0 : index
    %174 = vector.load %arg4[%c0_100, %c9, %c0_101, %c0_102] : memref<1x16x32x16xbf16, #tpu.memory_space<vmem>>, vector<1x1x32x16xbf16>
    %175 = vector.shape_cast %174 : vector<1x1x32x16xbf16> to vector<32x16xbf16>
    %cst_103 = arith.constant dense<0.000000e+00> : vector<8x16xf32>
    %176 = tpu.matmul %126, %175, %cst_103 {dimension_numbers = #tpu.dot_dimension_numbers<[1], [0], [0], [1], [0, 0, 1, 1], [], []>} : vector<8x32xbf16>, vector<32x16xbf16>, vector<8x16xf32> -> vector<8x16xf32>
    %177 = vector.extract_strided_slice %129 {offsets = [0, 16], sizes = [1, 16], strides = [1, 1]} : vector<1x32xf32> to vector<1x16xf32>
    %178 = vector.broadcast %177 : vector<1x16xf32> to vector<8x16xf32>
    %179 = arith.addf %176, %178 : vector<8x16xf32>
    %c0_104 = arith.constant 0 : index
    %c11 = arith.constant 11 : index
    %c0_105 = arith.constant 0 : index
    %c0_106 = arith.constant 0 : index
    %180 = vector.load %arg4[%c0_104, %c11, %c0_105, %c0_106] : memref<1x16x32x16xbf16, #tpu.memory_space<vmem>>, vector<1x1x32x16xbf16>
    %181 = vector.shape_cast %180 : vector<1x1x32x16xbf16> to vector<32x16xbf16>
    %cst_107 = arith.constant dense<0.000000e+00> : vector<8x16xf32>
    %182 = tpu.matmul %127, %181, %cst_107 {dimension_numbers = #tpu.dot_dimension_numbers<[1], [0], [0], [1], [0, 0, 1, 1], [], []>} : vector<8x32xbf16>, vector<32x16xbf16>, vector<8x16xf32> -> vector<8x16xf32>
    %183 = vector.extract_strided_slice %131 {offsets = [0, 16], sizes = [1, 16], strides = [1, 1]} : vector<1x32xf32> to vector<1x16xf32>
    %184 = vector.broadcast %183 : vector<1x16xf32> to vector<8x16xf32>
    %185 = arith.addf %182, %184 : vector<8x16xf32>
    %c0_108 = arith.constant 0 : index
    %c13 = arith.constant 13 : index
    %c0_109 = arith.constant 0 : index
    %c0_110 = arith.constant 0 : index
    %186 = vector.load %arg4[%c0_108, %c13, %c0_109, %c0_110] : memref<1x16x32x16xbf16, #tpu.memory_space<vmem>>, vector<1x1x32x16xbf16>
    %187 = vector.shape_cast %186 : vector<1x1x32x16xbf16> to vector<32x16xbf16>
    %cst_111 = arith.constant dense<0.000000e+00> : vector<8x16xf32>
    %188 = tpu.matmul %127, %187, %cst_111 {dimension_numbers = #tpu.dot_dimension_numbers<[1], [0], [0], [1], [0, 0, 1, 1], [], []>} : vector<8x32xbf16>, vector<32x16xbf16>, vector<8x16xf32> -> vector<8x16xf32>
    %189 = vector.extract_strided_slice %133 {offsets = [0, 16], sizes = [1, 16], strides = [1, 1]} : vector<1x32xf32> to vector<1x16xf32>
    %190 = vector.broadcast %189 : vector<1x16xf32> to vector<8x16xf32>
    %191 = arith.addf %188, %190 : vector<8x16xf32>
    %192 = arith.truncf %179 : vector<8x16xf32> to vector<8x16xbf16>
    %193 = arith.truncf %185 : vector<8x16xf32> to vector<8x16xbf16>
    %cst_112 = arith.constant dense<0.000000e+00> : vector<8x8xf32>
    %194 = tpu.matmul %192, %193, %cst_112 {dimension_numbers = #tpu.dot_dimension_numbers<[1], [1], [0], [0], [0, 0, 1, 0], [], []>} : vector<8x16xbf16>, vector<8x16xbf16>, vector<8x8xf32> -> vector<8x8xf32>
    %cst_113 = arith.constant 2.500000e-01 : f32
    %195 = vector.broadcast %cst_113 : f32 to vector<8x8xf32>
    %196 = arith.mulf %194, %195 : vector<8x8xf32>
    %cst_114 = arith.constant dense<0xFF800000> : vector<8xf32>
    %197 = vector.multi_reduction <maximumf>, %196, %cst_114 [1] : vector<8x8xf32> to vector<8xf32>
    %198 = vector.shape_cast %197 : vector<8xf32> to vector<8x1xf32>
    %199 = vector.broadcast %198 : vector<8x1xf32> to vector<8x8xf32>
    %200 = arith.subf %196, %199 : vector<8x8xf32>
    %201 = math.exp %200 : vector<8x8xf32>
    %cst_115 = arith.constant dense<0.000000e+00> : vector<8xf32>
    %202 = vector.multi_reduction <add>, %201, %cst_115 [1] : vector<8x8xf32> to vector<8xf32>
    %203 = vector.shape_cast %202 : vector<8xf32> to vector<8x1xf32>
    %204 = tpu.reciprocal %203 {approx = true} : vector<8x1xf32> -> vector<8x1xf32>
    %205 = vector.broadcast %204 : vector<8x1xf32> to vector<8x8xf32>
    %206 = arith.mulf %201, %205 : vector<8x8xf32>
    %207 = arith.truncf %206 : vector<8x8xf32> to vector<8x8xbf16>
    %208 = arith.truncf %191 : vector<8x16xf32> to vector<8x16xbf16>
    %cst_116 = arith.constant dense<0.000000e+00> : vector<8x16xf32>
    %209 = tpu.matmul %207, %208, %cst_116 {dimension_numbers = #tpu.dot_dimension_numbers<[1], [0], [0], [1], [0, 0, 1, 1], [], []>} : vector<8x8xbf16>, vector<8x16xbf16>, vector<8x16xf32> -> vector<8x16xf32>
    %210 = arith.truncf %209 : vector<8x16xf32> to vector<8x16xbf16>
    %c0_117 = arith.constant 0 : index
    %c15 = arith.constant 15 : index
    %c0_118 = arith.constant 0 : index
    %c0_119 = arith.constant 0 : index
    %211 = vector.load %arg4[%c0_117, %c15, %c0_118, %c0_119] : memref<1x16x32x16xbf16, #tpu.memory_space<vmem>>, vector<1x1x32x16xbf16>
    %212 = vector.shape_cast %211 : vector<1x1x32x16xbf16> to vector<32x16xbf16>
    %cst_120 = arith.constant dense<0.000000e+00> : vector<8x32xf32>
    %213 = tpu.matmul %210, %212, %cst_120 {dimension_numbers = #tpu.dot_dimension_numbers<[1], [1], [0], [0], [0, 0, 1, 0], [], []>} : vector<8x16xbf16>, vector<32x16xbf16>, vector<8x32xf32> -> vector<8x32xf32>
    %214 = arith.addf %173, %213 : vector<8x32xf32>
    %c0_121 = arith.constant 0 : index
    %c9_122 = arith.constant 9 : index
    %c0_123 = arith.constant 0 : index
    %215 = vector.load %arg8[%c0_121, %c9_122, %c0_123] : memref<1x16x32xf32, #tpu.memory_space<vmem>>, vector<1x1x32xf32>
    %216 = vector.shape_cast %215 : vector<1x1x32xf32> to vector<1x32xf32>
    %217 = vector.broadcast %216 : vector<1x32xf32> to vector<8x32xf32>
    %218 = arith.addf %214, %217 : vector<8x32xf32>
    %219 = arith.addf %125, %218 : vector<8x32xf32>
    %cst_124 = arith.constant dense<0.000000e+00> : vector<8xf32>
    %220 = vector.multi_reduction <add>, %219, %cst_124 [1] : vector<8x32xf32> to vector<8xf32>
    %221 = vector.shape_cast %220 : vector<8xf32> to vector<8x1xf32>
    %cst_125 = arith.constant 3.200000e+01 : f32
    %222 = vector.broadcast %cst_125 : f32 to vector<8x1xf32>
    %223 = arith.divf %221, %222 : vector<8x1xf32>
    %224 = vector.broadcast %223 : vector<8x1xf32> to vector<8x32xf32>
    %225 = arith.subf %219, %224 : vector<8x32xf32>
    %226 = arith.mulf %225, %225 : vector<8x32xf32>
    %cst_126 = arith.constant dense<0.000000e+00> : vector<8xf32>
    %227 = vector.multi_reduction <add>, %226, %cst_126 [1] : vector<8x32xf32> to vector<8xf32>
    %228 = vector.shape_cast %227 : vector<8xf32> to vector<8x1xf32>
    %cst_127 = arith.constant 3.200000e+01 : f32
    %229 = vector.broadcast %cst_127 : f32 to vector<8x1xf32>
    %230 = arith.divf %228, %229 : vector<8x1xf32>
    %231 = vector.broadcast %223 : vector<8x1xf32> to vector<8x32xf32>
    %232 = arith.subf %219, %231 : vector<8x32xf32>
    %cst_128 = arith.constant 9.99999974E-6 : f32
    %233 = vector.broadcast %cst_128 : f32 to vector<8x1xf32>
    %234 = arith.addf %230, %233 : vector<8x1xf32>
    %235 = math.rsqrt %234 : vector<8x1xf32>
    %236 = vector.broadcast %235 : vector<8x1xf32> to vector<8x32xf32>
    %237 = arith.mulf %232, %236 : vector<8x32xf32>
    %c0_129 = arith.constant 0 : index
    %c10_130 = arith.constant 10 : index
    %c0_131 = arith.constant 0 : index
    %238 = vector.load %arg8[%c0_129, %c10_130, %c0_131] : memref<1x16x32xf32, #tpu.memory_space<vmem>>, vector<1x1x32xf32>
    %239 = vector.shape_cast %238 : vector<1x1x32xf32> to vector<1x32xf32>
    %240 = vector.broadcast %239 : vector<1x32xf32> to vector<8x32xf32>
    %241 = arith.mulf %237, %240 : vector<8x32xf32>
    %c0_132 = arith.constant 0 : index
    %c11_133 = arith.constant 11 : index
    %c0_134 = arith.constant 0 : index
    %242 = vector.load %arg8[%c0_132, %c11_133, %c0_134] : memref<1x16x32xf32, #tpu.memory_space<vmem>>, vector<1x1x32xf32>
    %243 = vector.shape_cast %242 : vector<1x1x32xf32> to vector<1x32xf32>
    %244 = vector.broadcast %243 : vector<1x32xf32> to vector<8x32xf32>
    %245 = arith.addf %241, %244 : vector<8x32xf32>
    %246 = arith.truncf %245 : vector<8x32xf32> to vector<8x32xbf16>
    %c0_135 = arith.constant 0 : index
    %c0_136 = arith.constant 0 : index
    %c0_137 = arith.constant 0 : index
    %247 = vector.load %arg5[%c0_135, %c0_136, %c0_137] : memref<1x32x2048xbf16, #tpu.memory_space<vmem>>, vector<1x32x2048xbf16>
    %248 = vector.shape_cast %247 : vector<1x32x2048xbf16> to vector<32x2048xbf16>
    %cst_138 = arith.constant dense<0.000000e+00> : vector<8x2048xf32>
    %249 = tpu.matmul %246, %248, %cst_138 {dimension_numbers = #tpu.dot_dimension_numbers<[1], [0], [0], [1], [0, 0, 1, 1], [], []>} : vector<8x32xbf16>, vector<32x2048xbf16>, vector<8x2048xf32> -> vector<8x2048xf32>
    %c0_139 = arith.constant 0 : index
    %c0_140 = arith.constant 0 : index
    %c0_141 = arith.constant 0 : index
    %250 = vector.load %arg7[%c0_139, %c0_140, %c0_141] : memref<1x1x2048xf32, #tpu.memory_space<vmem>>, vector<1x1x2048xf32>
    %251 = vector.shape_cast %250 : vector<1x1x2048xf32> to vector<1x2048xf32>
    %252 = vector.broadcast %251 : vector<1x2048xf32> to vector<8x2048xf32>
    %253 = arith.addf %249, %252 : vector<8x2048xf32>
    %cst_142 = arith.constant 0.000000e+00 : f32
    %254 = vector.broadcast %cst_142 : f32 to vector<8x2048xf32>
    %255 = arith.maximumf %253, %254 : vector<8x2048xf32>
    %256 = arith.truncf %255 : vector<8x2048xf32> to vector<8x2048xbf16>
    %c0_143 = arith.constant 0 : index
    %c0_144 = arith.constant 0 : index
    %c0_145 = arith.constant 0 : index
    %257 = vector.load %arg6[%c0_143, %c0_144, %c0_145] : memref<1x2048x32xbf16, #tpu.memory_space<vmem>>, vector<1x2048x32xbf16>
    %258 = vector.shape_cast %257 : vector<1x2048x32xbf16> to vector<2048x32xbf16>
    %cst_146 = arith.constant dense<0.000000e+00> : vector<8x32xf32>
    %259 = tpu.matmul %256, %258, %cst_146 {dimension_numbers = #tpu.dot_dimension_numbers<[1], [0], [0], [1], [0, 0, 1, 1], [], []>} : vector<8x2048xbf16>, vector<2048x32xbf16>, vector<8x32xf32> -> vector<8x32xf32>
    %c0_147 = arith.constant 0 : index
    %c12_148 = arith.constant 12 : index
    %c0_149 = arith.constant 0 : index
    %260 = vector.load %arg8[%c0_147, %c12_148, %c0_149] : memref<1x16x32xf32, #tpu.memory_space<vmem>>, vector<1x1x32xf32>
    %261 = vector.shape_cast %260 : vector<1x1x32xf32> to vector<1x32xf32>
    %262 = vector.broadcast %261 : vector<1x32xf32> to vector<8x32xf32>
    %263 = arith.addf %259, %262 : vector<8x32xf32>
    %264 = arith.addf %245, %263 : vector<8x32xf32>
    %cst_150 = arith.constant dense<0.000000e+00> : vector<8xf32>
    %265 = vector.multi_reduction <add>, %264, %cst_150 [1] : vector<8x32xf32> to vector<8xf32>
    %266 = vector.shape_cast %265 : vector<8xf32> to vector<8x1xf32>
    %cst_151 = arith.constant 3.200000e+01 : f32
    %267 = vector.broadcast %cst_151 : f32 to vector<8x1xf32>
    %268 = arith.divf %266, %267 : vector<8x1xf32>
    %269 = vector.broadcast %268 : vector<8x1xf32> to vector<8x32xf32>
    %270 = arith.subf %264, %269 : vector<8x32xf32>
    %271 = arith.mulf %270, %270 : vector<8x32xf32>
    %cst_152 = arith.constant dense<0.000000e+00> : vector<8xf32>
    %272 = vector.multi_reduction <add>, %271, %cst_152 [1] : vector<8x32xf32> to vector<8xf32>
    %273 = vector.shape_cast %272 : vector<8xf32> to vector<8x1xf32>
    %cst_153 = arith.constant 3.200000e+01 : f32
    %274 = vector.broadcast %cst_153 : f32 to vector<8x1xf32>
    %275 = arith.divf %273, %274 : vector<8x1xf32>
    %276 = vector.broadcast %268 : vector<8x1xf32> to vector<8x32xf32>
    %277 = arith.subf %264, %276 : vector<8x32xf32>
    %cst_154 = arith.constant 9.99999974E-6 : f32
    %278 = vector.broadcast %cst_154 : f32 to vector<8x1xf32>
    %279 = arith.addf %275, %278 : vector<8x1xf32>
    %280 = math.rsqrt %279 : vector<8x1xf32>
    %281 = vector.broadcast %280 : vector<8x1xf32> to vector<8x32xf32>
    %282 = arith.mulf %277, %281 : vector<8x32xf32>
    %c0_155 = arith.constant 0 : index
    %c13_156 = arith.constant 13 : index
    %c0_157 = arith.constant 0 : index
    %283 = vector.load %arg8[%c0_155, %c13_156, %c0_157] : memref<1x16x32xf32, #tpu.memory_space<vmem>>, vector<1x1x32xf32>
    %284 = vector.shape_cast %283 : vector<1x1x32xf32> to vector<1x32xf32>
    %285 = vector.broadcast %284 : vector<1x32xf32> to vector<8x32xf32>
    %286 = arith.mulf %282, %285 : vector<8x32xf32>
    %c0_158 = arith.constant 0 : index
    %c14_159 = arith.constant 14 : index
    %c0_160 = arith.constant 0 : index
    %287 = vector.load %arg8[%c0_158, %c14_159, %c0_160] : memref<1x16x32xf32, #tpu.memory_space<vmem>>, vector<1x1x32xf32>
    %288 = vector.shape_cast %287 : vector<1x1x32xf32> to vector<1x32xf32>
    %289 = vector.broadcast %288 : vector<1x32xf32> to vector<8x32xf32>
    %290 = arith.addf %286, %289 : vector<8x32xf32>
    %c0_161 = arith.constant 0 : index
    %c0_162 = arith.constant 0 : index
    %291 = vector.load %arg10[%c0_161, %c0_162] : memref<8x32xf32, #tpu.memory_space<vmem>>, vector<8x32xf32>
    tpu.vector_store %arg10[%c0_161, %c0_162], %290 {strides = array<i32>} : memref<8x32xf32, #tpu.memory_space<vmem>>, vector<8x32xf32>,
    %c0_163 = arith.constant 0 : index
    %c0_164 = arith.constant 0 : index
    %c0_165 = arith.constant 0 : index
    %292 = vector.load %arg9[%c0_163, %c0_164, %c0_165] : memref<1x8x32xf32, #tpu.memory_space<vmem>>, vector<1x8x32xf32>
    %293 = vector.shape_cast %292 : vector<1x8x32xf32> to vector<8x32xf32>
    %294 = vector.shape_cast %290 : vector<8x32xf32> to vector<1x8x32xf32>
    tpu.vector_store %arg9[%c0_163, %c0_164, %c0_165], %294 {strides = array<i32>} : memref<1x8x32xf32, #tpu.memory_space<vmem>>, vector<1x8x32xf32>,
    return
  }
  func.func @transform_0(%arg0: i32, %arg1: i32) -> (i32, i32, i32) {
    %c0_i32 = arith.constant 0 : i32
    %c0_i32_0 = arith.constant 0 : i32
    %c0_i32_1 = arith.constant 0 : i32
    return %arg0, %c0_i32, %c0_i32_0 : i32, i32, i32
  }
  func.func @transform_1(%arg0: i32, %arg1: i32) -> (i32, i32, i32) {
    %c0_i32 = arith.constant 0 : i32
    %c0_i32_0 = arith.constant 0 : i32
    %c0_i32_1 = arith.constant 0 : i32
    return %arg0, %c0_i32, %c0_i32_0 : i32, i32, i32
  }
  func.func @transform_2(%arg0: i32, %arg1: i32) -> (i32, i32, i32, i32) {
    %c0_i32 = arith.constant 0 : i32
    %c0_i32_0 = arith.constant 0 : i32
    %c0_i32_1 = arith.constant 0 : i32
    %c0_i32_2 = arith.constant 0 : i32
    return %arg1, %c0_i32, %c0_i32_0, %c0_i32_1 : i32, i32, i32, i32
  }
  func.func @transform_3(%arg0: i32, %arg1: i32) -> (i32, i32, i32) {
    %c0_i32 = arith.constant 0 : i32
    %c0_i32_0 = arith.constant 0 : i32
    %c0_i32_1 = arith.constant 0 : i32
    return %arg1, %c0_i32, %c0_i32_0 : i32, i32, i32
  }
  func.func @transform_4(%arg0: i32, %arg1: i32) -> (i32, i32, i32) {
    %c0_i32 = arith.constant 0 : i32
    %c0_i32_0 = arith.constant 0 : i32
    %c0_i32_1 = arith.constant 0 : i32
    return %arg1, %c0_i32, %c0_i32_0 : i32, i32, i32
  }
  func.func @transform_5(%arg0: i32, %arg1: i32) -> (i32, i32, i32) {
    %c0_i32 = arith.constant 0 : i32
    %c0_i32_0 = arith.constant 0 : i32
    %c0_i32_1 = arith.constant 0 : i32
    return %arg1, %c0_i32, %c0_i32_0 : i32, i32, i32
  }
  func.func @transform_6(%arg0: i32, %arg1: i32) -> (i32, i32, i32) {
    %c0_i32 = arith.constant 0 : i32
    %c0_i32_0 = arith.constant 0 : i32
    %c0_i32_1 = arith.constant 0 : i32
    return %arg1, %c0_i32, %c0_i32_0 : i32, i32, i32
  }
  func.func @transform_7(%arg0: i32, %arg1: i32) -> (i32, i32, i32) {
    %c0_i32 = arith.constant 0 : i32
    %c0_i32_0 = arith.constant 0 : i32
    %c0_i32_1 = arith.constant 0 : i32
    return %arg0, %c0_i32, %c0_i32_0 : i32, i32, i32
  }
}

</mosaic_0001>

<llo_original>
// kernel: transformer_attention_forward.1
$region0: #{transformer_attention_forward.1}
  #allocation0 [shape = 'u32[]', space=smem, size = 0x4, offset = 0x4, fixed_abs, tag = 'smem constant byte address 0x4 - core index']
  #allocation1 [shape = 'u32[144,128]{1,0:T(1,128)}', space=vmem, size = 0x12000, scoped, tag = 'internal scratch']
  #allocation2 [shape = 'f32[8,32]{1,0:T(8,128)}', space=vmem, size = 0x1000, scoped, tag = 'scratch operand']
  %s0 = inlined_call_operand.vmem [shape: f32[2,8,32], index: 0, kind: input, shape index: {}]
  %s1 = inlined_call_operand.vmem [shape: f32[2,8,32], index: 1, kind: input, shape index: {}]
  %s2 = inlined_call_operand.vmem [shape: bf16[5,16,32,16], index: 2, kind: input, shape index: {}]
  %s3 = inlined_call_operand.vmem [shape: bf16[5,32,2048], index: 3, kind: input, shape index: {}]
  %s4 = inlined_call_operand.vmem [shape: bf16[5,2048,32], index: 4, kind: input, shape index: {}]
  %s5 = inlined_call_operand.vmem [shape: f32[5,1,2048], index: 5, kind: input, shape index: {}]
  %s6 = inlined_call_operand.vmem [shape: f32[5,16,32], index: 6, kind: input, shape index: {}]
  %s7 = inlined_call_operand.hbm [shape: f32[2,8,32], index: 7, kind: output, shape index: {}]
  %s8 = sld [smem:[#allocation0]]
  $region65: #{transformer_attention_forward.1} parent=0
    _
  %s10 = ssub.s32 1, %s8
  %s11 = scalar_select 0, %s10, %s8
  $region1: #{transformer_attention_forward.1} parent=0
    #allocation3 [shape = 'u8[8192]{0}', space=vmem, size = 0x2000, scoped, tag = 'output window, operand 0']
    #allocation4 [shape = 's32[2]{0}', space=sflag, size = 0x8, scoped, tag = 'scoped memory for transformer_attention_forward.1']
    %12 = vsyncpa [#allocation4], 0
    %s13 = scalar_lea.sflag [#allocation4], 1
    %14 = vsyncpa %s13, 0
    loop: start=0, step=1, limit=12
    $region2: #{transformer_attention_forward.1} parent=1 // loop_pre_header
      _
    $region3: #{transformer_attention_forward.1} parent=1 // loop_header
      %s16 = sphi 0, %s20
      %p17 = scmp.ge.s32.totalorder %s16, 12
      %s23 = sphi 0, %s35
      %s24 = sphi 0, %s31
      %s25 = sphi 0, %s23
      %s26 = sphi 0, %s24
      %s27 = sphi 0, %s25
      %s28 = sphi 0, %s26
      %s38 = sphi 0, %s40
      %s41 = sphi 0, %s38
      %s42 = sphi 0, %s41
      %s58 = sphi 0, %s42
      %s64 = sphi 0, %s66
      %s67 = sphi 0, %s64
      %s68 = sphi 0, %s67
      %s84 = sphi 0, %s68
      %s90 = sphi 0, %s92
      %s93 = sphi 0, %s90
      %s94 = sphi 0, %s93
      %s110 = sphi 0, %s94
      %s116 = sphi 0, %s118
      %s119 = sphi 0, %s116
      %s120 = sphi 0, %s119
      %s136 = sphi 0, %s120
      %s142 = sphi 0, %s144
      %s145 = sphi 0, %s142
      %s146 = sphi 0, %s145
      %s162 = sphi 0, %s146
      %s168 = sphi 0, %s170
      %s171 = sphi 0, %s168
      %s172 = sphi 0, %s171
      %s188 = sphi 0, %s172
      %s194 = sphi 0, %s196
      %s197 = sphi 0, %s194
      %s198 = sphi 0, %s197
      %s214 = sphi 0, %s198
      %s220 = sphi 0, %s222
      %s223 = sphi 0, %s220
      %s224 = sphi 0, %s223
      %s240 = sphi 0, %s224
    $region4: #{transformer_attention_forward.1} parent=1 // loop_header_branch
      %19 = sbr.rel (%p17) target = $region8
    $region5: #{transformer_attention_forward.1} parent=1 // loop_body
      %s21 = ssub.s32 %s16, 1
      %s22 = ssub.s32 %s16, 2
      %s29 = sadd.s32 1, %s24
      %p30 = scmp.ge.s32.totalorder %s29, 5
      %s31 = scalar_select %p30, 0, %s29
      %s32 = sadd.s32 1, %s23
      %s33 = scalar_select %p30, %s32, %s23
      %p34 = scmp.ge.s32.totalorder %s33, 2
      %s35 = scalar_select %p34, 0, %s33
      %s36 = ssub.s32 %s23, %s35
      %p37 = scmp.eq.s32.totalorder %s36, 0
      %s39 = sadd.s32 %s38, 1
      %s40 = scalar_select %p37, %s38, %s39
      %p43 = pneg %p37
      %p44 = scmp.eq.s32.totalorder %s16, 9
      %p45 = por %p43, %p44
      %p46 = scmp.ne.s32.totalorder %s38, %s41
      %p47 = scmp.eq.s32.totalorder %s16, 0
      %p48 = por %p46, %p47
      %p49 = scmp.ne.s32.totalorder %s38, %s41
      %p50 = scmp.eq.s32.totalorder %s21, 9
      %p51 = por %p49, %p50
      %p52 = scmp.ne.s32.totalorder %s41, %s42
      %p53 = scmp.eq.s32.totalorder %s21, 0
      %p54 = por %p52, %p53
      %p55 = scmp.ne.s32.totalorder %s41, %s42
      %p56 = scmp.eq.s32.totalorder %s22, 9
      %p57 = por %p55, %p56
      %p59 = scmp.ne.s32.totalorder %s42, %s58
      %p60 = scmp.eq.s32.totalorder %s22, 0
      %p61 = por %p59, %p60
      %s62 = ssub.s32 %s23, %s35
      %p63 = scmp.eq.s32.totalorder %s62, 0
      %s65 = sadd.s32 %s64, 1
      %s66 = scalar_select %p63, %s64, %s65
      %p69 = pneg %p63
      %p70 = scmp.eq.s32.totalorder %s16, 9
      %p71 = por %p69, %p70
      %p72 = scmp.ne.s32.totalorder %s64, %s67
      %p73 = scmp.eq.s32.totalorder %s16, 0
      %p74 = por %p72, %p73
      %p75 = scmp.ne.s32.totalorder %s64, %s67
      %p76 = scmp.eq.s32.totalorder %s21, 9
      %p77 = por %p75, %p76
      %p78 = scmp.ne.s32.totalorder %s67, %s68
      %p79 = scmp.eq.s32.totalorder %s21, 0
      %p80 = por %p78, %p79
      %p81 = scmp.ne.s32.totalorder %s67, %s68
      %p82 = scmp.eq.s32.totalorder %s22, 9
      %p83 = por %p81, %p82
      %p85 = scmp.ne.s32.totalorder %s68, %s84
      %p86 = scmp.eq.s32.totalorder %s22, 0
      %p87 = por %p85, %p86
      %s88 = ssub.s32 %s24, %s31
      %p89 = scmp.eq.s32.totalorder %s88, 0
      %s91 = sadd.s32 %s90, 1
      %s92 = scalar_select %p89, %s90, %s91
      %p95 = pneg %p89
      %p96 = scmp.eq.s32.totalorder %s16, 9
      %p97 = por %p95, %p96
      %p98 = scmp.ne.s32.totalorder %s90, %s93
      %p99 = scmp.eq.s32.totalorder %s16, 0
      %p100 = por %p98, %p99
      %p101 = scmp.ne.s32.totalorder %s90, %s93
      %p102 = scmp.eq.s32.totalorder %s21, 9
      %p103 = por %p101, %p102
      %p104 = scmp.ne.s32.totalorder %s93, %s94
      %p105 = scmp.eq.s32.totalorder %s21, 0
      %p106 = por %p104, %p105
      %p107 = scmp.ne.s32.totalorder %s93, %s94
      %p108 = scmp.eq.s32.totalorder %s22, 9
      %p109 = por %p107, %p108
      %p111 = scmp.ne.s32.totalorder %s94, %s110
      %p112 = scmp.eq.s32.totalorder %s22, 0
      %p113 = por %p111, %p112
      %s114 = ssub.s32 %s24, %s31
      %p115 = scmp.eq.s32.totalorder %s114, 0
      %s117 = sadd.s32 %s116, 1
      %s118 = scalar_select %p115, %s116, %s117
      %p121 = pneg %p115
      %p122 = scmp.eq.s32.totalorder %s16, 9
      %p123 = por %p121, %p122
      %p124 = scmp.ne.s32.totalorder %s116, %s119
      %p125 = scmp.eq.s32.totalorder %s16, 0
      %p126 = por %p124, %p125
      %p127 = scmp.ne.s32.totalorder %s116, %s119
      %p128 = scmp.eq.s32.totalorder %s21, 9
      %p129 = por %p127, %p128
      %p130 = scmp.ne.s32.totalorder %s119, %s120
      %p131 = scmp.eq.s32.totalorder %s21, 0
      %p132 = por %p130, %p131
      %p133 = scmp.ne.s32.totalorder %s119, %s120
      %p134 = scmp.eq.s32.totalorder %s22, 9
      %p135 = por %p133, %p134
      %p137 = scmp.ne.s32.totalorder %s120, %s136
      %p138 = scmp.eq.s32.totalorder %s22, 0
      %p139 = por %p137, %p138
      %s140 = ssub.s32 %s24, %s31
      %p141 = scmp.eq.s32.totalorder %s140, 0
      %s143 = sadd.s32 %s142, 1
      %s144 = scalar_select %p141, %s142, %s143
      %p147 = pneg %p141
      %p148 = scmp.eq.s32.totalorder %s16, 9
      %p149 = por %p147, %p148
      %p150 = scmp.ne.s32.totalorder %s142, %s145
      %p151 = scmp.eq.s32.totalorder %s16, 0
      %p152 = por %p150, %p151
      %p153 = scmp.ne.s32.totalorder %s142, %s145
      %p154 = scmp.eq.s32.totalorder %s21, 9
      %p155 = por %p153, %p154
      %p156 = scmp.ne.s32.totalorder %s145, %s146
      %p157 = scmp.eq.s32.totalorder %s21, 0
      %p158 = por %p156, %p157
      %p159 = scmp.ne.s32.totalorder %s145, %s146
      %p160 = scmp.eq.s32.totalorder %s22, 9
      %p161 = por %p159, %p160
      %p163 = scmp.ne.s32.totalorder %s146, %s162
      %p164 = scmp.eq.s32.totalorder %s22, 0
      %p165 = por %p163, %p164
      %s166 = ssub.s32 %s24, %s31
      %p167 = scmp.eq.s32.totalorder %s166, 0
      %s169 = sadd.s32 %s168, 1
      %s170 = scalar_select %p167, %s168, %s169
      %p173 = pneg %p167
      %p174 = scmp.eq.s32.totalorder %s16, 9
      %p175 = por %p173, %p174
      %p176 = scmp.ne.s32.totalorder %s168, %s171
      %p177 = scmp.eq.s32.totalorder %s16, 0
      %p178 = por %p176, %p177
      %p179 = scmp.ne.s32.totalorder %s168, %s171
      %p180 = scmp.eq.s32.totalorder %s21, 9
      %p181 = por %p179, %p180
      %p182 = scmp.ne.s32.totalorder %s171, %s172
      %p183 = scmp.eq.s32.totalorder %s21, 0
      %p184 = por %p182, %p183
      %p185 = scmp.ne.s32.totalorder %s171, %s172
      %p186 = scmp.eq.s32.totalorder %s22, 9
      %p187 = por %p185, %p186
      %p189 = scmp.ne.s32.totalorder %s172, %s188
      %p190 = scmp.eq.s32.totalorder %s22, 0
      %p191 = por %p189, %p190
      %s192 = ssub.s32 %s24, %s31
      %p193 = scmp.eq.s32.totalorder %s192, 0
      %s195 = sadd.s32 %s194, 1
      %s196 = scalar_select %p193, %s194, %s195
      %p199 = pneg %p193
      %p200 = scmp.eq.s32.totalorder %s16, 9
      %p201 = por %p199, %p200
      %p202 = scmp.ne.s32.totalorder %s194, %s197
      %p203 = scmp.eq.s32.totalorder %s16, 0
      %p204 = por %p202, %p203
      %p205 = scmp.ne.s32.totalorder %s194, %s197
      %p206 = scmp.eq.s32.totalorder %s21, 9
      %p207 = por %p205, %p206
      %p208 = scmp.ne.s32.totalorder %s197, %s198
      %p209 = scmp.eq.s32.totalorder %s21, 0
      %p210 = por %p208, %p209
      %p211 = scmp.ne.s32.totalorder %s197, %s198
      %p212 = scmp.eq.s32.totalorder %s22, 9
      %p213 = por %p211, %p212
      %p215 = scmp.ne.s32.totalorder %s198, %s214
      %p216 = scmp.eq.s32.totalorder %s22, 0
      %p217 = por %p215, %p216
      %s218 = ssub.s32 %s23, %s35
      %p219 = scmp.eq.s32.totalorder %s218, 0
      %s221 = sadd.s32 %s220, 1
      %s222 = scalar_select %p219, %s220, %s221
      %p225 = pneg %p219
      %p226 = scmp.eq.s32.totalorder %s16, 9
      %p227 = por %p225, %p226
      %p228 = scmp.ne.s32.totalorder %s220, %s223
      %p229 = scmp.eq.s32.totalorder %s16, 0
      %p230 = por %p228, %p229
      %p231 = scmp.ne.s32.totalorder %s220, %s223
      %p232 = scmp.eq.s32.totalorder %s21, 9
      %p233 = por %p231, %p232
      %p234 = scmp.ne.s32.totalorder %s223, %s224
      %p235 = scmp.eq.s32.totalorder %s21, 0
      %p236 = por %p234, %p235
      %p237 = scmp.ne.s32.totalorder %s223, %s224
      %p238 = scmp.eq.s32.totalorder %s22, 9
      %p239 = por %p237, %p238
      %p241 = scmp.ne.s32.totalorder %s224, %s240
      %p242 = scmp.eq.s32.totalorder %s22, 0
      %p243 = por %p241, %p242
      %p244 = scmp.le.s32.totalorder 1, %s16
      %p245 = scmp.lt.s32.totalorder %s16, 11
      %p246 = pnand %p244, %p245
      %p247 = pneg %p246
      // Predicated region
      $region9: #{transformer_attention_forward.1} parent=5 // pred_check
        _
      $region10: #{transformer_attention_forward.1} parent=5 // pred_check_branch
        %249 = sbr.rel (%p246) target = $region12
      $region11: #{transformer_attention_forward.1} parent=5 // pred_region
        %s250 = ssub.s32 %s16, 1
      $region12: #{transformer_attention_forward.1} parent=5 // pred_fallthru
        _
      %p251 = scmp.lt.s32.totalorder %s16, 10
      // Predicated region
      $region13: #{transformer_attention_forward.1} parent=5 // pred_check
        %p252 = pneg %p251
      $region14: #{transformer_attention_forward.1} parent=5 // pred_check_branch
        %254 = sbr.rel (%p252) target = $region16
      $region15: #{transformer_attention_forward.1} parent=5 // pred_region
        // Predicated region
        $region17: #{transformer_attention_forward.1} parent=15 // pred_check
          %p255 = pneg %p48
        $region18: #{transformer_attention_forward.1} parent=15 // pred_check_branch
          %257 = sbr.rel (%p255) target = $region20
        $region19: #{transformer_attention_forward.1} parent=15 // pred_region
          %p258 = scmp.lt.s32.totalorder %s23, 1
          %s259 = scalar_select %p258, %s23, 1
          %s260 = smul.addr %s259, 8
          %s261 = scalar_lea.vmem %s0, %s260
        $region20: #{transformer_attention_forward.1} parent=15 // pred_fallthru
          _
        // Predicated region
        $region21: #{transformer_attention_forward.1} parent=15 // pred_check
          %p262 = pneg %p74
        $region22: #{transformer_attention_forward.1} parent=15 // pred_check_branch
          %264 = sbr.rel (%p262) target = $region24
        $region23: #{transformer_attention_forward.1} parent=15 // pred_region
          %p265 = scmp.lt.s32.totalorder %s23, 1
          %s266 = scalar_select %p265, %s23, 1
          %s267 = smul.addr %s266, 8
          %s268 = scalar_lea.vmem %s1, %s267
        $region24: #{transformer_attention_forward.1} parent=15 // pred_fallthru
          _
        // Predicated region
        $region25: #{transformer_attention_forward.1} parent=15 // pred_check
          %p269 = pneg %p100
        $region26: #{transformer_attention_forward.1} parent=15 // pred_check_branch
          %271 = sbr.rel (%p269) target = $region28
        $region27: #{transformer_attention_forward.1} parent=15 // pred_region
          %p272 = scmp.lt.s32.totalorder %s24, 4
          %s273 = scalar_select %p272, %s24, 4
          %s274 = smul.addr %s273, 64
          %s275 = smul.addr %s274, 4
          %s276 = scalar_lea.vmem %s2, %s275
        $region28: #{transformer_attention_forward.1} parent=15 // pred_fallthru
          _
        // Predicated region
        $region29: #{transformer_attention_forward.1} parent=15 // pred_check
          %p277 = pneg %p126
        $region30: #{transformer_attention_forward.1} parent=15 // pred_check_branch
          %279 = sbr.rel (%p277) target = $region32
        $region31: #{transformer_attention_forward.1} parent=15 // pred_region
          %p280 = scmp.lt.s32.totalorder %s24, 4
          %s281 = scalar_select %p280, %s24, 4
          %s282 = smul.addr %s281, 64
          %s283 = smul.addr %s282, 4
          %s284 = scalar_lea.vmem %s3, %s283
        $region32: #{transformer_attention_forward.1} parent=15 // pred_fallthru
          _
        // Predicated region
        $region33: #{transformer_attention_forward.1} parent=15 // pred_check
          %p285 = pneg %p152
        $region34: #{transformer_attention_forward.1} parent=15 // pred_check_branch
          %287 = sbr.rel (%p285) target = $region36
        $region35: #{transformer_attention_forward.1} parent=15 // pred_region
          %p288 = scmp.lt.s32.totalorder %s24, 4
          %s289 = scalar_select %p288, %s24, 4
          %s290 = smul.addr %s289, 256
          %s291 = smul.addr %s290, 4
          %s292 = scalar_lea.vmem %s4, %s291
        $region36: #{transformer_attention_forward.1} parent=15 // pred_fallthru
          _
        // Predicated region
        $region37: #{transformer_attention_forward.1} parent=15 // pred_check
          %p293 = pneg %p178
        $region38: #{transformer_attention_forward.1} parent=15 // pred_check_branch
          %295 = sbr.rel (%p293) target = $region40
        $region39: #{transformer_attention_forward.1} parent=15 // pred_region
          %p296 = scmp.lt.s32.totalorder %s24, 4
          %s297 = scalar_select %p296, %s24, 4
          %s298 = smul.addr %s297, 16
          %s299 = scalar_lea.vmem %s5, %s298
        $region40: #{transformer_attention_forward.1} parent=15 // pred_fallthru
          _
        // Predicated region
        $region41: #{transformer_attention_forward.1} parent=15 // pred_check
          %p300 = pneg %p204
        $region42: #{transformer_attention_forward.1} parent=15 // pred_check_branch
          %302 = sbr.rel (%p300) target = $region44
        $region43: #{transformer_attention_forward.1} parent=15 // pred_region
          %p303 = scmp.lt.s32.totalorder %s24, 4
          %s304 = scalar_select %p303, %s24, 4
          %s305 = smul.addr %s304, 2
          %s306 = smul.addr %s305, 8
          %s307 = scalar_lea.vmem %s6, %s306
        $region44: #{transformer_attention_forward.1} parent=15 // pred_fallthru
          _
      $region16: #{transformer_attention_forward.1} parent=5 // pred_fallthru
        _
      %p308 = scmp.le.s32.totalorder 1, %s16
      %p309 = scmp.lt.s32.totalorder %s16, 11
      %p310 = pnand %p308, %p309
      %p311 = pneg %p310
      // Predicated region
      $region45: #{transformer_attention_forward.1} parent=5 // pred_check
        _
      $region46: #{transformer_attention_forward.1} parent=5 // pred_check_branch
        %313 = sbr.rel (%p310) target = $region48
      $region47: #{transformer_attention_forward.1} parent=5 // pred_region
        %s314 = ssub.s32 %s16, 1
        %p315 = scmp.lt.s32.totalorder %s25, 1
        %s316 = scalar_select %p315, %s25, 1
        %s317 = smul.addr %s316, 8
        %s318 = scalar_lea.vmem %s0, %s317
        %p319 = pneg %p54
        %p320 = pneg %p51
        %p321 = scmp.lt.s32.totalorder %s25, 1
        %s322 = scalar_select %p321, %s25, 1
        %s323 = smul.addr %s322, 8
        %s324 = scalar_lea.vmem %s1, %s323
        %p325 = pneg %p80
        %p326 = pneg %p77
        %p327 = scmp.lt.s32.totalorder %s26, 4
        %s328 = scalar_select %p327, %s26, 4
        %s329 = smul.addr %s328, 64
        %s330 = smul.addr %s329, 4
        %s331 = scalar_lea.vmem %s2, %s330
        %p332 = pneg %p106
        %p333 = pneg %p103
        %p334 = scmp.lt.s32.totalorder %s26, 4
        %s335 = scalar_select %p334, %s26, 4
        %s336 = smul.addr %s335, 64
        %s337 = smul.addr %s336, 4
        %s338 = scalar_lea.vmem %s3, %s337
        %p339 = pneg %p132
        %p340 = pneg %p129
        %p341 = scmp.lt.s32.totalorder %s26, 4
        %s342 = scalar_select %p341, %s26, 4
        %s343 = smul.addr %s342, 256
        %s344 = smul.addr %s343, 4
        %s345 = scalar_lea.vmem %s4, %s344
        %p346 = pneg %p158
        %p347 = pneg %p155
        %p348 = scmp.lt.s32.totalorder %s26, 4
        %s349 = scalar_select %p348, %s26, 4
        %s350 = smul.addr %s349, 16
        %s351 = scalar_lea.vmem %s5, %s350
        %p352 = pneg %p184
        %p353 = pneg %p181
        %p354 = scmp.lt.s32.totalorder %s26, 4
        %s355 = scalar_select %p354, %s26, 4
        %s356 = smul.addr %s355, 2
        %s357 = smul.addr %s356, 8
        %s358 = scalar_lea.vmem %s6, %s357
        %p359 = pneg %p210
        %p360 = pneg %p207
        %p361 = pneg %p236
        %p362 = pneg %p233
        %s363 = sand.u32 %s223, 1
        %s364 = scalar_lea.sflag [#allocation4], %s363
        %s365 = sand.u32 %s223, 1
        %s366 = smul.addr %s365, 8
        %s367 = scalar_lea.vmem [#allocation3], %s366
        %p368 = scmp.lt.s32.totalorder %s25, 1
        %s369 = scalar_select %p368, %s25, 1
        %s370 = smul.addr %s369, 8
        %s371 = scalar_lea.vmem %s0, %s370
        %p372 = scmp.lt.s32.totalorder %s25, 1
        %s373 = scalar_select %p372, %s25, 1
        %s374 = smul.addr %s373, 8
        %s375 = scalar_lea.vmem %s1, %s374
        %p376 = scmp.lt.s32.totalorder %s26, 4
        %s377 = scalar_select %p376, %s26, 4
        %s378 = smul.addr %s377, 64
        %s379 = smul.addr %s378, 4
        %s380 = scalar_lea.vmem %s2, %s379
        %p381 = scmp.lt.s32.totalorder %s26, 4
        %s382 = scalar_select %p381, %s26, 4
        %s383 = smul.addr %s382, 64
        %s384 = smul.addr %s383, 4
        %s385 = scalar_lea.vmem %s3, %s384
        %p386 = scmp.lt.s32.totalorder %s26, 4
        %s387 = scalar_select %p386, %s26, 4
        %s388 = smul.addr %s387, 256
        %s389 = smul.addr %s388, 4
        %s390 = scalar_lea.vmem %s4, %s389
        %p391 = scmp.lt.s32.totalorder %s26, 4
        %s392 = scalar_select %p391, %s26, 4
        %s393 = smul.addr %s392, 16
        %s394 = scalar_lea.vmem %s5, %s393
        %p395 = scmp.lt.s32.totalorder %s26, 4
        %s396 = scalar_select %p395, %s26, 4
        %s397 = smul.addr %s396, 2
        %s398 = smul.addr %s397, 8
        %s399 = scalar_lea.vmem %s6, %s398
        %p401 = scmp.eq.s32.totalorder %s26, 0
        // Predicated region
        $region49: #{transformer_attention_forward.1} parent=47 // pred_check
          %p402 = pneg %p401
        $region50: #{transformer_attention_forward.1} parent=47 // pred_check_branch
          %404 = sbr.rel (%p402) target = $region52
        $region51: #{transformer_attention_forward.1} parent=47 // pred_region
          %v405 = vld [vmem:[%s371] sm:$0xff]
          %vm406 = vcmask 261120
          %407 = vst.msk [vmem:[#allocation2] sm:$0xff] %vm406, %v405
        $region52: #{transformer_attention_forward.1} parent=47 // pred_fallthru
          _
        %v408 = vld [vmem:[#allocation2] sm:$0xff]
        %v409 = vld [vmem:[%s375] sm:$0xff]
        %v410 = vpack.c.bf16 %v408, %v408
        %v411 = vld [vmem:[%s399] sm:$0x1]
        %v412 = vld [vmem:[%s399 + $0x1] sm:$0x1]
        %v413 = vld [vmem:[%s399 + $0x2] sm:$0x1]
        %v414 = vld [vmem:[%s380] sm:$0xf]
        %v415 = vld [vmem:[%s380 + $0x4] sm:$0xf]
        %v416 = vld [vmem:[%s380 + $0x8] sm:$0xf]
        %v417 = vld [vmem:[%s380 + $0xc] sm:$0xf]
        %v418 = vlaneseq
        %v419 = vshrl.u32 %v418, 7
        %v420 = vsub.s32 0, %v419
        %v421 = vrot.slane %v411, %v420
        %v426 = vunpack.c.l.b16 %v414
        %v427 = vunpack.c.l.b16 %v415
        %v428 = vunpack.c.l.b16 %v416
        %v429 = vunpack.c.l.b16 %v417
        %v430 = vpack.c.b16 %v427, %v426
        %v431 = vpack.c.b16 %v429, %v428
        %vm434 = vcmask 261120
        %v436 = vsel %vm434, %v410, 0
        %438 = vmatprep.subr.bf16.mxu0 0
        %439 = vmatpush1.bf16.msra.mxu0 0
        %440 = vmatprep.subr.bf16.mxu0 0
        %441 = vmatpush1.bf16.msra.mxu0 0
        %442 = vmatprep.subr.bf16.mxu0 0
        %443 = vmatpush1.bf16.msra.mxu0 0
        %444 = vmatprep.subr.bf16.mxu0 0
        %445 = vmatpush1.bf16.msra.mxu0 0
        %446 = vmatprep.subr.bf16.mxu0 0
        %447 = vmatpush1.bf16.msra.mxu0 0
        %448 = vmatprep.subr.bf16.mxu0 0
        %449 = vmatpush1.bf16.msra.mxu0 0
        %450 = vmatprep.subr.bf16.mxu0 0
        %451 = vmatpush1.bf16.msra.mxu0 %v431
        %452 = vmatprep.subr.bf16.mxu0 0
        %453 = vmatpush1.bf16.msra.mxu0 %v430
        %454 = vmatprep.subr.bf16.mxu0 0
        %455 = vmatpush2.bf16.msra.mxu0 0
        %456 = vmatprep.subr.bf16.mxu0 0
        %457 = vmatpush2.bf16.msra.mxu0 0
        %458 = vmatprep.subr.bf16.mxu0 0
        %459 = vmatpush2.bf16.msra.mxu0 0
        %460 = vmatprep.subr.bf16.mxu0 0
        %461 = vmatpush2.bf16.msra.mxu0 0
        %462 = vmatprep.subr.bf16.mxu0 0
        %463 = vmatpush2.bf16.msra.mxu0 0
        %464 = vmatprep.subr.bf16.mxu0 0
        %465 = vmatpush2.bf16.msra.mxu0 0
        %466 = vmatprep.subr.bf16.mxu0 0
        %467 = vmatpush2.bf16.msra.mxu0 0
        %468 = vmatprep.subr.bf16.mxu0 0
        %469 = vmatpush2.bf16.msra.mxu0 0
        %470 = vmatprep.mubr.bf16.mxu0 0
        %471 = vmatmul.mubr.bf16.gmra.mxu0 %v436
        %v472 = vpop.f32.mrf.mxu0
        %v473 = vadd.f32 %v421, %v472
        %v474 = vpop.f32.mrf.mxu0
        %v475 = vpop.f32.mrf.mxu0
        %v476 = vpop.f32.mrf.mxu0
        %477 = vdwg.mxu0
        %s478 = scalar_lea.vmem %s380, 32
        %v479 = vld [vmem:[%s478] sm:$0xf]
        %v480 = vld [vmem:[%s478 + $0x4] sm:$0xf]
        %v481 = vld [vmem:[%s478 + $0x8] sm:$0xf]
        %v482 = vld [vmem:[%s478 + $0xc] sm:$0xf]
        %v483 = vlaneseq
        %v484 = vshrl.u32 %v483, 7
        %v485 = vsub.s32 0, %v484
        %v486 = vrot.slane %v412, %v485
        %v491 = vunpack.c.l.b16 %v479
        %v492 = vunpack.c.l.b16 %v480
        %v493 = vunpack.c.l.b16 %v481
        %v494 = vunpack.c.l.b16 %v482
        %v495 = vpack.c.b16 %v492, %v491
        %v496 = vpack.c.b16 %v494, %v493
        %499 = vmatprep.subr.bf16.mxu0 0
        %500 = vmatpush1.bf16.msra.mxu0 0
        %501 = vmatprep.subr.bf16.mxu0 0
        %502 = vmatpush1.bf16.msra.mxu0 0
        %503 = vmatprep.subr.bf16.mxu0 0
        %504 = vmatpush1.bf16.msra.mxu0 0
        %505 = vmatprep.subr.bf16.mxu0 0
        %506 = vmatpush1.bf16.msra.mxu0 0
        %507 = vmatprep.subr.bf16.mxu0 0
        %508 = vmatpush1.bf16.msra.mxu0 0
        %509 = vmatprep.subr.bf16.mxu0 0
        %510 = vmatpush1.bf16.msra.mxu0 0
        %511 = vmatprep.subr.bf16.mxu0 0
        %512 = vmatpush1.bf16.msra.mxu0 %v496
        %513 = vmatprep.subr.bf16.mxu0 0
        %514 = vmatpush1.bf16.msra.mxu0 %v495
        %515 = vmatprep.subr.bf16.mxu0 0
        %516 = vmatpush2.bf16.msra.mxu0 0
        %517 = vmatprep.subr.bf16.mxu0 0
        %518 = vmatpush2.bf16.msra.mxu0 0
        %519 = vmatprep.subr.bf16.mxu0 0
        %520 = vmatpush2.bf16.msra.mxu0 0
        %521 = vmatprep.subr.bf16.mxu0 0
        %522 = vmatpush2.bf16.msra.mxu0 0
        %523 = vmatprep.subr.bf16.mxu0 0
        %524 = vmatpush2.bf16.msra.mxu0 0
        %525 = vmatprep.subr.bf16.mxu0 0
        %526 = vmatpush2.bf16.msra.mxu0 0
        %527 = vmatprep.subr.bf16.mxu0 0
        %528 = vmatpush2.bf16.msra.mxu0 0
        %529 = vmatprep.subr.bf16.mxu0 0
        %530 = vmatpush2.bf16.msra.mxu0 0
        %531 = vmatprep.mubr.bf16.mxu0 0
        %532 = vmatmul.mubr.bf16.gmra.mxu0 %v436
        %v533 = vpop.f32.mrf.mxu0
        %v534 = vadd.f32 %v486, %v533
        %v535 = vpop.f32.mrf.mxu0
        %v536 = vpop.f32.mrf.mxu0
        %v537 = vpop.f32.mrf.mxu0
        %538 = vdwg.mxu0
        %s539 = scalar_lea.vmem %s380, 64
        %v540 = vld [vmem:[%s539] sm:$0xf]
        %v541 = vld [vmem:[%s539 + $0x4] sm:$0xf]
        %v542 = vld [vmem:[%s539 + $0x8] sm:$0xf]
        %v543 = vld [vmem:[%s539 + $0xc] sm:$0xf]
        %v544 = vlaneseq
        %v545 = vshrl.u32 %v544, 7
        %v546 = vsub.s32 0, %v545
        %v547 = vrot.slane %v413, %v546
        %v552 = vunpack.c.l.b16 %v540
        %v553 = vunpack.c.l.b16 %v541
        %v554 = vunpack.c.l.b16 %v542
        %v555 = vunpack.c.l.b16 %v543
        %v556 = vpack.c.b16 %v553, %v552
        %v557 = vpack.c.b16 %v555, %v554
        %560 = vmatprep.subr.bf16.mxu0 0
        %561 = vmatpush1.bf16.msra.mxu0 0
        %562 = vmatprep.subr.bf16.mxu0 0
        %563 = vmatpush1.bf16.msra.mxu0 0
        %564 = vmatprep.subr.bf16.mxu0 0
        %565 = vmatpush1.bf16.msra.mxu0 0
        %566 = vmatprep.subr.bf16.mxu0 0
        %567 = vmatpush1.bf16.msra.mxu0 0
        %568 = vmatprep.subr.bf16.mxu0 0
        %569 = vmatpush1.bf16.msra.mxu0 0
        %570 = vmatprep.subr.bf16.mxu0 0
        %571 = vmatpush1.bf16.msra.mxu0 0
        %572 = vmatprep.subr.bf16.mxu0 0
        %573 = vmatpush1.bf16.msra.mxu0 %v557
        %574 = vmatprep.subr.bf16.mxu0 0
        %575 = vmatpush1.bf16.msra.mxu0 %v556
        %576 = vmatprep.subr.bf16.mxu0 0
        %577 = vmatpush2.bf16.msra.mxu0 0
        %578 = vmatprep.subr.bf16.mxu0 0
        %579 = vmatpush2.bf16.msra.mxu0 0
        %580 = vmatprep.subr.bf16.mxu0 0
        %581 = vmatpush2.bf16.msra.mxu0 0
        %582 = vmatprep.subr.bf16.mxu0 0
        %583 = vmatpush2.bf16.msra.mxu0 0
        %584 = vmatprep.subr.bf16.mxu0 0
        %585 = vmatpush2.bf16.msra.mxu0 0
        %586 = vmatprep.subr.bf16.mxu0 0
        %587 = vmatpush2.bf16.msra.mxu0 0
        %588 = vmatprep.subr.bf16.mxu0 0
        %589 = vmatpush2.bf16.msra.mxu0 0
        %590 = vmatprep.subr.bf16.mxu0 0
        %591 = vmatpush2.bf16.msra.mxu0 0
        %592 = vmatprep.mubr.bf16.mxu0 0
        %593 = vmatmul.mubr.bf16.gmra.mxu0 %v436
        %v594 = vpop.f32.mrf.mxu0
        %v595 = vadd.f32 %v547, %v594
        %v596 = vpop.f32.mrf.mxu0
        %v597 = vpop.f32.mrf.mxu0
        %v598 = vpop.f32.mrf.mxu0
        %599 = vdwg.mxu0
        %v600 = vpack.c.bf16 %v473, %v473
        %v601 = vpack.c.bf16 %v534, %v534
        %vm602 = vcmask 130048
        %v604 = vsel %vm602, %v600, 0
        %v607 = vsel %vm602, %v601, 0
        %609 = vmatprep.subr.bf16.mxu0 0
        %610 = vmatpush1.bf16.xpose.msra.mxu0 0
        %611 = vmatprep.subr.bf16.mxu0 0
        %612 = vmatpush1.bf16.xpose.msra.mxu0 0
        %613 = vmatprep.subr.bf16.mxu0 0
        %614 = vmatpush1.bf16.xpose.msra.mxu0 0
        %615 = vmatprep.subr.bf16.mxu0 0
        %616 = vmatpush1.bf16.xpose.msra.mxu0 0
        %617 = vmatprep.subr.bf16.mxu0 0
        %618 = vmatpush1.bf16.xpose.msra.mxu0 0
        %619 = vmatprep.subr.bf16.mxu0 0
        %620 = vmatpush1.bf16.xpose.msra.mxu0 0
        %621 = vmatprep.subr.bf16.mxu0 0
        %622 = vmatpush1.bf16.xpose.msra.mxu0 0
        %623 = vmatprep.subr.bf16.mxu0 0
        %624 = vmatpush1.bf16.xpose.msra.mxu0 %v607
        %625 = vmatprep.subr.bf16.mxu0 0
        %626 = vmatpush2.bf16.xpose.msra.mxu0 0
        %627 = vmatprep.subr.bf16.mxu0 0
        %628 = vmatpush2.bf16.xpose.msra.mxu0 0
        %629 = vmatprep.subr.bf16.mxu0 0
        %630 = vmatpush2.bf16.xpose.msra.mxu0 0
        %631 = vmatprep.subr.bf16.mxu0 0
        %632 = vmatpush2.bf16.xpose.msra.mxu0 0
        %633 = vmatprep.subr.bf16.mxu0 0
        %634 = vmatpush2.bf16.xpose.msra.mxu0 0
        %635 = vmatprep.subr.bf16.mxu0 0
        %636 = vmatpush2.bf16.xpose.msra.mxu0 0
        %637 = vmatprep.subr.bf16.mxu0 0
        %638 = vmatpush2.bf16.xpose.msra.mxu0 0
        %639 = vmatprep.subr.bf16.mxu0 0
        %640 = vmatpush2.bf16.xpose.msra.mxu0 0
        %641 = vmatprep.mubr.bf16.mxu0 0
        %642 = vmatmul.mubr.bf16.gmra.mxu0 %v604
        %v643 = vpop.f32.mrf.mxu0
        %v644 = vadd.f32 0.0, %v643
        %v645 = vpop.f32.mrf.mxu0
        %v646 = vpop.f32.mrf.mxu0
        %v647 = vpop.f32.mrf.mxu0
        %648 = vdwg.mxu0
        %v649 = vmul.f32 %v644, 0.25
        %vm650 = vcmask 64512
        %v651 = vsel %vm650, %v649, -inf
        %652 = vmax.xlane.f32.xlu0 %v651
        %v653 = vpop.xlane.xlu0 %652
        %v654 = vsub.f32 %v649, %v653
        %v655 = vmul.f32 %v654, 1.442695
        %v656 = vpow.pop %v655
        %v657 = vsel %vm650, %v656, 0.0
        %658 = vadd.xlane.f32.xlu0 %v657
        %v659 = vpop.xlane.xlu0 %658
        %v660 = vrcp.pop %v659
        %v661 = vmul.f32 %v656, %v660
        %v662 = vpack.c.bf16 %v661, %v661
        %v663 = vpack.c.bf16 %v595, %v595
        %v665 = vsel %vm650, %v662, 0
        %vm667 = vcmask 1043456
        %v669 = vsel %vm667, %v663, 0
        %671 = vmatprep.subr.bf16.mxu0 0
        %672 = vmatpush1.bf16.msra.mxu0 0
        %673 = vmatprep.subr.bf16.mxu0 0
        %674 = vmatpush1.bf16.msra.mxu0 0
        %675 = vmatprep.subr.bf16.mxu0 0
        %676 = vmatpush1.bf16.msra.mxu0 0
        %677 = vmatprep.subr.bf16.mxu0 0
        %678 = vmatpush1.bf16.msra.mxu0 0
        %679 = vmatprep.subr.bf16.mxu0 0
        %680 = vmatpush1.bf16.msra.mxu0 0
        %681 = vmatprep.subr.bf16.mxu0 0
        %682 = vmatpush1.bf16.msra.mxu0 0
        %683 = vmatprep.subr.bf16.mxu0 0
        %684 = vmatpush1.bf16.msra.mxu0 0
        %685 = vmatprep.subr.bf16.mxu0 0
        %686 = vmatpush1.bf16.msra.mxu0 %v669
        %687 = vmatprep.subr.bf16.mxu0 0
        %688 = vmatpush2.bf16.msra.mxu0 0
        %689 = vmatprep.subr.bf16.mxu0 0
        %690 = vmatpush2.bf16.msra.mxu0 0
        %691 = vmatprep.subr.bf16.mxu0 0
        %692 = vmatpush2.bf16.msra.mxu0 0
        %693 = vmatprep.subr.bf16.mxu0 0
        %694 = vmatpush2.bf16.msra.mxu0 0
        %695 = vmatprep.subr.bf16.mxu0 0
        %696 = vmatpush2.bf16.msra.mxu0 0
        %697 = vmatprep.subr.bf16.mxu0 0
        %698 = vmatpush2.bf16.msra.mxu0 0
        %699 = vmatprep.subr.bf16.mxu0 0
        %700 = vmatpush2.bf16.msra.mxu0 0
        %701 = vmatprep.subr.bf16.mxu0 0
        %702 = vmatpush2.bf16.msra.mxu0 0
        %703 = vmatprep.mubr.bf16.mxu0 0
        %704 = vmatmul.mubr.bf16.gmra.mxu0 %v665
        %v705 = vpop.f32.mrf.mxu0
        %v706 = vadd.f32 0.0, %v705
        %v707 = vpop.f32.mrf.mxu0
        %v708 = vpop.f32.mrf.mxu0
        %v709 = vpop.f32.mrf.mxu0
        %710 = vdwg.mxu0
        %v711 = vpack.c.bf16 %v706, %v706
        %s712 = scalar_lea.vmem %s380, 96
        %v713 = vld [vmem:[%s712] sm:$0xf]
        %v714 = vld [vmem:[%s712 + $0x4] sm:$0xf]
        %v715 = vld [vmem:[%s712 + $0x8] sm:$0xf]
        %v716 = vld [vmem:[%s712 + $0xc] sm:$0xf]
        %s717 = scalar_lea.vmem %s380, 16
        %v718 = vld [vmem:[%s717] sm:$0xf]
        %v719 = vld [vmem:[%s717 + $0x4] sm:$0xf]
        %v720 = vld [vmem:[%s717 + $0x8] sm:$0xf]
        %v721 = vld [vmem:[%s717 + $0xc] sm:$0xf]
        %v726 = vunpack.c.l.b16 %v718
        %v727 = vunpack.c.l.b16 %v719
        %v728 = vunpack.c.l.b16 %v720
        %v729 = vunpack.c.l.b16 %v721
        %v730 = vpack.c.b16 %v727, %v726
        %v731 = vpack.c.b16 %v729, %v728
        %735 = vrot.lane.b32.xlu0 %v421, 112
        %v736 = vpop.permute.xlu0 %735
        %738 = vmatprep.subr.bf16.mxu0 0
        %739 = vmatpush1.bf16.msra.mxu0 0
        %740 = vmatprep.subr.bf16.mxu0 0
        %741 = vmatpush1.bf16.msra.mxu0 0
        %742 = vmatprep.subr.bf16.mxu0 0
        %743 = vmatpush1.bf16.msra.mxu0 0
        %744 = vmatprep.subr.bf16.mxu0 0
        %745 = vmatpush1.bf16.msra.mxu0 0
        %746 = vmatprep.subr.bf16.mxu0 0
        %747 = vmatpush1.bf16.msra.mxu0 0
        %748 = vmatprep.subr.bf16.mxu0 0
        %749 = vmatpush1.bf16.msra.mxu0 0
        %750 = vmatprep.subr.bf16.mxu0 0
        %751 = vmatpush1.bf16.msra.mxu0 %v731
        %752 = vmatprep.subr.bf16.mxu0 0
        %753 = vmatpush1.bf16.msra.mxu0 %v730
        %754 = vmatprep.subr.bf16.mxu0 0
        %755 = vmatpush2.bf16.msra.mxu0 0
        %756 = vmatprep.subr.bf16.mxu0 0
        %757 = vmatpush2.bf16.msra.mxu0 0
        %758 = vmatprep.subr.bf16.mxu0 0
        %759 = vmatpush2.bf16.msra.mxu0 0
        %760 = vmatprep.subr.bf16.mxu0 0
        %761 = vmatpush2.bf16.msra.mxu0 0
        %762 = vmatprep.subr.bf16.mxu0 0
        %763 = vmatpush2.bf16.msra.mxu0 0
        %764 = vmatprep.subr.bf16.mxu0 0
        %765 = vmatpush2.bf16.msra.mxu0 0
        %766 = vmatprep.subr.bf16.mxu0 0
        %767 = vmatpush2.bf16.msra.mxu0 0
        %768 = vmatprep.subr.bf16.mxu0 0
        %769 = vmatpush2.bf16.msra.mxu0 0
        %770 = vmatprep.mubr.bf16.mxu0 0
        %771 = vmatmul.mubr.bf16.gmra.mxu0 %v436
        %v772 = vpop.f32.mrf.mxu0
        %v773 = vadd.f32 %v736, %v772
        %v774 = vpop.f32.mrf.mxu0
        %v775 = vpop.f32.mrf.mxu0
        %v776 = vpop.f32.mrf.mxu0
        %777 = vdwg.mxu0
        %s778 = scalar_lea.vmem %s380, 48
        %v779 = vld [vmem:[%s778] sm:$0xf]
        %v780 = vld [vmem:[%s778 + $0x4] sm:$0xf]
        %v781 = vld [vmem:[%s778 + $0x8] sm:$0xf]
        %v782 = vld [vmem:[%s778 + $0xc] sm:$0xf]
        %v787 = vunpack.c.l.b16 %v779
        %v788 = vunpack.c.l.b16 %v780
        %v789 = vunpack.c.l.b16 %v781
        %v790 = vunpack.c.l.b16 %v782
        %v791 = vpack.c.b16 %v788, %v787
        %v792 = vpack.c.b16 %v790, %v789
        %796 = vrot.lane.b32.xlu0 %v486, 112
        %v797 = vpop.permute.xlu0 %796
        %799 = vmatprep.subr.bf16.mxu0 0
        %800 = vmatpush1.bf16.msra.mxu0 0
        %801 = vmatprep.subr.bf16.mxu0 0
        %802 = vmatpush1.bf16.msra.mxu0 0
        %803 = vmatprep.subr.bf16.mxu0 0
        %804 = vmatpush1.bf16.msra.mxu0 0
        %805 = vmatprep.subr.bf16.mxu0 0
        %806 = vmatpush1.bf16.msra.mxu0 0
        %807 = vmatprep.subr.bf16.mxu0 0
        %808 = vmatpush1.bf16.msra.mxu0 0
        %809 = vmatprep.subr.bf16.mxu0 0
        %810 = vmatpush1.bf16.msra.mxu0 0
        %811 = vmatprep.subr.bf16.mxu0 0
        %812 = vmatpush1.bf16.msra.mxu0 %v792
        %813 = vmatprep.subr.bf16.mxu0 0
        %814 = vmatpush1.bf16.msra.mxu0 %v791
        %815 = vmatprep.subr.bf16.mxu0 0
        %816 = vmatpush2.bf16.msra.mxu0 0
        %817 = vmatprep.subr.bf16.mxu0 0
        %818 = vmatpush2.bf16.msra.mxu0 0
        %819 = vmatprep.subr.bf16.mxu0 0
        %820 = vmatpush2.bf16.msra.mxu0 0
        %821 = vmatprep.subr.bf16.mxu0 0
        %822 = vmatpush2.bf16.msra.mxu0 0
        %823 = vmatprep.subr.bf16.mxu0 0
        %824 = vmatpush2.bf16.msra.mxu0 0
        %825 = vmatprep.subr.bf16.mxu0 0
        %826 = vmatpush2.bf16.msra.mxu0 0
        %827 = vmatprep.subr.bf16.mxu0 0
        %828 = vmatpush2.bf16.msra.mxu0 0
        %829 = vmatprep.subr.bf16.mxu0 0
        %830 = vmatpush2.bf16.msra.mxu0 0
        %831 = vmatprep.mubr.bf16.mxu0 0
        %832 = vmatmul.mubr.bf16.gmra.mxu0 %v436
        %v833 = vpop.f32.mrf.mxu0
        %v834 = vadd.f32 %v797, %v833
        %v835 = vpop.f32.mrf.mxu0
        %v836 = vpop.f32.mrf.mxu0
        %v837 = vpop.f32.mrf.mxu0
        %838 = vdwg.mxu0
        %s839 = scalar_lea.vmem %s380, 80
        %v840 = vld [vmem:[%s839] sm:$0xf]
        %v841 = vld [vmem:[%s839 + $0x4] sm:$0xf]
        %v842 = vld [vmem:[%s839 + $0x8] sm:$0xf]
        %v843 = vld [vmem:[%s839 + $0xc] sm:$0xf]
        %v848 = vunpack.c.l.b16 %v840
        %v849 = vunpack.c.l.b16 %v841
        %v850 = vunpack.c.l.b16 %v842
        %v851 = vunpack.c.l.b16 %v843
        %v852 = vpack.c.b16 %v849, %v848
        %v853 = vpack.c.b16 %v851, %v850
        %857 = vrot.lane.b32.xlu0 %v547, 112
        %v858 = vpop.permute.xlu0 %857
        %860 = vmatprep.subr.bf16.mxu0 0
        %861 = vmatpush1.bf16.msra.mxu0 0
        %862 = vmatprep.subr.bf16.mxu0 0
        %863 = vmatpush1.bf16.msra.mxu0 0
        %864 = vmatprep.subr.bf16.mxu0 0
        %865 = vmatpush1.bf16.msra.mxu0 0
        %866 = vmatprep.subr.bf16.mxu0 0
        %867 = vmatpush1.bf16.msra.mxu0 0
        %868 = vmatprep.subr.bf16.mxu0 0
        %869 = vmatpush1.bf16.msra.mxu0 0
        %870 = vmatprep.subr.bf16.mxu0 0
        %871 = vmatpush1.bf16.msra.mxu0 0
        %872 = vmatprep.subr.bf16.mxu0 0
        %873 = vmatpush1.bf16.msra.mxu0 %v853
        %874 = vmatprep.subr.bf16.mxu0 0
        %875 = vmatpush1.bf16.msra.mxu0 %v852
        %876 = vmatprep.subr.bf16.mxu0 0
        %877 = vmatpush2.bf16.msra.mxu0 0
        %878 = vmatprep.subr.bf16.mxu0 0
        %879 = vmatpush2.bf16.msra.mxu0 0
        %880 = vmatprep.subr.bf16.mxu0 0
        %881 = vmatpush2.bf16.msra.mxu0 0
        %882 = vmatprep.subr.bf16.mxu0 0
        %883 = vmatpush2.bf16.msra.mxu0 0
        %884 = vmatprep.subr.bf16.mxu0 0
        %885 = vmatpush2.bf16.msra.mxu0 0
        %886 = vmatprep.subr.bf16.mxu0 0
        %887 = vmatpush2.bf16.msra.mxu0 0
        %888 = vmatprep.subr.bf16.mxu0 0
        %889 = vmatpush2.bf16.msra.mxu0 0
        %890 = vmatprep.subr.bf16.mxu0 0
        %891 = vmatpush2.bf16.msra.mxu0 0
        %892 = vmatprep.mubr.bf16.mxu0 0
        %893 = vmatmul.mubr.bf16.gmra.mxu0 %v436
        %v894 = vpop.f32.mrf.mxu0
        %v895 = vadd.f32 %v858, %v894
        %v896 = vpop.f32.mrf.mxu0
        %v897 = vpop.f32.mrf.mxu0
        %v898 = vpop.f32.mrf.mxu0
        %899 = vdwg.mxu0
        %v900 = vpack.c.bf16 %v773, %v773
        %v901 = vpack.c.bf16 %v834, %v834
        %v903 = vsel %vm602, %v900, 0
        %v906 = vsel %vm602, %v901, 0
        %908 = vmatprep.subr.bf16.mxu0 0
        %909 = vmatpush1.bf16.xpose.msra.mxu0 0
        %910 = vmatprep.subr.bf16.mxu0 0
        %911 = vmatpush1.bf16.xpose.msra.mxu0 0
        %912 = vmatprep.subr.bf16.mxu0 0
        %913 = vmatpush1.bf16.xpose.msra.mxu0 0
        %914 = vmatprep.subr.bf16.mxu0 0
        %915 = vmatpush1.bf16.xpose.msra.mxu0 0
        %916 = vmatprep.subr.bf16.mxu0 0
        %917 = vmatpush1.bf16.xpose.msra.mxu0 0
        %918 = vmatprep.subr.bf16.mxu0 0
        %919 = vmatpush1.bf16.xpose.msra.mxu0 0
        %920 = vmatprep.subr.bf16.mxu0 0
        %921 = vmatpush1.bf16.xpose.msra.mxu0 0
        %922 = vmatprep.subr.bf16.mxu0 0
        %923 = vmatpush1.bf16.xpose.msra.mxu0 %v906
        %924 = vmatprep.subr.bf16.mxu0 0
        %925 = vmatpush2.bf16.xpose.msra.mxu0 0
        %926 = vmatprep.subr.bf16.mxu0 0
        %927 = vmatpush2.bf16.xpose.msra.mxu0 0
        %928 = vmatprep.subr.bf16.mxu0 0
        %929 = vmatpush2.bf16.xpose.msra.mxu0 0
        %930 = vmatprep.subr.bf16.mxu0 0
        %931 = vmatpush2.bf16.xpose.msra.mxu0 0
        %932 = vmatprep.subr.bf16.mxu0 0
        %933 = vmatpush2.bf16.xpose.msra.mxu0 0
        %934 = vmatprep.subr.bf16.mxu0 0
        %935 = vmatpush2.bf16.xpose.msra.mxu0 0
        %936 = vmatprep.subr.bf16.mxu0 0
        %937 = vmatpush2.bf16.xpose.msra.mxu0 0
        %938 = vmatprep.subr.bf16.mxu0 0
        %939 = vmatpush2.bf16.xpose.msra.mxu0 0
        %940 = vmatprep.mubr.bf16.mxu0 0
        %941 = vmatmul.mubr.bf16.gmra.mxu0 %v903
        %v942 = vpop.f32.mrf.mxu0
        %v943 = vadd.f32 0.0, %v942
        %v944 = vpop.f32.mrf.mxu0
        %v945 = vpop.f32.mrf.mxu0
        %v946 = vpop.f32.mrf.mxu0
        %947 = vdwg.mxu0
        %v948 = vmul.f32 %v943, 0.25
        %v949 = vsel %vm650, %v948, -inf
        %950 = vmax.xlane.f32.xlu0 %v949
        %v951 = vpop.xlane.xlu0 %950
        %v952 = vsub.f32 %v948, %v951
        %v953 = vmul.f32 %v952, 1.442695
        %v954 = vpow.pop %v953
        %v955 = vsel %vm650, %v954, 0.0
        %956 = vadd.xlane.f32.xlu0 %v955
        %v957 = vpop.xlane.xlu0 %956
        %v958 = vrcp.pop %v957
        %v959 = vmul.f32 %v954, %v958
        %v960 = vpack.c.bf16 %v959, %v959
        %v961 = vpack.c.bf16 %v895, %v895
        %v963 = vsel %vm650, %v960, 0
        %v966 = vsel %vm667, %v961, 0
        %968 = vmatprep.subr.bf16.mxu0 0
        %969 = vmatpush1.bf16.msra.mxu0 0
        %970 = vmatprep.subr.bf16.mxu0 0
        %971 = vmatpush1.bf16.msra.mxu0 0
        %972 = vmatprep.subr.bf16.mxu0 0
        %973 = vmatpush1.bf16.msra.mxu0 0
        %974 = vmatprep.subr.bf16.mxu0 0
        %975 = vmatpush1.bf16.msra.mxu0 0
        %976 = vmatprep.subr.bf16.mxu0 0
        %977 = vmatpush1.bf16.msra.mxu0 0
        %978 = vmatprep.subr.bf16.mxu0 0
        %979 = vmatpush1.bf16.msra.mxu0 0
        %980 = vmatprep.subr.bf16.mxu0 0
        %981 = vmatpush1.bf16.msra.mxu0 0
        %982 = vmatprep.subr.bf16.mxu0 0
        %983 = vmatpush1.bf16.msra.mxu0 %v966
        %984 = vmatprep.subr.bf16.mxu0 0
        %985 = vmatpush2.bf16.msra.mxu0 0
        %986 = vmatprep.subr.bf16.mxu0 0
        %987 = vmatpush2.bf16.msra.mxu0 0
        %988 = vmatprep.subr.bf16.mxu0 0
        %989 = vmatpush2.bf16.msra.mxu0 0
        %990 = vmatprep.subr.bf16.mxu0 0
        %991 = vmatpush2.bf16.msra.mxu0 0
        %992 = vmatprep.subr.bf16.mxu0 0
        %993 = vmatpush2.bf16.msra.mxu0 0
        %994 = vmatprep.subr.bf16.mxu0 0
        %995 = vmatpush2.bf16.msra.mxu0 0
        %996 = vmatprep.subr.bf16.mxu0 0
        %997 = vmatpush2.bf16.msra.mxu0 0
        %998 = vmatprep.subr.bf16.mxu0 0
        %999 = vmatpush2.bf16.msra.mxu0 0
        %1000 = vmatprep.mubr.bf16.mxu0 0
        %1001 = vmatmul.mubr.bf16.gmra.mxu0 %v963
        %v1002 = vpop.f32.mrf.mxu0
        %v1003 = vadd.f32 0.0, %v1002
        %v1004 = vpop.f32.mrf.mxu0
        %v1005 = vpop.f32.mrf.mxu0
        %v1006 = vpop.f32.mrf.mxu0
        %1007 = vdwg.mxu0
        %v1008 = vpack.c.bf16 %v1003, %v1003
        %s1009 = scalar_lea.vmem %s380, 112
        %v1010 = vld [vmem:[%s1009] sm:$0xf]
        %v1011 = vld [vmem:[%s1009 + $0x4] sm:$0xf]
        %v1012 = vld [vmem:[%s1009 + $0x8] sm:$0xf]
        %v1013 = vld [vmem:[%s1009 + $0xc] sm:$0xf]
        %v1018 = vunpack.c.l.b16 %v1010
        %v1019 = vunpack.c.l.b16 %v1011
        %v1020 = vunpack.c.l.b16 %v1012
        %v1021 = vunpack.c.l.b16 %v1013
        %v1022 = vpack.c.b16 %v1019, %v1018
        %v1023 = vpack.c.b16 %v1021, %v1020
        %v1025 = vsel %vm602, %v1008, 0
        %v1028 = vsel %vm602, %v1022, 0
        %v1031 = vsel %vm602, %v1023, 0
        %1033 = vmatprep.subr.bf16.mxu0 0
        %1034 = vmatpush1.bf16.xpose.msra.mxu0 0
        %1035 = vmatprep.subr.bf16.mxu0 0
        %1036 = vmatpush1.bf16.xpose.msra.mxu0 0
        %1037 = vmatprep.subr.bf16.mxu0 0
        %1038 = vmatpush1.bf16.xpose.msra.mxu0 0
        %1039 = vmatprep.subr.bf16.mxu0 0
        %1040 = vmatpush1.bf16.xpose.msra.mxu0 0
        %1041 = vmatprep.subr.bf16.mxu0 0
        %1042 = vmatpush1.bf16.xpose.msra.mxu0 0
        %1043 = vmatprep.subr.bf16.mxu0 0
        %1044 = vmatpush1.bf16.xpose.msra.mxu0 0
        %1045 = vmatprep.subr.bf16.mxu0 0
        %1046 = vmatpush1.bf16.xpose.msra.mxu0 %v1031
        %1047 = vmatprep.subr.bf16.mxu0 0
        %1048 = vmatpush1.bf16.xpose.msra.mxu0 %v1028
        %1049 = vmatprep.subr.bf16.mxu0 0
        %1050 = vmatpush2.bf16.xpose.msra.mxu0 0
        %1051 = vmatprep.subr.bf16.mxu0 0
        %1052 = vmatpush2.bf16.xpose.msra.mxu0 0
        %1053 = vmatprep.subr.bf16.mxu0 0
        %1054 = vmatpush2.bf16.xpose.msra.mxu0 0
        %1055 = vmatprep.subr.bf16.mxu0 0
        %1056 = vmatpush2.bf16.xpose.msra.mxu0 0
        %1057 = vmatprep.subr.bf16.mxu0 0
        %1058 = vmatpush2.bf16.xpose.msra.mxu0 0
        %1059 = vmatprep.subr.bf16.mxu0 0
        %1060 = vmatpush2.bf16.xpose.msra.mxu0 0
        %1061 = vmatprep.subr.bf16.mxu0 0
        %1062 = vmatpush2.bf16.xpose.msra.mxu0 0
        %1063 = vmatprep.subr.bf16.mxu0 0
        %1064 = vmatpush2.bf16.xpose.msra.mxu0 0
        %1065 = vmatprep.mubr.bf16.mxu0 0
        %1066 = vmatmul.mubr.bf16.gmra.mxu0 %v1025
        %v1067 = vpop.f32.mrf.mxu0
        %v1068 = vadd.f32 0.0, %v1067
        %v1069 = vpop.f32.mrf.mxu0
        %v1070 = vpop.f32.mrf.mxu0
        %v1071 = vpop.f32.mrf.mxu0
        %1072 = vdwg.mxu0
        %v1077 = vunpack.c.l.b16 %v713
        %v1078 = vunpack.c.l.b16 %v714
        %v1079 = vunpack.c.l.b16 %v715
        %v1080 = vunpack.c.l.b16 %v716
        %v1081 = vpack.c.b16 %v1078, %v1077
        %v1082 = vpack.c.b16 %v1080, %v1079
        %v1084 = vsel %vm602, %v711, 0
        %v1087 = vsel %vm602, %v1081, 0
        %v1090 = vsel %vm602, %v1082, 0
        %1092 = vmatprep.subr.bf16.mxu0 0
        %1093 = vmatpush1.bf16.xpose.msra.mxu0 0
        %1094 = vmatprep.subr.bf16.mxu0 0
        %1095 = vmatpush1.bf16.xpose.msra.mxu0 0
        %1096 = vmatprep.subr.bf16.mxu0 0
        %1097 = vmatpush1.bf16.xpose.msra.mxu0 0
        %1098 = vmatprep.subr.bf16.mxu0 0
        %1099 = vmatpush1.bf16.xpose.msra.mxu0 0
        %1100 = vmatprep.subr.bf16.mxu0 0
        %1101 = vmatpush1.bf16.xpose.msra.mxu0 0
        %1102 = vmatprep.subr.bf16.mxu0 0
        %1103 = vmatpush1.bf16.xpose.msra.mxu0 0
        %1104 = vmatprep.subr.bf16.mxu0 0
        %1105 = vmatpush1.bf16.xpose.msra.mxu0 %v1090
        %1106 = vmatprep.subr.bf16.mxu0 0
        %1107 = vmatpush1.bf16.xpose.msra.mxu0 %v1087
        %1108 = vmatprep.subr.bf16.mxu0 0
        %1109 = vmatpush2.bf16.xpose.msra.mxu0 0
        %1110 = vmatprep.subr.bf16.mxu0 0
        %1111 = vmatpush2.bf16.xpose.msra.mxu0 0
        %1112 = vmatprep.subr.bf16.mxu0 0
        %1113 = vmatpush2.bf16.xpose.msra.mxu0 0
        %1114 = vmatprep.subr.bf16.mxu0 0
        %1115 = vmatpush2.bf16.xpose.msra.mxu0 0
        %1116 = vmatprep.subr.bf16.mxu0 0
        %1117 = vmatpush2.bf16.xpose.msra.mxu0 0
        %1118 = vmatprep.subr.bf16.mxu0 0
        %1119 = vmatpush2.bf16.xpose.msra.mxu0 0
        %1120 = vmatprep.subr.bf16.mxu0 0
        %1121 = vmatpush2.bf16.xpose.msra.mxu0 0
        %1122 = vmatprep.subr.bf16.mxu0 0
        %1123 = vmatpush2.bf16.xpose.msra.mxu0 0
        %1124 = vmatprep.mubr.bf16.mxu0 0
        %1125 = vmatmul.mubr.bf16.gmra.mxu0 %v1084
        %v1126 = vpop.f32.mrf.mxu0
        %v1127 = vadd.f32 %v1068, %v1126
        %v1128 = vpop.f32.mrf.mxu0
        %v1129 = vpop.f32.mrf.mxu0
        %v1130 = vpop.f32.mrf.mxu0
        %1131 = vdwg.mxu0
        %v1132 = vld [vmem:[%s399 + $0x3] sm:$0x1]
        %v1133 = vlaneseq
        %v1134 = vshrl.u32 %v1133, 7
        %v1135 = vsub.s32 0, %v1134
        %v1136 = vrot.slane %v1132, %v1135
        %v1137 = vadd.f32 %v1127, %v1136
        %v1138 = vadd.f32 %v408, %v1137
        %v1139 = vsel %vm434, %v1138, 0.0
        %1140 = vadd.xlane.f32.xlu0 %v1139
        %v1141 = vpop.xlane.xlu0 %1140
        %v1142 = vrcp.pop 32.0
        %v1143 = vmul.f32 %v1141, %v1142
        %v1144 = vsub.f32 %v1138, %v1143
        %v1145 = vmul.f32 %v1144, %v1144
        %v1146 = vsel %vm434, %v1145, 0.0
        %1147 = vadd.xlane.f32.xlu0 %v1146
        %v1148 = vpop.xlane.xlu0 %1147
        %v1149 = vmul.f32 %v1148, %v1142
        %v1150 = vadd.f32 %v1149, 1e-05
        %v1151 = vrsqrt.pop %v1150
        %v1152 = vmul.f32 %v1144, %v1151
        %v1153 = vld [vmem:[%s399 + $0x4] sm:$0x1]
        %v1154 = vlaneseq
        %v1155 = vshrl.u32 %v1154, 7
        %v1156 = vsub.s32 0, %v1155
        %v1157 = vrot.slane %v1153, %v1156
        %v1158 = vmul.f32 %v1152, %v1157
        %v1159 = vld [vmem:[%s399 + $0x5] sm:$0x1]
        %v1160 = vlaneseq
        %v1161 = vshrl.u32 %v1160, 7
        %v1162 = vsub.s32 0, %v1161
        %v1163 = vrot.slane %v1159, %v1162
        %v1164 = vadd.f32 %v1158, %v1163
        %v1165 = vpack.c.bf16 %v1164, %v1164
        %v1166 = vpack.c.bf16 %v409, %v409
        %v1167 = vld [vmem:[%s399 + $0x6] sm:$0x1]
        %v1168 = vld [vmem:[%s399 + $0x7] sm:$0x1]
        %v1169 = vld [vmem:[%s399 + $0x8] sm:$0x1]
        %s1170 = scalar_lea.vmem %s380, 128
        %v1171 = vld [vmem:[%s1170] sm:$0xf]
        %v1172 = vld [vmem:[%s1170 + $0x4] sm:$0xf]
        %v1173 = vld [vmem:[%s1170 + $0x8] sm:$0xf]
        %v1174 = vld [vmem:[%s1170 + $0xc] sm:$0xf]
        %v1175 = vlaneseq
        %v1176 = vshrl.u32 %v1175, 7
        %v1177 = vsub.s32 0, %v1176
        %v1178 = vrot.slane %v1167, %v1177
        %v1183 = vunpack.c.l.b16 %v1171
        %v1184 = vunpack.c.l.b16 %v1172
        %v1185 = vunpack.c.l.b16 %v1173
        %v1186 = vunpack.c.l.b16 %v1174
        %v1187 = vpack.c.b16 %v1184, %v1183
        %v1188 = vpack.c.b16 %v1186, %v1185
        %v1192 = vsel %vm434, %v1165, 0
        %1194 = vmatprep.subr.bf16.mxu0 0
        %1195 = vmatpush1.bf16.msra.mxu0 0
        %1196 = vmatprep.subr.bf16.mxu0 0
        %1197 = vmatpush1.bf16.msra.mxu0 0
        %1198 = vmatprep.subr.bf16.mxu0 0
        %1199 = vmatpush1.bf16.msra.mxu0 0
        %1200 = vmatprep.subr.bf16.mxu0 0
        %1201 = vmatpush1.bf16.msra.mxu0 0
        %1202 = vmatprep.subr.bf16.mxu0 0
        %1203 = vmatpush1.bf16.msra.mxu0 0
        %1204 = vmatprep.subr.bf16.mxu0 0
        %1205 = vmatpush1.bf16.msra.mxu0 0
        %1206 = vmatprep.subr.bf16.mxu0 0
        %1207 = vmatpush1.bf16.msra.mxu0 %v1188
        %1208 = vmatprep.subr.bf16.mxu0 0
        %1209 = vmatpush1.bf16.msra.mxu0 %v1187
        %1210 = vmatprep.subr.bf16.mxu0 0
        %1211 = vmatpush2.bf16.msra.mxu0 0
        %1212 = vmatprep.subr.bf16.mxu0 0
        %1213 = vmatpush2.bf16.msra.mxu0 0
        %1214 = vmatprep.subr.bf16.mxu0 0
        %1215 = vmatpush2.bf16.msra.mxu0 0
        %1216 = vmatprep.subr.bf16.mxu0 0
        %1217 = vmatpush2.bf16.msra.mxu0 0
        %1218 = vmatprep.subr.bf16.mxu0 0
        %1219 = vmatpush2.bf16.msra.mxu0 0
        %1220 = vmatprep.subr.bf16.mxu0 0
        %1221 = vmatpush2.bf16.msra.mxu0 0
        %1222 = vmatprep.subr.bf16.mxu0 0
        %1223 = vmatpush2.bf16.msra.mxu0 0
        %1224 = vmatprep.subr.bf16.mxu0 0
        %1225 = vmatpush2.bf16.msra.mxu0 0
        %1226 = vmatprep.mubr.bf16.mxu0 0
        %1227 = vmatmul.mubr.bf16.gmra.mxu0 %v1192
        %v1228 = vpop.f32.mrf.mxu0
        %v1229 = vadd.f32 %v1178, %v1228
        %v1230 = vpop.f32.mrf.mxu0
        %v1231 = vpop.f32.mrf.mxu0
        %v1232 = vpop.f32.mrf.mxu0
        %1233 = vdwg.mxu0
        %s1234 = scalar_lea.vmem %s380, 160
        %v1235 = vld [vmem:[%s1234] sm:$0xf]
        %v1236 = vld [vmem:[%s1234 + $0x4] sm:$0xf]
        %v1237 = vld [vmem:[%s1234 + $0x8] sm:$0xf]
        %v1238 = vld [vmem:[%s1234 + $0xc] sm:$0xf]
        %v1239 = vlaneseq
        %v1240 = vshrl.u32 %v1239, 7
        %v1241 = vsub.s32 0, %v1240
        %v1242 = vrot.slane %v1168, %v1241
        %v1247 = vunpack.c.l.b16 %v1235
        %v1248 = vunpack.c.l.b16 %v1236
        %v1249 = vunpack.c.l.b16 %v1237
        %v1250 = vunpack.c.l.b16 %v1238
        %v1251 = vpack.c.b16 %v1248, %v1247
        %v1252 = vpack.c.b16 %v1250, %v1249
        %v1256 = vsel %vm434, %v1166, 0
        %1258 = vmatprep.subr.bf16.mxu0 0
        %1259 = vmatpush1.bf16.msra.mxu0 0
        %1260 = vmatprep.subr.bf16.mxu0 0
        %1261 = vmatpush1.bf16.msra.mxu0 0
        %1262 = vmatprep.subr.bf16.mxu0 0
        %1263 = vmatpush1.bf16.msra.mxu0 0
        %1264 = vmatprep.subr.bf16.mxu0 0
        %1265 = vmatpush1.bf16.msra.mxu0 0
        %1266 = vmatprep.subr.bf16.mxu0 0
        %1267 = vmatpush1.bf16.msra.mxu0 0
        %1268 = vmatprep.subr.bf16.mxu0 0
        %1269 = vmatpush1.bf16.msra.mxu0 0
        %1270 = vmatprep.subr.bf16.mxu0 0
        %1271 = vmatpush1.bf16.msra.mxu0 %v1252
        %1272 = vmatprep.subr.bf16.mxu0 0
        %1273 = vmatpush1.bf16.msra.mxu0 %v1251
        %1274 = vmatprep.subr.bf16.mxu0 0
        %1275 = vmatpush2.bf16.msra.mxu0 0
        %1276 = vmatprep.subr.bf16.mxu0 0
        %1277 = vmatpush2.bf16.msra.mxu0 0
        %1278 = vmatprep.subr.bf16.mxu0 0
        %1279 = vmatpush2.bf16.msra.mxu0 0
        %1280 = vmatprep.subr.bf16.mxu0 0
        %1281 = vmatpush2.bf16.msra.mxu0 0
        %1282 = vmatprep.subr.bf16.mxu0 0
        %1283 = vmatpush2.bf16.msra.mxu0 0
        %1284 = vmatprep.subr.bf16.mxu0 0
        %1285 = vmatpush2.bf16.msra.mxu0 0
        %1286 = vmatprep.subr.bf16.mxu0 0
        %1287 = vmatpush2.bf16.msra.mxu0 0
        %1288 = vmatprep.subr.bf16.mxu0 0
        %1289 = vmatpush2.bf16.msra.mxu0 0
        %1290 = vmatprep.mubr.bf16.mxu0 0
        %1291 = vmatmul.mubr.bf16.gmra.mxu0 %v1256
        %v1292 = vpop.f32.mrf.mxu0
        %v1293 = vadd.f32 %v1242, %v1292
        %v1294 = vpop.f32.mrf.mxu0
        %v1295 = vpop.f32.mrf.mxu0
        %v1296 = vpop.f32.mrf.mxu0
        %1297 = vdwg.mxu0
        %s1298 = scalar_lea.vmem %s380, 192
        %v1299 = vld [vmem:[%s1298] sm:$0xf]
        %v1300 = vld [vmem:[%s1298 + $0x4] sm:$0xf]
        %v1301 = vld [vmem:[%s1298 + $0x8] sm:$0xf]
        %v1302 = vld [vmem:[%s1298 + $0xc] sm:$0xf]
        %v1303 = vlaneseq
        %v1304 = vshrl.u32 %v1303, 7
        %v1305 = vsub.s32 0, %v1304
        %v1306 = vrot.slane %v1169, %v1305
        %v1311 = vunpack.c.l.b16 %v1299
        %v1312 = vunpack.c.l.b16 %v1300
        %v1313 = vunpack.c.l.b16 %v1301
        %v1314 = vunpack.c.l.b16 %v1302
        %v1315 = vpack.c.b16 %v1312, %v1311
        %v1316 = vpack.c.b16 %v1314, %v1313
        %1319 = vmatprep.subr.bf16.mxu0 0
        %1320 = vmatpush1.bf16.msra.mxu0 0
        %1321 = vmatprep.subr.bf16.mxu0 0
        %1322 = vmatpush1.bf16.msra.mxu0 0
        %1323 = vmatprep.subr.bf16.mxu0 0
        %1324 = vmatpush1.bf16.msra.mxu0 0
        %1325 = vmatprep.subr.bf16.mxu0 0
        %1326 = vmatpush1.bf16.msra.mxu0 0
        %1327 = vmatprep.subr.bf16.mxu0 0
        %1328 = vmatpush1.bf16.msra.mxu0 0
        %1329 = vmatprep.subr.bf16.mxu0 0
        %1330 = vmatpush1.bf16.msra.mxu0 0
        %1331 = vmatprep.subr.bf16.mxu0 0
        %1332 = vmatpush1.bf16.msra.mxu0 %v1316
        %1333 = vmatprep.subr.bf16.mxu0 0
        %1334 = vmatpush1.bf16.msra.mxu0 %v1315
        %1335 = vmatprep.subr.bf16.mxu0 0
        %1336 = vmatpush2.bf16.msra.mxu0 0
        %1337 = vmatprep.subr.bf16.mxu0 0
        %1338 = vmatpush2.bf16.msra.mxu0 0
        %1339 = vmatprep.subr.bf16.mxu0 0
        %1340 = vmatpush2.bf16.msra.mxu0 0
        %1341 = vmatprep.subr.bf16.mxu0 0
        %1342 = vmatpush2.bf16.msra.mxu0 0
        %1343 = vmatprep.subr.bf16.mxu0 0
        %1344 = vmatpush2.bf16.msra.mxu0 0
        %1345 = vmatprep.subr.bf16.mxu0 0
        %1346 = vmatpush2.bf16.msra.mxu0 0
        %1347 = vmatprep.subr.bf16.mxu0 0
        %1348 = vmatpush2.bf16.msra.mxu0 0
        %1349 = vmatprep.subr.bf16.mxu0 0
        %1350 = vmatpush2.bf16.msra.mxu0 0
        %1351 = vmatprep.mubr.bf16.mxu0 0
        %1352 = vmatmul.mubr.bf16.gmra.mxu0 %v1256
        %v1353 = vpop.f32.mrf.mxu0
        %v1354 = vadd.f32 %v1306, %v1353
        %v1355 = vpop.f32.mrf.mxu0
        %v1356 = vpop.f32.mrf.mxu0
        %v1357 = vpop.f32.mrf.mxu0
        %1358 = vdwg.mxu0
        %v1359 = vpack.c.bf16 %v1229, %v1229
        %v1360 = vpack.c.bf16 %v1293, %v1293
        %v1362 = vsel %vm602, %v1359, 0
        %v1365 = vsel %vm602, %v1360, 0
        %1367 = vmatprep.subr.bf16.mxu0 0
        %1368 = vmatpush1.bf16.xpose.msra.mxu0 0
        %1369 = vmatprep.subr.bf16.mxu0 0
        %1370 = vmatpush1.bf16.xpose.msra.mxu0 0
        %1371 = vmatprep.subr.bf16.mxu0 0
        %1372 = vmatpush1.bf16.xpose.msra.mxu0 0
        %1373 = vmatprep.subr.bf16.mxu0 0
        %1374 = vmatpush1.bf16.xpose.msra.mxu0 0
        %1375 = vmatprep.subr.bf16.mxu0 0
        %1376 = vmatpush1.bf16.xpose.msra.mxu0 0
        %1377 = vmatprep.subr.bf16.mxu0 0
        %1378 = vmatpush1.bf16.xpose.msra.mxu0 0
        %1379 = vmatprep.subr.bf16.mxu0 0
        %1380 = vmatpush1.bf16.xpose.msra.mxu0 0
        %1381 = vmatprep.subr.bf16.mxu0 0
        %1382 = vmatpush1.bf16.xpose.msra.mxu0 %v1365
        %1383 = vmatprep.subr.bf16.mxu0 0
        %1384 = vmatpush2.bf16.xpose.msra.mxu0 0
        %1385 = vmatprep.subr.bf16.mxu0 0
        %1386 = vmatpush2.bf16.xpose.msra.mxu0 0
        %1387 = vmatprep.subr.bf16.mxu0 0
        %1388 = vmatpush2.bf16.xpose.msra.mxu0 0
        %1389 = vmatprep.subr.bf16.mxu0 0
        %1390 = vmatpush2.bf16.xpose.msra.mxu0 0
        %1391 = vmatprep.subr.bf16.mxu0 0
        %1392 = vmatpush2.bf16.xpose.msra.mxu0 0
        %1393 = vmatprep.subr.bf16.mxu0 0
        %1394 = vmatpush2.bf16.xpose.msra.mxu0 0
        %1395 = vmatprep.subr.bf16.mxu0 0
        %1396 = vmatpush2.bf16.xpose.msra.mxu0 0
        %1397 = vmatprep.subr.bf16.mxu0 0
        %1398 = vmatpush2.bf16.xpose.msra.mxu0 0
        %1399 = vmatprep.mubr.bf16.mxu0 0
        %1400 = vmatmul.mubr.bf16.gmra.mxu0 %v1362
        %v1401 = vpop.f32.mrf.mxu0
        %v1402 = vadd.f32 0.0, %v1401
        %v1403 = vpop.f32.mrf.mxu0
        %v1404 = vpop.f32.mrf.mxu0
        %v1405 = vpop.f32.mrf.mxu0
        %1406 = vdwg.mxu0
        %v1407 = vmul.f32 %v1402, 0.25
        %v1408 = vsel %vm650, %v1407, -inf
        %1409 = vmax.xlane.f32.xlu0 %v1408
        %v1410 = vpop.xlane.xlu0 %1409
        %v1411 = vsub.f32 %v1407, %v1410
        %v1412 = vmul.f32 %v1411, 1.442695
        %v1413 = vpow.pop %v1412
        %v1414 = vsel %vm650, %v1413, 0.0
        %1415 = vadd.xlane.f32.xlu0 %v1414
        %v1416 = vpop.xlane.xlu0 %1415
        %v1417 = vrcp.pop %v1416
        %v1418 = vmul.f32 %v1413, %v1417
        %v1419 = vpack.c.bf16 %v1418, %v1418
        %v1420 = vpack.c.bf16 %v1354, %v1354
        %v1422 = vsel %vm650, %v1419, 0
        %v1425 = vsel %vm667, %v1420, 0
        %1427 = vmatprep.subr.bf16.mxu0 0
        %1428 = vmatpush1.bf16.msra.mxu0 0
        %1429 = vmatprep.subr.bf16.mxu0 0
        %1430 = vmatpush1.bf16.msra.mxu0 0
        %1431 = vmatprep.subr.bf16.mxu0 0
        %1432 = vmatpush1.bf16.msra.mxu0 0
        %1433 = vmatprep.subr.bf16.mxu0 0
        %1434 = vmatpush1.bf16.msra.mxu0 0
        %1435 = vmatprep.subr.bf16.mxu0 0
        %1436 = vmatpush1.bf16.msra.mxu0 0
        %1437 = vmatprep.subr.bf16.mxu0 0
        %1438 = vmatpush1.bf16.msra.mxu0 0
        %1439 = vmatprep.subr.bf16.mxu0 0
        %1440 = vmatpush1.bf16.msra.mxu0 0
        %1441 = vmatprep.subr.bf16.mxu0 0
        %1442 = vmatpush1.bf16.msra.mxu0 %v1425
        %1443 = vmatprep.subr.bf16.mxu0 0
        %1444 = vmatpush2.bf16.msra.mxu0 0
        %1445 = vmatprep.subr.bf16.mxu0 0
        %1446 = vmatpush2.bf16.msra.mxu0 0
        %1447 = vmatprep.subr.bf16.mxu0 0
        %1448 = vmatpush2.bf16.msra.mxu0 0
        %1449 = vmatprep.subr.bf16.mxu0 0
        %1450 = vmatpush2.bf16.msra.mxu0 0
        %1451 = vmatprep.subr.bf16.mxu0 0
        %1452 = vmatpush2.bf16.msra.mxu0 0
        %1453 = vmatprep.subr.bf16.mxu0 0
        %1454 = vmatpush2.bf16.msra.mxu0 0
        %1455 = vmatprep.subr.bf16.mxu0 0
        %1456 = vmatpush2.bf16.msra.mxu0 0
        %1457 = vmatprep.subr.bf16.mxu0 0
        %1458 = vmatpush2.bf16.msra.mxu0 0
        %1459 = vmatprep.mubr.bf16.mxu0 0
        %1460 = vmatmul.mubr.bf16.gmra.mxu0 %v1422
        %v1461 = vpop.f32.mrf.mxu0
        %v1462 = vadd.f32 0.0, %v1461
        %v1463 = vpop.f32.mrf.mxu0
        %v1464 = vpop.f32.mrf.mxu0
        %v1465 = vpop.f32.mrf.mxu0
        %1466 = vdwg.mxu0
        %v1467 = vpack.c.bf16 %v1462, %v1462
        %s1468 = scalar_lea.vmem %s380, 224
        %v1469 = vld [vmem:[%s1468] sm:$0xf]
        %v1470 = vld [vmem:[%s1468 + $0x4] sm:$0xf]
        %v1471 = vld [vmem:[%s1468 + $0x8] sm:$0xf]
        %v1472 = vld [vmem:[%s1468 + $0xc] sm:$0xf]
        %s1473 = scalar_lea.vmem %s380, 144
        %v1474 = vld [vmem:[%s1473] sm:$0xf]
        %v1475 = vld [vmem:[%s1473 + $0x4] sm:$0xf]
        %v1476 = vld [vmem:[%s1473 + $0x8] sm:$0xf]
        %v1477 = vld [vmem:[%s1473 + $0xc] sm:$0xf]
        %v1482 = vunpack.c.l.b16 %v1474
        %v1483 = vunpack.c.l.b16 %v1475
        %v1484 = vunpack.c.l.b16 %v1476
        %v1485 = vunpack.c.l.b16 %v1477
        %v1486 = vpack.c.b16 %v1483, %v1482
        %v1487 = vpack.c.b16 %v1485, %v1484
        %1491 = vrot.lane.b32.xlu0 %v1178, 112
        %v1492 = vpop.permute.xlu0 %1491
        %1494 = vmatprep.subr.bf16.mxu0 0
        %1495 = vmatpush1.bf16.msra.mxu0 0
        %1496 = vmatprep.subr.bf16.mxu0 0
        %1497 = vmatpush1.bf16.msra.mxu0 0
        %1498 = vmatprep.subr.bf16.mxu0 0
        %1499 = vmatpush1.bf16.msra.mxu0 0
        %1500 = vmatprep.subr.bf16.mxu0 0
        %1501 = vmatpush1.bf16.msra.mxu0 0
        %1502 = vmatprep.subr.bf16.mxu0 0
        %1503 = vmatpush1.bf16.msra.mxu0 0
        %1504 = vmatprep.subr.bf16.mxu0 0
        %1505 = vmatpush1.bf16.msra.mxu0 0
        %1506 = vmatprep.subr.bf16.mxu0 0
        %1507 = vmatpush1.bf16.msra.mxu0 %v1487
        %1508 = vmatprep.subr.bf16.mxu0 0
        %1509 = vmatpush1.bf16.msra.mxu0 %v1486
        %1510 = vmatprep.subr.bf16.mxu0 0
        %1511 = vmatpush2.bf16.msra.mxu0 0
        %1512 = vmatprep.subr.bf16.mxu0 0
        %1513 = vmatpush2.bf16.msra.mxu0 0
        %1514 = vmatprep.subr.bf16.mxu0 0
        %1515 = vmatpush2.bf16.msra.mxu0 0
        %1516 = vmatprep.subr.bf16.mxu0 0
        %1517 = vmatpush2.bf16.msra.mxu0 0
        %1518 = vmatprep.subr.bf16.mxu0 0
        %1519 = vmatpush2.bf16.msra.mxu0 0
        %1520 = vmatprep.subr.bf16.mxu0 0
        %1521 = vmatpush2.bf16.msra.mxu0 0
        %1522 = vmatprep.subr.bf16.mxu0 0
        %1523 = vmatpush2.bf16.msra.mxu0 0
        %1524 = vmatprep.subr.bf16.mxu0 0
        %1525 = vmatpush2.bf16.msra.mxu0 0
        %1526 = vmatprep.mubr.bf16.mxu0 0
        %1527 = vmatmul.mubr.bf16.gmra.mxu0 %v1192
        %v1528 = vpop.f32.mrf.mxu0
        %v1529 = vadd.f32 %v1492, %v1528
        %v1530 = vpop.f32.mrf.mxu0
        %v1531 = vpop.f32.mrf.mxu0
        %v1532 = vpop.f32.mrf.mxu0
        %1533 = vdwg.mxu0
        %s1534 = scalar_lea.vmem %s380, 176
        %v1535 = vld [vmem:[%s1534] sm:$0xf]
        %v1536 = vld [vmem:[%s1534 + $0x4] sm:$0xf]
        %v1537 = vld [vmem:[%s1534 + $0x8] sm:$0xf]
        %v1538 = vld [vmem:[%s1534 + $0xc] sm:$0xf]
        %v1543 = vunpack.c.l.b16 %v1535
        %v1544 = vunpack.c.l.b16 %v1536
        %v1545 = vunpack.c.l.b16 %v1537
        %v1546 = vunpack.c.l.b16 %v1538
        %v1547 = vpack.c.b16 %v1544, %v1543
        %v1548 = vpack.c.b16 %v1546, %v1545
        %1552 = vrot.lane.b32.xlu0 %v1242, 112
        %v1553 = vpop.permute.xlu0 %1552
        %1555 = vmatprep.subr.bf16.mxu0 0
        %1556 = vmatpush1.bf16.msra.mxu0 0
        %1557 = vmatprep.subr.bf16.mxu0 0
        %1558 = vmatpush1.bf16.msra.mxu0 0
        %1559 = vmatprep.subr.bf16.mxu0 0
        %1560 = vmatpush1.bf16.msra.mxu0 0
        %1561 = vmatprep.subr.bf16.mxu0 0
        %1562 = vmatpush1.bf16.msra.mxu0 0
        %1563 = vmatprep.subr.bf16.mxu0 0
        %1564 = vmatpush1.bf16.msra.mxu0 0
        %1565 = vmatprep.subr.bf16.mxu0 0
        %1566 = vmatpush1.bf16.msra.mxu0 0
        %1567 = vmatprep.subr.bf16.mxu0 0
        %1568 = vmatpush1.bf16.msra.mxu0 %v1548
        %1569 = vmatprep.subr.bf16.mxu0 0
        %1570 = vmatpush1.bf16.msra.mxu0 %v1547
        %1571 = vmatprep.subr.bf16.mxu0 0
        %1572 = vmatpush2.bf16.msra.mxu0 0
        %1573 = vmatprep.subr.bf16.mxu0 0
        %1574 = vmatpush2.bf16.msra.mxu0 0
        %1575 = vmatprep.subr.bf16.mxu0 0
        %1576 = vmatpush2.bf16.msra.mxu0 0
        %1577 = vmatprep.subr.bf16.mxu0 0
        %1578 = vmatpush2.bf16.msra.mxu0 0
        %1579 = vmatprep.subr.bf16.mxu0 0
        %1580 = vmatpush2.bf16.msra.mxu0 0
        %1581 = vmatprep.subr.bf16.mxu0 0
        %1582 = vmatpush2.bf16.msra.mxu0 0
        %1583 = vmatprep.subr.bf16.mxu0 0
        %1584 = vmatpush2.bf16.msra.mxu0 0
        %1585 = vmatprep.subr.bf16.mxu0 0
        %1586 = vmatpush2.bf16.msra.mxu0 0
        %1587 = vmatprep.mubr.bf16.mxu0 0
        %1588 = vmatmul.mubr.bf16.gmra.mxu0 %v1256
        %v1589 = vpop.f32.mrf.mxu0
        %v1590 = vadd.f32 %v1553, %v1589
        %v1591 = vpop.f32.mrf.mxu0
        %v1592 = vpop.f32.mrf.mxu0
        %v1593 = vpop.f32.mrf.mxu0
        %1594 = vdwg.mxu0
        %s1595 = scalar_lea.vmem %s380, 208
        %v1596 = vld [vmem:[%s1595] sm:$0xf]
        %v1597 = vld [vmem:[%s1595 + $0x4] sm:$0xf]
        %v1598 = vld [vmem:[%s1595 + $0x8] sm:$0xf]
        %v1599 = vld [vmem:[%s1595 + $0xc] sm:$0xf]
        %v1604 = vunpack.c.l.b16 %v1596
        %v1605 = vunpack.c.l.b16 %v1597
        %v1606 = vunpack.c.l.b16 %v1598
        %v1607 = vunpack.c.l.b16 %v1599
        %v1608 = vpack.c.b16 %v1605, %v1604
        %v1609 = vpack.c.b16 %v1607, %v1606
        %1613 = vrot.lane.b32.xlu0 %v1306, 112
        %v1614 = vpop.permute.xlu0 %1613
        %1616 = vmatprep.subr.bf16.mxu0 0
        %1617 = vmatpush1.bf16.msra.mxu0 0
        %1618 = vmatprep.subr.bf16.mxu0 0
        %1619 = vmatpush1.bf16.msra.mxu0 0
        %1620 = vmatprep.subr.bf16.mxu0 0
        %1621 = vmatpush1.bf16.msra.mxu0 0
        %1622 = vmatprep.subr.bf16.mxu0 0
        %1623 = vmatpush1.bf16.msra.mxu0 0
        %1624 = vmatprep.subr.bf16.mxu0 0
        %1625 = vmatpush1.bf16.msra.mxu0 0
        %1626 = vmatprep.subr.bf16.mxu0 0
        %1627 = vmatpush1.bf16.msra.mxu0 0
        %1628 = vmatprep.subr.bf16.mxu0 0
        %1629 = vmatpush1.bf16.msra.mxu0 %v1609
        %1630 = vmatprep.subr.bf16.mxu0 0
        %1631 = vmatpush1.bf16.msra.mxu0 %v1608
        %1632 = vmatprep.subr.bf16.mxu0 0
        %1633 = vmatpush2.bf16.msra.mxu0 0
        %1634 = vmatprep.subr.bf16.mxu0 0
        %1635 = vmatpush2.bf16.msra.mxu0 0
        %1636 = vmatprep.subr.bf16.mxu0 0
        %1637 = vmatpush2.bf16.msra.mxu0 0
        %1638 = vmatprep.subr.bf16.mxu0 0
        %1639 = vmatpush2.bf16.msra.mxu0 0
        %1640 = vmatprep.subr.bf16.mxu0 0
        %1641 = vmatpush2.bf16.msra.mxu0 0
        %1642 = vmatprep.subr.bf16.mxu0 0
        %1643 = vmatpush2.bf16.msra.mxu0 0
        %1644 = vmatprep.subr.bf16.mxu0 0
        %1645 = vmatpush2.bf16.msra.mxu0 0
        %1646 = vmatprep.subr.bf16.mxu0 0
        %1647 = vmatpush2.bf16.msra.mxu0 0
        %1648 = vmatprep.mubr.bf16.mxu0 0
        %1649 = vmatmul.mubr.bf16.gmra.mxu0 %v1256
        %v1650 = vpop.f32.mrf.mxu0
        %v1651 = vadd.f32 %v1614, %v1650
        %v1652 = vpop.f32.mrf.mxu0
        %v1653 = vpop.f32.mrf.mxu0
        %v1654 = vpop.f32.mrf.mxu0
        %1655 = vdwg.mxu0
        %v1656 = vpack.c.bf16 %v1529, %v1529
        %v1657 = vpack.c.bf16 %v1590, %v1590
        %v1659 = vsel %vm602, %v1656, 0
        %v1662 = vsel %vm602, %v1657, 0
        %1664 = vmatprep.subr.bf16.mxu0 0
        %1665 = vmatpush1.bf16.xpose.msra.mxu0 0
        %1666 = vmatprep.subr.bf16.mxu0 0
        %1667 = vmatpush1.bf16.xpose.msra.mxu0 0
        %1668 = vmatprep.subr.bf16.mxu0 0
        %1669 = vmatpush1.bf16.xpose.msra.mxu0 0
        %1670 = vmatprep.subr.bf16.mxu0 0
        %1671 = vmatpush1.bf16.xpose.msra.mxu0 0
        %1672 = vmatprep.subr.bf16.mxu0 0
        %1673 = vmatpush1.bf16.xpose.msra.mxu0 0
        %1674 = vmatprep.subr.bf16.mxu0 0
        %1675 = vmatpush1.bf16.xpose.msra.mxu0 0
        %1676 = vmatprep.subr.bf16.mxu0 0
        %1677 = vmatpush1.bf16.xpose.msra.mxu0 0
        %1678 = vmatprep.subr.bf16.mxu0 0
        %1679 = vmatpush1.bf16.xpose.msra.mxu0 %v1662
        %1680 = vmatprep.subr.bf16.mxu0 0
        %1681 = vmatpush2.bf16.xpose.msra.mxu0 0
        %1682 = vmatprep.subr.bf16.mxu0 0
        %1683 = vmatpush2.bf16.xpose.msra.mxu0 0
        %1684 = vmatprep.subr.bf16.mxu0 0
        %1685 = vmatpush2.bf16.xpose.msra.mxu0 0
        %1686 = vmatprep.subr.bf16.mxu0 0
        %1687 = vmatpush2.bf16.xpose.msra.mxu0 0
        %1688 = vmatprep.subr.bf16.mxu0 0
        %1689 = vmatpush2.bf16.xpose.msra.mxu0 0
        %1690 = vmatprep.subr.bf16.mxu0 0
        %1691 = vmatpush2.bf16.xpose.msra.mxu0 0
        %1692 = vmatprep.subr.bf16.mxu0 0
        %1693 = vmatpush2.bf16.xpose.msra.mxu0 0
        %1694 = vmatprep.subr.bf16.mxu0 0
        %1695 = vmatpush2.bf16.xpose.msra.mxu0 0
        %1696 = vmatprep.mubr.bf16.mxu0 0
        %1697 = vmatmul.mubr.bf16.gmra.mxu0 %v1659
        %v1698 = vpop.f32.mrf.mxu0
        %v1699 = vadd.f32 0.0, %v1698
        %v1700 = vpop.f32.mrf.mxu0
        %v1701 = vpop.f32.mrf.mxu0
        %v1702 = vpop.f32.mrf.mxu0
        %1703 = vdwg.mxu0
        %v1704 = vmul.f32 %v1699, 0.25
        %v1705 = vsel %vm650, %v1704, -inf
        %1706 = vmax.xlane.f32.xlu0 %v1705
        %v1707 = vpop.xlane.xlu0 %1706
        %v1708 = vsub.f32 %v1704, %v1707
        %v1709 = vmul.f32 %v1708, 1.442695
        %v1710 = vpow.pop %v1709
        %v1711 = vsel %vm650, %v1710, 0.0
        %1712 = vadd.xlane.f32.xlu0 %v1711
        %v1713 = vpop.xlane.xlu0 %1712
        %v1714 = vrcp.pop %v1713
        %v1715 = vmul.f32 %v1710, %v1714
        %v1716 = vpack.c.bf16 %v1715, %v1715
        %v1717 = vpack.c.bf16 %v1651, %v1651
        %v1719 = vsel %vm650, %v1716, 0
        %v1722 = vsel %vm667, %v1717, 0
        %1724 = vmatprep.subr.bf16.mxu0 0
        %1725 = vmatpush1.bf16.msra.mxu0 0
        %1726 = vmatprep.subr.bf16.mxu0 0
        %1727 = vmatpush1.bf16.msra.mxu0 0
        %1728 = vmatprep.subr.bf16.mxu0 0
        %1729 = vmatpush1.bf16.msra.mxu0 0
        %1730 = vmatprep.subr.bf16.mxu0 0
        %1731 = vmatpush1.bf16.msra.mxu0 0
        %1732 = vmatprep.subr.bf16.mxu0 0
        %1733 = vmatpush1.bf16.msra.mxu0 0
        %1734 = vmatprep.subr.bf16.mxu0 0
        %1735 = vmatpush1.bf16.msra.mxu0 0
        %1736 = vmatprep.subr.bf16.mxu0 0
        %1737 = vmatpush1.bf16.msra.mxu0 0
        %1738 = vmatprep.subr.bf16.mxu0 0
        %1739 = vmatpush1.bf16.msra.mxu0 %v1722
        %1740 = vmatprep.subr.bf16.mxu0 0
        %1741 = vmatpush2.bf16.msra.mxu0 0
        %1742 = vmatprep.subr.bf16.mxu0 0
        %1743 = vmatpush2.bf16.msra.mxu0 0
        %1744 = vmatprep.subr.bf16.mxu0 0
        %1745 = vmatpush2.bf16.msra.mxu0 0
        %1746 = vmatprep.subr.bf16.mxu0 0
        %1747 = vmatpush2.bf16.msra.mxu0 0
        %1748 = vmatprep.subr.bf16.mxu0 0
        %1749 = vmatpush2.bf16.msra.mxu0 0
        %1750 = vmatprep.subr.bf16.mxu0 0
        %1751 = vmatpush2.bf16.msra.mxu0 0
        %1752 = vmatprep.subr.bf16.mxu0 0
        %1753 = vmatpush2.bf16.msra.mxu0 0
        %1754 = vmatprep.subr.bf16.mxu0 0
        %1755 = vmatpush2.bf16.msra.mxu0 0
        %1756 = vmatprep.mubr.bf16.mxu0 0
        %1757 = vmatmul.mubr.bf16.gmra.mxu0 %v1719
        %v1758 = vpop.f32.mrf.mxu0
        %v1759 = vadd.f32 0.0, %v1758
        %v1760 = vpop.f32.mrf.mxu0
        %v1761 = vpop.f32.mrf.mxu0
        %v1762 = vpop.f32.mrf.mxu0
        %1763 = vdwg.mxu0
        %v1764 = vpack.c.bf16 %v1759, %v1759
        %s1765 = scalar_lea.vmem %s380, 240
        %v1766 = vld [vmem:[%s1765] sm:$0xf]
        %v1767 = vld [vmem:[%s1765 + $0x4] sm:$0xf]
        %v1768 = vld [vmem:[%s1765 + $0x8] sm:$0xf]
        %v1769 = vld [vmem:[%s1765 + $0xc] sm:$0xf]
        %v1774 = vunpack.c.l.b16 %v1766
        %v1775 = vunpack.c.l.b16 %v1767
        %v1776 = vunpack.c.l.b16 %v1768
        %v1777 = vunpack.c.l.b16 %v1769
        %v1778 = vpack.c.b16 %v1775, %v1774
        %v1779 = vpack.c.b16 %v1777, %v1776
        %v1781 = vsel %vm602, %v1764, 0
        %v1784 = vsel %vm602, %v1778, 0
        %v1787 = vsel %vm602, %v1779, 0
        %1789 = vmatprep.subr.bf16.mxu0 0
        %1790 = vmatpush1.bf16.xpose.msra.mxu0 0
        %1791 = vmatprep.subr.bf16.mxu0 0
        %1792 = vmatpush1.bf16.xpose.msra.mxu0 0
        %1793 = vmatprep.subr.bf16.mxu0 0
        %1794 = vmatpush1.bf16.xpose.msra.mxu0 0
        %1795 = vmatprep.subr.bf16.mxu0 0
        %1796 = vmatpush1.bf16.xpose.msra.mxu0 0
        %1797 = vmatprep.subr.bf16.mxu0 0
        %1798 = vmatpush1.bf16.xpose.msra.mxu0 0
        %1799 = vmatprep.subr.bf16.mxu0 0
        %1800 = vmatpush1.bf16.xpose.msra.mxu0 0
        %1801 = vmatprep.subr.bf16.mxu0 0
        %1802 = vmatpush1.bf16.xpose.msra.mxu0 %v1787
        %1803 = vmatprep.subr.bf16.mxu0 0
        %1804 = vmatpush1.bf16.xpose.msra.mxu0 %v1784
        %1805 = vmatprep.subr.bf16.mxu0 0
        %1806 = vmatpush2.bf16.xpose.msra.mxu0 0
        %1807 = vmatprep.subr.bf16.mxu0 0
        %1808 = vmatpush2.bf16.xpose.msra.mxu0 0
        %1809 = vmatprep.subr.bf16.mxu0 0
        %1810 = vmatpush2.bf16.xpose.msra.mxu0 0
        %1811 = vmatprep.subr.bf16.mxu0 0
        %1812 = vmatpush2.bf16.xpose.msra.mxu0 0
        %1813 = vmatprep.subr.bf16.mxu0 0
        %1814 = vmatpush2.bf16.xpose.msra.mxu0 0
        %1815 = vmatprep.subr.bf16.mxu0 0
        %1816 = vmatpush2.bf16.xpose.msra.mxu0 0
        %1817 = vmatprep.subr.bf16.mxu0 0
        %1818 = vmatpush2.bf16.xpose.msra.mxu0 0
        %1819 = vmatprep.subr.bf16.mxu0 0
        %1820 = vmatpush2.bf16.xpose.msra.mxu0 0
        %1821 = vmatprep.mubr.bf16.mxu0 0
        %1822 = vmatmul.mubr.bf16.gmra.mxu0 %v1781
        %v1823 = vpop.f32.mrf.mxu0
        %v1824 = vadd.f32 0.0, %v1823
        %v1825 = vpop.f32.mrf.mxu0
        %v1826 = vpop.f32.mrf.mxu0
        %v1827 = vpop.f32.mrf.mxu0
        %1828 = vdwg.mxu0
        %v1833 = vunpack.c.l.b16 %v1469
        %v1834 = vunpack.c.l.b16 %v1470
        %v1835 = vunpack.c.l.b16 %v1471
        %v1836 = vunpack.c.l.b16 %v1472
        %v1837 = vpack.c.b16 %v1834, %v1833
        %v1838 = vpack.c.b16 %v1836, %v1835
        %v1840 = vsel %vm602, %v1467, 0
        %v1843 = vsel %vm602, %v1837, 0
        %v1846 = vsel %vm602, %v1838, 0
        %1848 = vmatprep.subr.bf16.mxu0 0
        %1849 = vmatpush1.bf16.xpose.msra.mxu0 0
        %1850 = vmatprep.subr.bf16.mxu0 0
        %1851 = vmatpush1.bf16.xpose.msra.mxu0 0
        %1852 = vmatprep.subr.bf16.mxu0 0
        %1853 = vmatpush1.bf16.xpose.msra.mxu0 0
        %1854 = vmatprep.subr.bf16.mxu0 0
        %1855 = vmatpush1.bf16.xpose.msra.mxu0 0
        %1856 = vmatprep.subr.bf16.mxu0 0
        %1857 = vmatpush1.bf16.xpose.msra.mxu0 0
        %1858 = vmatprep.subr.bf16.mxu0 0
        %1859 = vmatpush1.bf16.xpose.msra.mxu0 0
        %1860 = vmatprep.subr.bf16.mxu0 0
        %1861 = vmatpush1.bf16.xpose.msra.mxu0 %v1846
        %1862 = vmatprep.subr.bf16.mxu0 0
        %1863 = vmatpush1.bf16.xpose.msra.mxu0 %v1843
        %1864 = vmatprep.subr.bf16.mxu0 0
        %1865 = vmatpush2.bf16.xpose.msra.mxu0 0
        %1866 = vmatprep.subr.bf16.mxu0 0
        %1867 = vmatpush2.bf16.xpose.msra.mxu0 0
        %1868 = vmatprep.subr.bf16.mxu0 0
        %1869 = vmatpush2.bf16.xpose.msra.mxu0 0
        %1870 = vmatprep.subr.bf16.mxu0 0
        %1871 = vmatpush2.bf16.xpose.msra.mxu0 0
        %1872 = vmatprep.subr.bf16.mxu0 0
        %1873 = vmatpush2.bf16.xpose.msra.mxu0 0
        %1874 = vmatprep.subr.bf16.mxu0 0
        %1875 = vmatpush2.bf16.xpose.msra.mxu0 0
        %1876 = vmatprep.subr.bf16.mxu0 0
        %1877 = vmatpush2.bf16.xpose.msra.mxu0 0
        %1878 = vmatprep.subr.bf16.mxu0 0
        %1879 = vmatpush2.bf16.xpose.msra.mxu0 0
        %1880 = vmatprep.mubr.bf16.mxu0 0
        %1881 = vmatmul.mubr.bf16.gmra.mxu0 %v1840
        %v1882 = vpop.f32.mrf.mxu0
        %v1883 = vadd.f32 %v1824, %v1882
        %v1884 = vpop.f32.mrf.mxu0
        %v1885 = vpop.f32.mrf.mxu0
        %v1886 = vpop.f32.mrf.mxu0
        %1887 = vdwg.mxu0
        %v1888 = vld [vmem:[%s399 + $0x9] sm:$0x1]
        %v1889 = vlaneseq
        %v1890 = vshrl.u32 %v1889, 7
        %v1891 = vsub.s32 0, %v1890
        %v1892 = vrot.slane %v1888, %v1891
        %v1893 = vadd.f32 %v1883, %v1892
        %v1894 = vadd.f32 %v1164, %v1893
        %v1895 = vsel %vm434, %v1894, 0.0
        %1896 = vadd.xlane.f32.xlu0 %v1895
        %v1897 = vpop.xlane.xlu0 %1896
        %v1898 = vmul.f32 %v1897, %v1142
        %v1899 = vsub.f32 %v1894, %v1898
        %v1900 = vmul.f32 %v1899, %v1899
        %v1901 = vsel %vm434, %v1900, 0.0
        %1902 = vadd.xlane.f32.xlu0 %v1901
        %v1903 = vpop.xlane.xlu0 %1902
        %v1904 = vmul.f32 %v1903, %v1142
        %v1905 = vadd.f32 %v1904, 1e-05
        %v1906 = vrsqrt.pop %v1905
        %v1907 = vmul.f32 %v1899, %v1906
        %v1908 = vld [vmem:[%s399 + $0xa] sm:$0x1]
        %v1909 = vlaneseq
        %v1910 = vshrl.u32 %v1909, 7
        %v1911 = vsub.s32 0, %v1910
        %v1912 = vrot.slane %v1908, %v1911
        %v1913 = vmul.f32 %v1907, %v1912
        %v1914 = vld [vmem:[%s399 + $0xb] sm:$0x1]
        %v1915 = vlaneseq
        %v1916 = vshrl.u32 %v1915, 7
        %v1917 = vsub.s32 0, %v1916
        %v1918 = vrot.slane %v1914, %v1917
        %v1919 = vadd.f32 %v1913, %v1918
        %v1920 = vpack.c.bf16 %v1919, %v1919
        %v1921 = vld [vmem:[%s385] sm:$0xff]
        %v1922 = vld [vmem:[%s385 + $0x8] sm:$0xff]
        %v1923 = vld [vmem:[%s385 + $0x10] sm:$0xff]
        %v1924 = vld [vmem:[%s385 + $0x18] sm:$0xff]
        %v1925 = vld [vmem:[%s385 + $0x20] sm:$0xff]
        %v1926 = vld [vmem:[%s385 + $0x28] sm:$0xff]
        %v1927 = vld [vmem:[%s385 + $0x30] sm:$0xff]
        %v1928 = vld [vmem:[%s385 + $0x38] sm:$0xff]
        %v1929 = vld [vmem:[%s385 + $0x40] sm:$0xff]
        %v1930 = vld [vmem:[%s385 + $0x48] sm:$0xff]
        %v1931 = vld [vmem:[%s385 + $0x50] sm:$0xff]
        %v1932 = vld [vmem:[%s385 + $0x58] sm:$0xff]
        %v1933 = vld [vmem:[%s385 + $0x60] sm:$0xff]
        %v1934 = vld [vmem:[%s385 + $0x68] sm:$0xff]
        %v1935 = vld [vmem:[%s385 + $0x70] sm:$0xff]
        %v1936 = vld [vmem:[%s385 + $0x78] sm:$0xff]
        %v1937 = vld [vmem:[%s385 + $0x80] sm:$0xff]
        %v1938 = vld [vmem:[%s385 + $0x88] sm:$0xff]
        %v1939 = vld [vmem:[%s385 + $0x90] sm:$0xff]
        %v1940 = vld [vmem:[%s385 + $0x98] sm:$0xff]
        %v1941 = vld [vmem:[%s385 + $0xa0] sm:$0xff]
        %v1942 = vld [vmem:[%s385 + $0xa8] sm:$0xff]
        %v1943 = vld [vmem:[%s385 + $0xb0] sm:$0xff]
        %v1944 = vld [vmem:[%s385 + $0xb8] sm:$0xff]
        %v1945 = vld [vmem:[%s385 + $0xc0] sm:$0xff]
        %v1946 = vld [vmem:[%s385 + $0xc8] sm:$0xff]
        %v1947 = vld [vmem:[%s385 + $0xd0] sm:$0xff]
        %v1948 = vld [vmem:[%s385 + $0xd8] sm:$0xff]
        %v1949 = vld [vmem:[%s385 + $0xe0] sm:$0xff]
        %v1950 = vld [vmem:[%s385 + $0xe8] sm:$0xff]
        %v1951 = vld [vmem:[%s385 + $0xf0] sm:$0xff]
        %v1952 = vld [vmem:[%s385 + $0xf8] sm:$0xff]
        %v1953 = vld [vmem:[%s394] sm:$0xff]
        %v1954 = vld [vmem:[%s394 + $0x8] sm:$0xff]
        %v1957 = vlaneseq
        %v1958 = vshrl.u32 %v1957, 7
        %v1959 = vsub.s32 0, %v1958
        %v1960 = vrot.slane %v1953, %v1959
        %v1961 = vlaneseq
        %v1962 = vshrl.u32 %v1961, 7
        %v1963 = vsub.s32 1, %v1962
        %v1964 = vrot.slane %v1953, %v1963
        %v1965 = vlaneseq
        %v1966 = vshrl.u32 %v1965, 7
        %v1967 = vsub.s32 2, %v1966
        %v1968 = vrot.slane %v1953, %v1967
        %v1969 = vlaneseq
        %v1970 = vshrl.u32 %v1969, 7
        %v1971 = vsub.s32 3, %v1970
        %v1972 = vrot.slane %v1953, %v1971
        %v1973 = vlaneseq
        %v1974 = vshrl.u32 %v1973, 7
        %v1975 = vsub.s32 4, %v1974
        %v1976 = vrot.slane %v1953, %v1975
        %v1977 = vlaneseq
        %v1978 = vshrl.u32 %v1977, 7
        %v1979 = vsub.s32 5, %v1978
        %v1980 = vrot.slane %v1953, %v1979
        %v1981 = vlaneseq
        %v1982 = vshrl.u32 %v1981, 7
        %v1983 = vsub.s32 6, %v1982
        %v1984 = vrot.slane %v1953, %v1983
        %v1985 = vlaneseq
        %v1986 = vshrl.u32 %v1985, 7
        %v1987 = vsub.s32 7, %v1986
        %v1988 = vrot.slane %v1953, %v1987
        %v1989 = vlaneseq
        %v1990 = vshrl.u32 %v1989, 7
        %v1991 = vsub.s32 0, %v1990
        %v1992 = vrot.slane %v1954, %v1991
        %v1993 = vlaneseq
        %v1994 = vshrl.u32 %v1993, 7
        %v1995 = vsub.s32 1, %v1994
        %v1996 = vrot.slane %v1954, %v1995
        %v1997 = vlaneseq
        %v1998 = vshrl.u32 %v1997, 7
        %v1999 = vsub.s32 2, %v1998
        %v2000 = vrot.slane %v1954, %v1999
        %v2001 = vlaneseq
        %v2002 = vshrl.u32 %v2001, 7
        %v2003 = vsub.s32 3, %v2002
        %v2004 = vrot.slane %v1954, %v2003
        %v2005 = vlaneseq
        %v2006 = vshrl.u32 %v2005, 7
        %v2007 = vsub.s32 4, %v2006
        %v2008 = vrot.slane %v1954, %v2007
        %v2009 = vlaneseq
        %v2010 = vshrl.u32 %v2009, 7
        %v2011 = vsub.s32 5, %v2010
        %v2012 = vrot.slane %v1954, %v2011
        %v2013 = vlaneseq
        %v2014 = vshrl.u32 %v2013, 7
        %v2015 = vsub.s32 6, %v2014
        %v2016 = vrot.slane %v1954, %v2015
        %v2017 = vlaneseq
        %v2018 = vshrl.u32 %v2017, 7
        %v2019 = vsub.s32 7, %v2018
        %v2020 = vrot.slane %v1954, %v2019
        %v2069 = vunpack.c.l.b16 %v1921
        %v2070 = vunpack.c.h.b16 %v1921
        %v2071 = vunpack.c.l.b16 %v1922
        %v2072 = vunpack.c.h.b16 %v1922
        %v2073 = vunpack.c.l.b16 %v1923
        %v2074 = vunpack.c.h.b16 %v1923
        %v2075 = vunpack.c.l.b16 %v1924
        %v2076 = vunpack.c.h.b16 %v1924
        %v2077 = vunpack.c.l.b16 %v1925
        %v2078 = vunpack.c.h.b16 %v1925
        %v2079 = vunpack.c.l.b16 %v1926
        %v2080 = vunpack.c.h.b16 %v1926
        %v2081 = vunpack.c.l.b16 %v1927
        %v2082 = vunpack.c.h.b16 %v1927
        %v2083 = vunpack.c.l.b16 %v1928
        %v2084 = vunpack.c.h.b16 %v1928
        %v2085 = vunpack.c.l.b16 %v1929
        %v2086 = vunpack.c.h.b16 %v1929
        %v2087 = vunpack.c.l.b16 %v1930
        %v2088 = vunpack.c.h.b16 %v1930
        %v2089 = vunpack.c.l.b16 %v1931
        %v2090 = vunpack.c.h.b16 %v1931
        %v2091 = vunpack.c.l.b16 %v1932
        %v2092 = vunpack.c.h.b16 %v1932
        %v2093 = vunpack.c.l.b16 %v1933
        %v2094 = vunpack.c.h.b16 %v1933
        %v2095 = vunpack.c.l.b16 %v1934
        %v2096 = vunpack.c.h.b16 %v1934
        %v2097 = vunpack.c.l.b16 %v1935
        %v2098 = vunpack.c.h.b16 %v1935
        %v2099 = vunpack.c.l.b16 %v1936
        %v2100 = vunpack.c.h.b16 %v1936
        %v2101 = vunpack.c.l.b16 %v1937
        %v2102 = vunpack.c.h.b16 %v1937
        %v2103 = vunpack.c.l.b16 %v1938
        %v2104 = vunpack.c.h.b16 %v1938
        %v2105 = vunpack.c.l.b16 %v1939
        %v2106 = vunpack.c.h.b16 %v1939
        %v2107 = vunpack.c.l.b16 %v1940
        %v2108 = vunpack.c.h.b16 %v1940
        %v2109 = vunpack.c.l.b16 %v1941
        %v2110 = vunpack.c.h.b16 %v1941
        %v2111 = vunpack.c.l.b16 %v1942
        %v2112 = vunpack.c.h.b16 %v1942
        %v2113 = vunpack.c.l.b16 %v1943
        %v2114 = vunpack.c.h.b16 %v1943
        %v2115 = vunpack.c.l.b16 %v1944
        %v2116 = vunpack.c.h.b16 %v1944
        %v2117 = vunpack.c.l.b16 %v1945
        %v2118 = vunpack.c.h.b16 %v1945
        %v2119 = vunpack.c.l.b16 %v1946
        %v2120 = vunpack.c.h.b16 %v1946
        %v2121 = vunpack.c.l.b16 %v1947
        %v2122 = vunpack.c.h.b16 %v1947
        %v2123 = vunpack.c.l.b16 %v1948
        %v2124 = vunpack.c.h.b16 %v1948
        %v2125 = vunpack.c.l.b16 %v1949
        %v2126 = vunpack.c.h.b16 %v1949
        %v2127 = vunpack.c.l.b16 %v1950
        %v2128 = vunpack.c.h.b16 %v1950
        %v2129 = vunpack.c.l.b16 %v1951
        %v2130 = vunpack.c.h.b16 %v1951
        %v2131 = vunpack.c.l.b16 %v1952
        %v2132 = vunpack.c.h.b16 %v1952
        %v2133 = vpack.c.b16 %v2085, %v2069
        %v2134 = vpack.c.b16 %v2086, %v2070
        %v2135 = vpack.c.b16 %v2087, %v2071
        %v2136 = vpack.c.b16 %v2088, %v2072
        %v2137 = vpack.c.b16 %v2089, %v2073
        %v2138 = vpack.c.b16 %v2090, %v2074
        %v2139 = vpack.c.b16 %v2091, %v2075
        %v2140 = vpack.c.b16 %v2092, %v2076
        %v2141 = vpack.c.b16 %v2093, %v2077
        %v2142 = vpack.c.b16 %v2094, %v2078
        %v2143 = vpack.c.b16 %v2095, %v2079
        %v2144 = vpack.c.b16 %v2096, %v2080
        %v2145 = vpack.c.b16 %v2097, %v2081
        %v2146 = vpack.c.b16 %v2098, %v2082
        %v2147 = vpack.c.b16 %v2099, %v2083
        %v2148 = vpack.c.b16 %v2100, %v2084
        %v2149 = vpack.c.b16 %v2117, %v2101
        %v2150 = vpack.c.b16 %v2118, %v2102
        %v2151 = vpack.c.b16 %v2119, %v2103
        %v2152 = vpack.c.b16 %v2120, %v2104
        %v2153 = vpack.c.b16 %v2121, %v2105
        %v2154 = vpack.c.b16 %v2122, %v2106
        %v2155 = vpack.c.b16 %v2123, %v2107
        %v2156 = vpack.c.b16 %v2124, %v2108
        %v2157 = vpack.c.b16 %v2125, %v2109
        %v2158 = vpack.c.b16 %v2126, %v2110
        %v2159 = vpack.c.b16 %v2127, %v2111
        %v2160 = vpack.c.b16 %v2128, %v2112
        %v2161 = vpack.c.b16 %v2129, %v2113
        %v2162 = vpack.c.b16 %v2130, %v2114
        %v2163 = vpack.c.b16 %v2131, %v2115
        %v2164 = vpack.c.b16 %v2132, %v2116
        %v2198 = vsel %vm434, %v1920, 0
        %2200 = vmatprep.subr.bf16.mxu0 0
        %2201 = vmatpush1.bf16.msra.mxu0 0
        %2202 = vmatprep.subr.bf16.mxu0 0
        %2203 = vmatpush1.bf16.msra.mxu0 0
        %2204 = vmatprep.subr.bf16.mxu0 0
        %2205 = vmatpush1.bf16.msra.mxu0 0
        %2206 = vmatprep.subr.bf16.mxu0 0
        %2207 = vmatpush1.bf16.msra.mxu0 0
        %2208 = vmatprep.subr.bf16.mxu0 0
        %2209 = vmatpush1.bf16.msra.mxu0 0
        %2210 = vmatprep.subr.bf16.mxu0 0
        %2211 = vmatpush1.bf16.msra.mxu0 0
        %2212 = vmatprep.subr.bf16.mxu0 %v2150
        %2213 = vmatpush1.bf16.msra.mxu0 %v2149
        %2214 = vmatprep.subr.bf16.mxu0 %v2134
        %2215 = vmatpush1.bf16.msra.mxu0 %v2133
        %2216 = vmatprep.subr.bf16.mxu0 0
        %2217 = vmatpush2.bf16.msra.mxu0 0
        %2218 = vmatprep.subr.bf16.mxu0 0
        %2219 = vmatpush2.bf16.msra.mxu0 0
        %2220 = vmatprep.subr.bf16.mxu0 0
        %2221 = vmatpush2.bf16.msra.mxu0 0
        %2222 = vmatprep.subr.bf16.mxu0 0
        %2223 = vmatpush2.bf16.msra.mxu0 0
        %2224 = vmatprep.subr.bf16.mxu0 0
        %2225 = vmatpush2.bf16.msra.mxu0 0
        %2226 = vmatprep.subr.bf16.mxu0 0
        %2227 = vmatpush2.bf16.msra.mxu0 0
        %2228 = vmatprep.subr.bf16.mxu0 0
        %2229 = vmatpush2.bf16.msra.mxu0 0
        %2230 = vmatprep.subr.bf16.mxu0 0
        %2231 = vmatpush2.bf16.msra.mxu0 0
        %2232 = vmatprep.mubr.bf16.mxu0 0
        %2233 = vmatmul.mubr.bf16.gmra.mxu0 %v2198
        %v2234 = vpop.f32.mrf.mxu0
        %v2235 = vadd.f32 %v1960, %v2234
        %v2236 = vpop.f32.mrf.mxu0
        %v2237 = vadd.f32 %v1964, %v2236
        %v2238 = vpop.f32.mrf.mxu0
        %v2239 = vpop.f32.mrf.mxu0
        %2240 = vdwg.mxu0
        %2241 = vmatprep.subr.bf16.mxu0 0
        %2242 = vmatpush1.bf16.msra.mxu0 0
        %2243 = vmatprep.subr.bf16.mxu0 0
        %2244 = vmatpush1.bf16.msra.mxu0 0
        %2245 = vmatprep.subr.bf16.mxu0 0
        %2246 = vmatpush1.bf16.msra.mxu0 0
        %2247 = vmatprep.subr.bf16.mxu0 0
        %2248 = vmatpush1.bf16.msra.mxu0 0
        %2249 = vmatprep.subr.bf16.mxu0 0
        %2250 = vmatpush1.bf16.msra.mxu0 0
        %2251 = vmatprep.subr.bf16.mxu0 0
        %2252 = vmatpush1.bf16.msra.mxu0 0
        %2253 = vmatprep.subr.bf16.mxu0 %v2152
        %2254 = vmatpush1.bf16.msra.mxu0 %v2151
        %2255 = vmatprep.subr.bf16.mxu0 %v2136
        %2256 = vmatpush1.bf16.msra.mxu0 %v2135
        %2257 = vmatprep.subr.bf16.mxu0 0
        %2258 = vmatpush2.bf16.msra.mxu0 0
        %2259 = vmatprep.subr.bf16.mxu0 0
        %2260 = vmatpush2.bf16.msra.mxu0 0
        %2261 = vmatprep.subr.bf16.mxu0 0
        %2262 = vmatpush2.bf16.msra.mxu0 0
        %2263 = vmatprep.subr.bf16.mxu0 0
        %2264 = vmatpush2.bf16.msra.mxu0 0
        %2265 = vmatprep.subr.bf16.mxu0 0
        %2266 = vmatpush2.bf16.msra.mxu0 0
        %2267 = vmatprep.subr.bf16.mxu0 0
        %2268 = vmatpush2.bf16.msra.mxu0 0
        %2269 = vmatprep.subr.bf16.mxu0 0
        %2270 = vmatpush2.bf16.msra.mxu0 0
        %2271 = vmatprep.subr.bf16.mxu0 0
        %2272 = vmatpush2.bf16.msra.mxu0 0
        %2273 = vmatprep.mubr.bf16.mxu0 0
        %2274 = vmatmul.mubr.bf16.gmra.mxu0 %v2198
        %v2275 = vpop.f32.mrf.mxu0
        %v2276 = vadd.f32 %v1968, %v2275
        %v2277 = vpop.f32.mrf.mxu0
        %v2278 = vadd.f32 %v1972, %v2277
        %v2279 = vpop.f32.mrf.mxu0
        %v2280 = vpop.f32.mrf.mxu0
        %2281 = vdwg.mxu0
        %2282 = vmatprep.subr.bf16.mxu0 0
        %2283 = vmatpush1.bf16.msra.mxu0 0
        %2284 = vmatprep.subr.bf16.mxu0 0
        %2285 = vmatpush1.bf16.msra.mxu0 0
        %2286 = vmatprep.subr.bf16.mxu0 0
        %2287 = vmatpush1.bf16.msra.mxu0 0
        %2288 = vmatprep.subr.bf16.mxu0 0
        %2289 = vmatpush1.bf16.msra.mxu0 0
        %2290 = vmatprep.subr.bf16.mxu0 0
        %2291 = vmatpush1.bf16.msra.mxu0 0
        %2292 = vmatprep.subr.bf16.mxu0 0
        %2293 = vmatpush1.bf16.msra.mxu0 0
        %2294 = vmatprep.subr.bf16.mxu0 %v2154
        %2295 = vmatpush1.bf16.msra.mxu0 %v2153
        %2296 = vmatprep.subr.bf16.mxu0 %v2138
        %2297 = vmatpush1.bf16.msra.mxu0 %v2137
        %2298 = vmatprep.subr.bf16.mxu0 0
        %2299 = vmatpush2.bf16.msra.mxu0 0
        %2300 = vmatprep.subr.bf16.mxu0 0
        %2301 = vmatpush2.bf16.msra.mxu0 0
        %2302 = vmatprep.subr.bf16.mxu0 0
        %2303 = vmatpush2.bf16.msra.mxu0 0
        %2304 = vmatprep.subr.bf16.mxu0 0
        %2305 = vmatpush2.bf16.msra.mxu0 0
        %2306 = vmatprep.subr.bf16.mxu0 0
        %2307 = vmatpush2.bf16.msra.mxu0 0
        %2308 = vmatprep.subr.bf16.mxu0 0
        %2309 = vmatpush2.bf16.msra.mxu0 0
        %2310 = vmatprep.subr.bf16.mxu0 0
        %2311 = vmatpush2.bf16.msra.mxu0 0
        %2312 = vmatprep.subr.bf16.mxu0 0
        %2313 = vmatpush2.bf16.msra.mxu0 0
        %2314 = vmatprep.mubr.bf16.mxu0 0
        %2315 = vmatmul.mubr.bf16.gmra.mxu0 %v2198
        %v2316 = vpop.f32.mrf.mxu0
        %v2317 = vadd.f32 %v1976, %v2316
        %v2318 = vpop.f32.mrf.mxu0
        %v2319 = vadd.f32 %v1980, %v2318
        %v2320 = vpop.f32.mrf.mxu0
        %v2321 = vpop.f32.mrf.mxu0
        %2322 = vdwg.mxu0
        %2323 = vmatprep.subr.bf16.mxu0 0
        %2324 = vmatpush1.bf16.msra.mxu0 0
        %2325 = vmatprep.subr.bf16.mxu0 0
        %2326 = vmatpush1.bf16.msra.mxu0 0
        %2327 = vmatprep.subr.bf16.mxu0 0
        %2328 = vmatpush1.bf16.msra.mxu0 0
        %2329 = vmatprep.subr.bf16.mxu0 0
        %2330 = vmatpush1.bf16.msra.mxu0 0
        %2331 = vmatprep.subr.bf16.mxu0 0
        %2332 = vmatpush1.bf16.msra.mxu0 0
        %2333 = vmatprep.subr.bf16.mxu0 0
        %2334 = vmatpush1.bf16.msra.mxu0 0
        %2335 = vmatprep.subr.bf16.mxu0 %v2156
        %2336 = vmatpush1.bf16.msra.mxu0 %v2155
        %2337 = vmatprep.subr.bf16.mxu0 %v2140
        %2338 = vmatpush1.bf16.msra.mxu0 %v2139
        %2339 = vmatprep.subr.bf16.mxu0 0
        %2340 = vmatpush2.bf16.msra.mxu0 0
        %2341 = vmatprep.subr.bf16.mxu0 0
        %2342 = vmatpush2.bf16.msra.mxu0 0
        %2343 = vmatprep.subr.bf16.mxu0 0
        %2344 = vmatpush2.bf16.msra.mxu0 0
        %2345 = vmatprep.subr.bf16.mxu0 0
        %2346 = vmatpush2.bf16.msra.mxu0 0
        %2347 = vmatprep.subr.bf16.mxu0 0
        %2348 = vmatpush2.bf16.msra.mxu0 0
        %2349 = vmatprep.subr.bf16.mxu0 0
        %2350 = vmatpush2.bf16.msra.mxu0 0
        %2351 = vmatprep.subr.bf16.mxu0 0
        %2352 = vmatpush2.bf16.msra.mxu0 0
        %2353 = vmatprep.subr.bf16.mxu0 0
        %2354 = vmatpush2.bf16.msra.mxu0 0
        %2355 = vmatprep.mubr.bf16.mxu0 0
        %2356 = vmatmul.mubr.bf16.gmra.mxu0 %v2198
        %v2357 = vpop.f32.mrf.mxu0
        %v2358 = vadd.f32 %v1984, %v2357
        %v2359 = vpop.f32.mrf.mxu0
        %v2360 = vadd.f32 %v1988, %v2359
        %v2361 = vpop.f32.mrf.mxu0
        %v2362 = vpop.f32.mrf.mxu0
        %2363 = vdwg.mxu0
        %2364 = vmatprep.subr.bf16.mxu0 0
        %2365 = vmatpush1.bf16.msra.mxu0 0
        %2366 = vmatprep.subr.bf16.mxu0 0
        %2367 = vmatpush1.bf16.msra.mxu0 0
        %2368 = vmatprep.subr.bf16.mxu0 0
        %2369 = vmatpush1.bf16.msra.mxu0 0
        %2370 = vmatprep.subr.bf16.mxu0 0
        %2371 = vmatpush1.bf16.msra.mxu0 0
        %2372 = vmatprep.subr.bf16.mxu0 0
        %2373 = vmatpush1.bf16.msra.mxu0 0
        %2374 = vmatprep.subr.bf16.mxu0 0
        %2375 = vmatpush1.bf16.msra.mxu0 0
        %2376 = vmatprep.subr.bf16.mxu0 %v2158
        %2377 = vmatpush1.bf16.msra.mxu0 %v2157
        %2378 = vmatprep.subr.bf16.mxu0 %v2142
        %2379 = vmatpush1.bf16.msra.mxu0 %v2141
        %2380 = vmatprep.subr.bf16.mxu0 0
        %2381 = vmatpush2.bf16.msra.mxu0 0
        %2382 = vmatprep.subr.bf16.mxu0 0
        %2383 = vmatpush2.bf16.msra.mxu0 0
        %2384 = vmatprep.subr.bf16.mxu0 0
        %2385 = vmatpush2.bf16.msra.mxu0 0
        %2386 = vmatprep.subr.bf16.mxu0 0
        %2387 = vmatpush2.bf16.msra.mxu0 0
        %2388 = vmatprep.subr.bf16.mxu0 0
        %2389 = vmatpush2.bf16.msra.mxu0 0
        %2390 = vmatprep.subr.bf16.mxu0 0
        %2391 = vmatpush2.bf16.msra.mxu0 0
        %2392 = vmatprep.subr.bf16.mxu0 0
        %2393 = vmatpush2.bf16.msra.mxu0 0
        %2394 = vmatprep.subr.bf16.mxu0 0
        %2395 = vmatpush2.bf16.msra.mxu0 0
        %2396 = vmatprep.mubr.bf16.mxu0 0
        %2397 = vmatmul.mubr.bf16.gmra.mxu0 %v2198
        %v2398 = vpop.f32.mrf.mxu0
        %v2399 = vadd.f32 %v1992, %v2398
        %v2400 = vpop.f32.mrf.mxu0
        %v2401 = vadd.f32 %v1996, %v2400
        %v2402 = vpop.f32.mrf.mxu0
        %v2403 = vpop.f32.mrf.mxu0
        %2404 = vdwg.mxu0
        %2405 = vmatprep.subr.bf16.mxu0 0
        %2406 = vmatpush1.bf16.msra.mxu0 0
        %2407 = vmatprep.subr.bf16.mxu0 0
        %2408 = vmatpush1.bf16.msra.mxu0 0
        %2409 = vmatprep.subr.bf16.mxu0 0
        %2410 = vmatpush1.bf16.msra.mxu0 0
        %2411 = vmatprep.subr.bf16.mxu0 0
        %2412 = vmatpush1.bf16.msra.mxu0 0
        %2413 = vmatprep.subr.bf16.mxu0 0
        %2414 = vmatpush1.bf16.msra.mxu0 0
        %2415 = vmatprep.subr.bf16.mxu0 0
        %2416 = vmatpush1.bf16.msra.mxu0 0
        %2417 = vmatprep.subr.bf16.mxu0 %v2160
        %2418 = vmatpush1.bf16.msra.mxu0 %v2159
        %2419 = vmatprep.subr.bf16.mxu0 %v2144
        %2420 = vmatpush1.bf16.msra.mxu0 %v2143
        %2421 = vmatprep.subr.bf16.mxu0 0
        %2422 = vmatpush2.bf16.msra.mxu0 0
        %2423 = vmatprep.subr.bf16.mxu0 0
        %2424 = vmatpush2.bf16.msra.mxu0 0
        %2425 = vmatprep.subr.bf16.mxu0 0
        %2426 = vmatpush2.bf16.msra.mxu0 0
        %2427 = vmatprep.subr.bf16.mxu0 0
        %2428 = vmatpush2.bf16.msra.mxu0 0
        %2429 = vmatprep.subr.bf16.mxu0 0
        %2430 = vmatpush2.bf16.msra.mxu0 0
        %2431 = vmatprep.subr.bf16.mxu0 0
        %2432 = vmatpush2.bf16.msra.mxu0 0
        %2433 = vmatprep.subr.bf16.mxu0 0
        %2434 = vmatpush2.bf16.msra.mxu0 0
        %2435 = vmatprep.subr.bf16.mxu0 0
        %2436 = vmatpush2.bf16.msra.mxu0 0
        %2437 = vmatprep.mubr.bf16.mxu0 0
        %2438 = vmatmul.mubr.bf16.gmra.mxu0 %v2198
        %v2439 = vpop.f32.mrf.mxu0
        %v2440 = vadd.f32 %v2000, %v2439
        %v2441 = vpop.f32.mrf.mxu0
        %v2442 = vadd.f32 %v2004, %v2441
        %v2443 = vpop.f32.mrf.mxu0
        %v2444 = vpop.f32.mrf.mxu0
        %2445 = vdwg.mxu0
        %2446 = vmatprep.subr.bf16.mxu0 0
        %2447 = vmatpush1.bf16.msra.mxu0 0
        %2448 = vmatprep.subr.bf16.mxu0 0
        %2449 = vmatpush1.bf16.msra.mxu0 0
        %2450 = vmatprep.subr.bf16.mxu0 0
        %2451 = vmatpush1.bf16.msra.mxu0 0
        %2452 = vmatprep.subr.bf16.mxu0 0
        %2453 = vmatpush1.bf16.msra.mxu0 0
        %2454 = vmatprep.subr.bf16.mxu0 0
        %2455 = vmatpush1.bf16.msra.mxu0 0
        %2456 = vmatprep.subr.bf16.mxu0 0
        %2457 = vmatpush1.bf16.msra.mxu0 0
        %2458 = vmatprep.subr.bf16.mxu0 %v2162
        %2459 = vmatpush1.bf16.msra.mxu0 %v2161
        %2460 = vmatprep.subr.bf16.mxu0 %v2146
        %2461 = vmatpush1.bf16.msra.mxu0 %v2145
        %2462 = vmatprep.subr.bf16.mxu0 0
        %2463 = vmatpush2.bf16.msra.mxu0 0
        %2464 = vmatprep.subr.bf16.mxu0 0
        %2465 = vmatpush2.bf16.msra.mxu0 0
        %2466 = vmatprep.subr.bf16.mxu0 0
        %2467 = vmatpush2.bf16.msra.mxu0 0
        %2468 = vmatprep.subr.bf16.mxu0 0
        %2469 = vmatpush2.bf16.msra.mxu0 0
        %2470 = vmatprep.subr.bf16.mxu0 0
        %2471 = vmatpush2.bf16.msra.mxu0 0
        %2472 = vmatprep.subr.bf16.mxu0 0
        %2473 = vmatpush2.bf16.msra.mxu0 0
        %2474 = vmatprep.subr.bf16.mxu0 0
        %2475 = vmatpush2.bf16.msra.mxu0 0
        %2476 = vmatprep.subr.bf16.mxu0 0
        %2477 = vmatpush2.bf16.msra.mxu0 0
        %2478 = vmatprep.mubr.bf16.mxu0 0
        %2479 = vmatmul.mubr.bf16.gmra.mxu0 %v2198
        %v2480 = vpop.f32.mrf.mxu0
        %v2481 = vadd.f32 %v2008, %v2480
        %v2482 = vpop.f32.mrf.mxu0
        %v2483 = vadd.f32 %v2012, %v2482
        %v2484 = vpop.f32.mrf.mxu0
        %v2485 = vpop.f32.mrf.mxu0
        %2486 = vdwg.mxu0
        %2487 = vmatprep.subr.bf16.mxu0 0
        %2488 = vmatpush1.bf16.msra.mxu0 0
        %2489 = vmatprep.subr.bf16.mxu0 0
        %2490 = vmatpush1.bf16.msra.mxu0 0
        %2491 = vmatprep.subr.bf16.mxu0 0
        %2492 = vmatpush1.bf16.msra.mxu0 0
        %2493 = vmatprep.subr.bf16.mxu0 0
        %2494 = vmatpush1.bf16.msra.mxu0 0
        %2495 = vmatprep.subr.bf16.mxu0 0
        %2496 = vmatpush1.bf16.msra.mxu0 0
        %2497 = vmatprep.subr.bf16.mxu0 0
        %2498 = vmatpush1.bf16.msra.mxu0 0
        %2499 = vmatprep.subr.bf16.mxu0 %v2164
        %2500 = vmatpush1.bf16.msra.mxu0 %v2163
        %2501 = vmatprep.subr.bf16.mxu0 %v2148
        %2502 = vmatpush1.bf16.msra.mxu0 %v2147
        %2503 = vmatprep.subr.bf16.mxu0 0
        %2504 = vmatpush2.bf16.msra.mxu0 0
        %2505 = vmatprep.subr.bf16.mxu0 0
        %2506 = vmatpush2.bf16.msra.mxu0 0
        %2507 = vmatprep.subr.bf16.mxu0 0
        %2508 = vmatpush2.bf16.msra.mxu0 0
        %2509 = vmatprep.subr.bf16.mxu0 0
        %2510 = vmatpush2.bf16.msra.mxu0 0
        %2511 = vmatprep.subr.bf16.mxu0 0
        %2512 = vmatpush2.bf16.msra.mxu0 0
        %2513 = vmatprep.subr.bf16.mxu0 0
        %2514 = vmatpush2.bf16.msra.mxu0 0
        %2515 = vmatprep.subr.bf16.mxu0 0
        %2516 = vmatpush2.bf16.msra.mxu0 0
        %2517 = vmatprep.subr.bf16.mxu0 0
        %2518 = vmatpush2.bf16.msra.mxu0 0
        %2519 = vmatprep.mubr.bf16.mxu0 0
        %2520 = vmatmul.mubr.bf16.gmra.mxu0 %v2198
        %v2521 = vpop.f32.mrf.mxu0
        %v2522 = vadd.f32 %v2016, %v2521
        %v2523 = vpop.f32.mrf.mxu0
        %v2524 = vadd.f32 %v2020, %v2523
        %v2525 = vpop.f32.mrf.mxu0
        %v2526 = vpop.f32.mrf.mxu0
        %2527 = vdwg.mxu0
        %v2528 = vmax.f32 %v2235, 0.0
        %v2529 = vmax.f32 %v2237, 0.0
        %v2530 = vmax.f32 %v2276, 0.0
        %v2531 = vmax.f32 %v2278, 0.0
        %v2532 = vmax.f32 %v2317, 0.0
        %v2533 = vmax.f32 %v2319, 0.0
        %v2534 = vmax.f32 %v2358, 0.0
        %v2535 = vmax.f32 %v2360, 0.0
        %v2536 = vmax.f32 %v2399, 0.0
        %v2537 = vmax.f32 %v2401, 0.0
        %v2538 = vmax.f32 %v2440, 0.0
        %v2539 = vmax.f32 %v2442, 0.0
        %v2540 = vmax.f32 %v2481, 0.0
        %v2541 = vmax.f32 %v2483, 0.0
        %v2542 = vmax.f32 %v2522, 0.0
        %v2543 = vmax.f32 %v2524, 0.0
        %v2544 = vpack.c.bf16 %v2528, %v2528
        %v2545 = vpack.c.bf16 %v2529, %v2529
        %v2546 = vpack.c.bf16 %v2530, %v2530
        %v2547 = vpack.c.bf16 %v2531, %v2531
        %v2548 = vpack.c.bf16 %v2532, %v2532
        %v2549 = vpack.c.bf16 %v2533, %v2533
        %v2550 = vpack.c.bf16 %v2534, %v2534
        %v2551 = vpack.c.bf16 %v2535, %v2535
        %v2552 = vpack.c.bf16 %v2536, %v2536
        %v2553 = vpack.c.bf16 %v2537, %v2537
        %v2554 = vpack.c.bf16 %v2538, %v2538
        %v2555 = vpack.c.bf16 %v2539, %v2539
        %v2556 = vpack.c.bf16 %v2540, %v2540
        %v2557 = vpack.c.bf16 %v2541, %v2541
        %v2558 = vpack.c.bf16 %v2542, %v2542
        %v2559 = vpack.c.bf16 %v2543, %v2543
        %v2560 = vld [vmem:[%s390] sm:$0xf]
        %v2561 = vld [vmem:[%s390 + $0x4] sm:$0xf]
        %v2562 = vld [vmem:[%s390 + $0x8] sm:$0xf]
        %v2563 = vld [vmem:[%s390 + $0xc] sm:$0xf]
        %v2564 = vld [vmem:[%s390 + $0x10] sm:$0xf]
        %v2565 = vld [vmem:[%s390 + $0x14] sm:$0xf]
        %v2566 = vld [vmem:[%s390 + $0x18] sm:$0xf]
        %v2567 = vld [vmem:[%s390 + $0x1c] sm:$0xf]
        %v2568 = vld [vmem:[%s390 + $0x20] sm:$0xf]
        %v2569 = vld [vmem:[%s390 + $0x24] sm:$0xf]
        %v2570 = vld [vmem:[%s390 + $0x28] sm:$0xf]
        %v2571 = vld [vmem:[%s390 + $0x2c] sm:$0xf]
        %v2572 = vld [vmem:[%s390 + $0x30] sm:$0xf]
        %v2573 = vld [vmem:[%s390 + $0x34] sm:$0xf]
        %v2574 = vld [vmem:[%s390 + $0x38] sm:$0xf]
        %v2575 = vld [vmem:[%s390 + $0x3c] sm:$0xf]
        %v2576 = vld [vmem:[%s390 + $0x40] sm:$0xf]
        %v2577 = vld [vmem:[%s390 + $0x44] sm:$0xf]
        %v2578 = vld [vmem:[%s390 + $0x48] sm:$0xf]
        %v2579 = vld [vmem:[%s390 + $0x4c] sm:$0xf]
        %v2580 = vld [vmem:[%s390 + $0x50] sm:$0xf]
        %v2581 = vld [vmem:[%s390 + $0x54] sm:$0xf]
        %v2582 = vld [vmem:[%s390 + $0x58] sm:$0xf]
        %v2583 = vld [vmem:[%s390 + $0x5c] sm:$0xf]
        %v2584 = vld [vmem:[%s390 + $0x60] sm:$0xf]
        %v2585 = vld [vmem:[%s390 + $0x64] sm:$0xf]
        %v2586 = vld [vmem:[%s390 + $0x68] sm:$0xf]
        %v2587 = vld [vmem:[%s390 + $0x6c] sm:$0xf]
        %v2588 = vld [vmem:[%s390 + $0x70] sm:$0xf]
        %v2589 = vld [vmem:[%s390 + $0x74] sm:$0xf]
        %v2590 = vld [vmem:[%s390 + $0x78] sm:$0xf]
        %v2591 = vld [vmem:[%s390 + $0x7c] sm:$0xf]
        %v2592 = vld [vmem:[%s390 + $0x80] sm:$0xf]
        %v2593 = vld [vmem:[%s390 + $0x84] sm:$0xf]
        %v2594 = vld [vmem:[%s390 + $0x88] sm:$0xf]
        %v2595 = vld [vmem:[%s390 + $0x8c] sm:$0xf]
        %v2596 = vld [vmem:[%s390 + $0x90] sm:$0xf]
        %v2597 = vld [vmem:[%s390 + $0x94] sm:$0xf]
        %v2598 = vld [vmem:[%s390 + $0x98] sm:$0xf]
        %v2599 = vld [vmem:[%s390 + $0x9c] sm:$0xf]
        %v2600 = vld [vmem:[%s390 + $0xa0] sm:$0xf]
        %v2601 = vld [vmem:[%s390 + $0xa4] sm:$0xf]
        %v2602 = vld [vmem:[%s390 + $0xa8] sm:$0xf]
        %v2603 = vld [vmem:[%s390 + $0xac] sm:$0xf]
        %v2604 = vld [vmem:[%s390 + $0xb0] sm:$0xf]
        %v2605 = vld [vmem:[%s390 + $0xb4] sm:$0xf]
        %v2606 = vld [vmem:[%s390 + $0xb8] sm:$0xf]
        %v2607 = vld [vmem:[%s390 + $0xbc] sm:$0xf]
        %v2608 = vld [vmem:[%s390 + $0xc0] sm:$0xf]
        %v2609 = vld [vmem:[%s390 + $0xc4] sm:$0xf]
        %v2610 = vld [vmem:[%s390 + $0xc8] sm:$0xf]
        %v2611 = vld [vmem:[%s390 + $0xcc] sm:$0xf]
        %v2612 = vld [vmem:[%s390 + $0xd0] sm:$0xf]
        %v2613 = vld [vmem:[%s390 + $0xd4] sm:$0xf]
        %v2614 = vld [vmem:[%s390 + $0xd8] sm:$0xf]
        %v2615 = vld [vmem:[%s390 + $0xdc] sm:$0xf]
        %v2616 = vld [vmem:[%s390 + $0xe0] sm:$0xf]
        %v2617 = vld [vmem:[%s390 + $0xe4] sm:$0xf]
        %v2618 = vld [vmem:[%s390 + $0xe8] sm:$0xf]
        %v2619 = vld [vmem:[%s390 + $0xec] sm:$0xf]
        %v2620 = vld [vmem:[%s390 + $0xf0] sm:$0xf]
        %v2621 = vld [vmem:[%s390 + $0xf4] sm:$0xf]
        %v2622 = vld [vmem:[%s390 + $0xf8] sm:$0xf]
        %v2623 = vld [vmem:[%s390 + $0xfc] sm:$0xf]
        %v2624 = vld [vmem:[%s390 + $0x100] sm:$0xf]
        %v2625 = vld [vmem:[%s390 + $0x104] sm:$0xf]
        %v2626 = vld [vmem:[%s390 + $0x108] sm:$0xf]
        %v2627 = vld [vmem:[%s390 + $0x10c] sm:$0xf]
        %v2628 = vld [vmem:[%s390 + $0x110] sm:$0xf]
        %v2629 = vld [vmem:[%s390 + $0x114] sm:$0xf]
        %v2630 = vld [vmem:[%s390 + $0x118] sm:$0xf]
        %v2631 = vld [vmem:[%s390 + $0x11c] sm:$0xf]
        %v2632 = vld [vmem:[%s390 + $0x120] sm:$0xf]
        %v2633 = vld [vmem:[%s390 + $0x124] sm:$0xf]
        %v2634 = vld [vmem:[%s390 + $0x128] sm:$0xf]
        %v2635 = vld [vmem:[%s390 + $0x12c] sm:$0xf]
        %v2636 = vld [vmem:[%s390 + $0x130] sm:$0xf]
        %v2637 = vld [vmem:[%s390 + $0x134] sm:$0xf]
        %v2638 = vld [vmem:[%s390 + $0x138] sm:$0xf]
        %v2639 = vld [vmem:[%s390 + $0x13c] sm:$0xf]
        %v2640 = vld [vmem:[%s390 + $0x140] sm:$0xf]
        %v2641 = vld [vmem:[%s390 + $0x144] sm:$0xf]
        %v2642 = vld [vmem:[%s390 + $0x148] sm:$0xf]
        %v2643 = vld [vmem:[%s390 + $0x14c] sm:$0xf]
        %v2644 = vld [vmem:[%s390 + $0x150] sm:$0xf]
        %v2645 = vld [vmem:[%s390 + $0x154] sm:$0xf]
        %v2646 = vld [vmem:[%s390 + $0x158] sm:$0xf]
        %v2647 = vld [vmem:[%s390 + $0x15c] sm:$0xf]
        %v2648 = vld [vmem:[%s390 + $0x160] sm:$0xf]
        %v2649 = vld [vmem:[%s390 + $0x164] sm:$0xf]
        %v2650 = vld [vmem:[%s390 + $0x168] sm:$0xf]
        %v2651 = vld [vmem:[%s390 + $0x16c] sm:$0xf]
        %v2652 = vld [vmem:[%s390 + $0x170] sm:$0xf]
        %v2653 = vld [vmem:[%s390 + $0x174] sm:$0xf]
        %v2654 = vld [vmem:[%s390 + $0x178] sm:$0xf]
        %v2655 = vld [vmem:[%s390 + $0x17c] sm:$0xf]
        %v2656 = vld [vmem:[%s390 + $0x180] sm:$0xf]
        %v2657 = vld [vmem:[%s390 + $0x184] sm:$0xf]
        %v2658 = vld [vmem:[%s390 + $0x188] sm:$0xf]
        %v2659 = vld [vmem:[%s390 + $0x18c] sm:$0xf]
        %v2660 = vld [vmem:[%s390 + $0x190] sm:$0xf]
        %v2661 = vld [vmem:[%s390 + $0x194] sm:$0xf]
        %v2662 = vld [vmem:[%s390 + $0x198] sm:$0xf]
        %v2663 = vld [vmem:[%s390 + $0x19c] sm:$0xf]
        %v2664 = vld [vmem:[%s390 + $0x1a0] sm:$0xf]
        %v2665 = vld [vmem:[%s390 + $0x1a4] sm:$0xf]
        %v2666 = vld [vmem:[%s390 + $0x1a8] sm:$0xf]
        %v2667 = vld [vmem:[%s390 + $0x1ac] sm:$0xf]
        %v2668 = vld [vmem:[%s390 + $0x1b0] sm:$0xf]
        %v2669 = vld [vmem:[%s390 + $0x1b4] sm:$0xf]
        %v2670 = vld [vmem:[%s390 + $0x1b8] sm:$0xf]
        %v2671 = vld [vmem:[%s390 + $0x1bc] sm:$0xf]
        %v2672 = vld [vmem:[%s390 + $0x1c0] sm:$0xf]
        %v2673 = vld [vmem:[%s390 + $0x1c4] sm:$0xf]
        %v2674 = vld [vmem:[%s390 + $0x1c8] sm:$0xf]
        %v2675 = vld [vmem:[%s390 + $0x1cc] sm:$0xf]
        %v2676 = vld [vmem:[%s390 + $0x1d0] sm:$0xf]
        %v2677 = vld [vmem:[%s390 + $0x1d4] sm:$0xf]
        %v2678 = vld [vmem:[%s390 + $0x1d8] sm:$0xf]
        %v2679 = vld [vmem:[%s390 + $0x1dc] sm:$0xf]
        %v2680 = vld [vmem:[%s390 + $0x1e0] sm:$0xf]
        %v2681 = vld [vmem:[%s390 + $0x1e4] sm:$0xf]
        %v2682 = vld [vmem:[%s390 + $0x1e8] sm:$0xf]
        %v2683 = vld [vmem:[%s390 + $0x1ec] sm:$0xf]
        %v2684 = vld [vmem:[%s390 + $0x1f0] sm:$0xf]
        %v2685 = vld [vmem:[%s390 + $0x1f4] sm:$0xf]
        %v2686 = vld [vmem:[%s390 + $0x1f8] sm:$0xf]
        %v2687 = vld [vmem:[%s390 + $0x1fc] sm:$0xf]
        %v2688 = vld [vmem:[%s390 + $0x200] sm:$0xf]
        %v2689 = vld [vmem:[%s390 + $0x204] sm:$0xf]
        %v2690 = vld [vmem:[%s390 + $0x208] sm:$0xf]
        %v2691 = vld [vmem:[%s390 + $0x20c] sm:$0xf]
        %v2692 = vld [vmem:[%s390 + $0x210] sm:$0xf]
        %v2693 = vld [vmem:[%s390 + $0x214] sm:$0xf]
        %v2694 = vld [vmem:[%s390 + $0x218] sm:$0xf]
        %v2695 = vld [vmem:[%s390 + $0x21c] sm:$0xf]
        %v2696 = vld [vmem:[%s390 + $0x220] sm:$0xf]
        %v2697 = vld [vmem:[%s390 + $0x224] sm:$0xf]
        %v2698 = vld [vmem:[%s390 + $0x228] sm:$0xf]
        %v2699 = vld [vmem:[%s390 + $0x22c] sm:$0xf]
        %v2700 = vld [vmem:[%s390 + $0x230] sm:$0xf]
        %v2701 = vld [vmem:[%s390 + $0x234] sm:$0xf]
        %v2702 = vld [vmem:[%s390 + $0x238] sm:$0xf]
        %v2703 = vld [vmem:[%s390 + $0x23c] sm:$0xf]
        %v2704 = vld [vmem:[%s390 + $0x240] sm:$0xf]
        %v2705 = vld [vmem:[%s390 + $0x244] sm:$0xf]
        %v2706 = vld [vmem:[%s390 + $0x248] sm:$0xf]
        %v2707 = vld [vmem:[%s390 + $0x24c] sm:$0xf]
        %v2708 = vld [vmem:[%s390 + $0x250] sm:$0xf]
        %v2709 = vld [vmem:[%s390 + $0x254] sm:$0xf]
        %v2710 = vld [vmem:[%s390 + $0x258] sm:$0xf]
        %v2711 = vld [vmem:[%s390 + $0x25c] sm:$0xf]
        %v2712 = vld [vmem:[%s390 + $0x260] sm:$0xf]
        %v2713 = vld [vmem:[%s390 + $0x264] sm:$0xf]
        %v2714 = vld [vmem:[%s390 + $0x268] sm:$0xf]
        %v2715 = vld [vmem:[%s390 + $0x26c] sm:$0xf]
        %v2716 = vld [vmem:[%s390 + $0x270] sm:$0xf]
        %v2717 = vld [vmem:[%s390 + $0x274] sm:$0xf]
        %v2718 = vld [vmem:[%s390 + $0x278] sm:$0xf]
        %v2719 = vld [vmem:[%s390 + $0x27c] sm:$0xf]
        %v2720 = vld [vmem:[%s390 + $0x280] sm:$0xf]
        %v2721 = vld [vmem:[%s390 + $0x284] sm:$0xf]
        %v2722 = vld [vmem:[%s390 + $0x288] sm:$0xf]
        %v2723 = vld [vmem:[%s390 + $0x28c] sm:$0xf]
        %v2724 = vld [vmem:[%s390 + $0x290] sm:$0xf]
        %v2725 = vld [vmem:[%s390 + $0x294] sm:$0xf]
        %v2726 = vld [vmem:[%s390 + $0x298] sm:$0xf]
        %v2727 = vld [vmem:[%s390 + $0x29c] sm:$0xf]
        %v2728 = vld [vmem:[%s390 + $0x2a0] sm:$0xf]
        %v2729 = vld [vmem:[%s390 + $0x2a4] sm:$0xf]
        %v2730 = vld [vmem:[%s390 + $0x2a8] sm:$0xf]
        %v2731 = vld [vmem:[%s390 + $0x2ac] sm:$0xf]
        %v2732 = vld [vmem:[%s390 + $0x2b0] sm:$0xf]
        %v2733 = vld [vmem:[%s390 + $0x2b4] sm:$0xf]
        %v2734 = vld [vmem:[%s390 + $0x2b8] sm:$0xf]
        %v2735 = vld [vmem:[%s390 + $0x2bc] sm:$0xf]
        %v2736 = vld [vmem:[%s390 + $0x2c0] sm:$0xf]
        %v2737 = vld [vmem:[%s390 + $0x2c4] sm:$0xf]
        %v2738 = vld [vmem:[%s390 + $0x2c8] sm:$0xf]
        %v2739 = vld [vmem:[%s390 + $0x2cc] sm:$0xf]
        %v2740 = vld [vmem:[%s390 + $0x2d0] sm:$0xf]
        %v2741 = vld [vmem:[%s390 + $0x2d4] sm:$0xf]
        %v2742 = vld [vmem:[%s390 + $0x2d8] sm:$0xf]
        %v2743 = vld [vmem:[%s390 + $0x2dc] sm:$0xf]
        %v2744 = vld [vmem:[%s390 + $0x2e0] sm:$0xf]
        %v2745 = vld [vmem:[%s390 + $0x2e4] sm:$0xf]
        %v2746 = vld [vmem:[%s390 + $0x2e8] sm:$0xf]
        %v2747 = vld [vmem:[%s390 + $0x2ec] sm:$0xf]
        %v2748 = vld [vmem:[%s390 + $0x2f0] sm:$0xf]
        %v2749 = vld [vmem:[%s390 + $0x2f4] sm:$0xf]
        %v2750 = vld [vmem:[%s390 + $0x2f8] sm:$0xf]
        %v2751 = vld [vmem:[%s390 + $0x2fc] sm:$0xf]
        %v2752 = vld [vmem:[%s390 + $0x300] sm:$0xf]
        %v2753 = vld [vmem:[%s390 + $0x304] sm:$0xf]
        %v2754 = vld [vmem:[%s390 + $0x308] sm:$0xf]
        %v2755 = vld [vmem:[%s390 + $0x30c] sm:$0xf]
        %v2756 = vld [vmem:[%s390 + $0x310] sm:$0xf]
        %v2757 = vld [vmem:[%s390 + $0x314] sm:$0xf]
        %v2758 = vld [vmem:[%s390 + $0x318] sm:$0xf]
        %v2759 = vld [vmem:[%s390 + $0x31c] sm:$0xf]
        %v2760 = vld [vmem:[%s390 + $0x320] sm:$0xf]
        %v2761 = vld [vmem:[%s390 + $0x324] sm:$0xf]
        %v2762 = vld [vmem:[%s390 + $0x328] sm:$0xf]
        %v2763 = vld [vmem:[%s390 + $0x32c] sm:$0xf]
        %v2764 = vld [vmem:[%s390 + $0x330] sm:$0xf]
        %v2765 = vld [vmem:[%s390 + $0x334] sm:$0xf]
        %v2766 = vld [vmem:[%s390 + $0x338] sm:$0xf]
        %v2767 = vld [vmem:[%s390 + $0x33c] sm:$0xf]
        %v2768 = vld [vmem:[%s390 + $0x340] sm:$0xf]
        %v2769 = vld [vmem:[%s390 + $0x344] sm:$0xf]
        %v2770 = vld [vmem:[%s390 + $0x348] sm:$0xf]
        %v2771 = vld [vmem:[%s390 + $0x34c] sm:$0xf]
        %v2772 = vld [vmem:[%s390 + $0x350] sm:$0xf]
        %v2773 = vld [vmem:[%s390 + $0x354] sm:$0xf]
        %v2774 = vld [vmem:[%s390 + $0x358] sm:$0xf]
        %v2775 = vld [vmem:[%s390 + $0x35c] sm:$0xf]
        %v2776 = vld [vmem:[%s390 + $0x360] sm:$0xf]
        %v2777 = vld [vmem:[%s390 + $0x364] sm:$0xf]
        %v2778 = vld [vmem:[%s390 + $0x368] sm:$0xf]
        %v2779 = vld [vmem:[%s390 + $0x36c] sm:$0xf]
        %v2780 = vld [vmem:[%s390 + $0x370] sm:$0xf]
        %v2781 = vld [vmem:[%s390 + $0x374] sm:$0xf]
        %v2782 = vld [vmem:[%s390 + $0x378] sm:$0xf]
        %v2783 = vld [vmem:[%s390 + $0x37c] sm:$0xf]
        %v2784 = vld [vmem:[%s390 + $0x380] sm:$0xf]
        %v2785 = vld [vmem:[%s390 + $0x384] sm:$0xf]
        %v2786 = vld [vmem:[%s390 + $0x388] sm:$0xf]
        %v2787 = vld [vmem:[%s390 + $0x38c] sm:$0xf]
        %v2788 = vld [vmem:[%s390 + $0x390] sm:$0xf]
        %v2789 = vld [vmem:[%s390 + $0x394] sm:$0xf]
        %v2790 = vld [vmem:[%s390 + $0x398] sm:$0xf]
        %v2791 = vld [vmem:[%s390 + $0x39c] sm:$0xf]
        %v2792 = vld [vmem:[%s390 + $0x3a0] sm:$0xf]
        %v2793 = vld [vmem:[%s390 + $0x3a4] sm:$0xf]
        %v2794 = vld [vmem:[%s390 + $0x3a8] sm:$0xf]
        %v2795 = vld [vmem:[%s390 + $0x3ac] sm:$0xf]
        %v2796 = vld [vmem:[%s390 + $0x3b0] sm:$0xf]
        %v2797 = vld [vmem:[%s390 + $0x3b4] sm:$0xf]
        %v2798 = vld [vmem:[%s390 + $0x3b8] sm:$0xf]
        %v2799 = vld [vmem:[%s390 + $0x3bc] sm:$0xf]
        %v2800 = vld [vmem:[%s390 + $0x3c0] sm:$0xf]
        %v2801 = vld [vmem:[%s390 + $0x3c4] sm:$0xf]
        %v2802 = vld [vmem:[%s390 + $0x3c8] sm:$0xf]
        %v2803 = vld [vmem:[%s390 + $0x3cc] sm:$0xf]
        %v2804 = vld [vmem:[%s390 + $0x3d0] sm:$0xf]
        %v2805 = vld [vmem:[%s390 + $0x3d4] sm:$0xf]
        %v2806 = vld [vmem:[%s390 + $0x3d8] sm:$0xf]
        %v2807 = vld [vmem:[%s390 + $0x3dc] sm:$0xf]
        %v2808 = vld [vmem:[%s390 + $0x3e0] sm:$0xf]
        %v2809 = vld [vmem:[%s390 + $0x3e4] sm:$0xf]
        %v2810 = vld [vmem:[%s390 + $0x3e8] sm:$0xf]
        %v2811 = vld [vmem:[%s390 + $0x3ec] sm:$0xf]
        %v2812 = vld [vmem:[%s390 + $0x3f0] sm:$0xf]
        %v2813 = vld [vmem:[%s390 + $0x3f4] sm:$0xf]
        %v2814 = vld [vmem:[%s390 + $0x3f8] sm:$0xf]
        %v2815 = vld [vmem:[%s390 + $0x3fc] sm:$0xf]
        %v2816 = vld [vmem:[%s399 + $0xc] sm:$0x1]
        %v2817 = vlaneseq
        %v2818 = vshrl.u32 %v2817, 7
        %v2819 = vsub.s32 0, %v2818
        %v2820 = vrot.slane %v2816, %v2819
        %v3077 = vunpack.c.l.b16 %v2560
        %v3078 = vunpack.c.l.b16 %v2561
        %v3079 = vunpack.c.l.b16 %v2562
        %v3080 = vunpack.c.l.b16 %v2563
        %v3081 = vunpack.c.l.b16 %v2564
        %v3082 = vunpack.c.l.b16 %v2565
        %v3083 = vunpack.c.l.b16 %v2566
        %v3084 = vunpack.c.l.b16 %v2567
        %v3085 = vunpack.c.l.b16 %v2568
        %v3086 = vunpack.c.l.b16 %v2569
        %v3087 = vunpack.c.l.b16 %v2570
        %v3088 = vunpack.c.l.b16 %v2571
        %v3089 = vunpack.c.l.b16 %v2572
        %v3090 = vunpack.c.l.b16 %v2573
        %v3091 = vunpack.c.l.b16 %v2574
        %v3092 = vunpack.c.l.b16 %v2575
        %v3093 = vunpack.c.l.b16 %v2576
        %v3094 = vunpack.c.l.b16 %v2577
        %v3095 = vunpack.c.l.b16 %v2578
        %v3096 = vunpack.c.l.b16 %v2579
        %v3097 = vunpack.c.l.b16 %v2580
        %v3098 = vunpack.c.l.b16 %v2581
        %v3099 = vunpack.c.l.b16 %v2582
        %v3100 = vunpack.c.l.b16 %v2583
        %v3101 = vunpack.c.l.b16 %v2584
        %v3102 = vunpack.c.l.b16 %v2585
        %v3103 = vunpack.c.l.b16 %v2586
        %v3104 = vunpack.c.l.b16 %v2587
        %v3105 = vunpack.c.l.b16 %v2588
        %v3106 = vunpack.c.l.b16 %v2589
        %v3107 = vunpack.c.l.b16 %v2590
        %v3108 = vunpack.c.l.b16 %v2591
        %v3109 = vunpack.c.l.b16 %v2592
        %v3110 = vunpack.c.l.b16 %v2593
        %v3111 = vunpack.c.l.b16 %v2594
        %v3112 = vunpack.c.l.b16 %v2595
        %v3113 = vunpack.c.l.b16 %v2596
        %v3114 = vunpack.c.l.b16 %v2597
        %v3115 = vunpack.c.l.b16 %v2598
        %v3116 = vunpack.c.l.b16 %v2599
        %v3117 = vunpack.c.l.b16 %v2600
        %v3118 = vunpack.c.l.b16 %v2601
        %v3119 = vunpack.c.l.b16 %v2602
        %v3120 = vunpack.c.l.b16 %v2603
        %v3121 = vunpack.c.l.b16 %v2604
        %v3122 = vunpack.c.l.b16 %v2605
        %v3123 = vunpack.c.l.b16 %v2606
        %v3124 = vunpack.c.l.b16 %v2607
        %v3125 = vunpack.c.l.b16 %v2608
        %v3126 = vunpack.c.l.b16 %v2609
        %v3127 = vunpack.c.l.b16 %v2610
        %v3128 = vunpack.c.l.b16 %v2611
        %v3129 = vunpack.c.l.b16 %v2612
        %v3130 = vunpack.c.l.b16 %v2613
        %v3131 = vunpack.c.l.b16 %v2614
        %v3132 = vunpack.c.l.b16 %v2615
        %v3133 = vunpack.c.l.b16 %v2616
        %v3134 = vunpack.c.l.b16 %v2617
        %v3135 = vunpack.c.l.b16 %v2618
        %v3136 = vunpack.c.l.b16 %v2619
        %v3137 = vunpack.c.l.b16 %v2620
        %v3138 = vunpack.c.l.b16 %v2621
        %v3139 = vunpack.c.l.b16 %v2622
        %v3140 = vunpack.c.l.b16 %v2623
        %v3141 = vunpack.c.l.b16 %v2624
        %v3142 = vunpack.c.l.b16 %v2625
        %v3143 = vunpack.c.l.b16 %v2626
        %v3144 = vunpack.c.l.b16 %v2627
        %v3145 = vunpack.c.l.b16 %v2628
        %v3146 = vunpack.c.l.b16 %v2629
        %v3147 = vunpack.c.l.b16 %v2630
        %v3148 = vunpack.c.l.b16 %v2631
        %v3149 = vunpack.c.l.b16 %v2632
        %v3150 = vunpack.c.l.b16 %v2633
        %v3151 = vunpack.c.l.b16 %v2634
        %v3152 = vunpack.c.l.b16 %v2635
        %v3153 = vunpack.c.l.b16 %v2636
        %v3154 = vunpack.c.l.b16 %v2637
        %v3155 = vunpack.c.l.b16 %v2638
        %v3156 = vunpack.c.l.b16 %v2639
        %v3157 = vunpack.c.l.b16 %v2640
        %v3158 = vunpack.c.l.b16 %v2641
        %v3159 = vunpack.c.l.b16 %v2642
        %v3160 = vunpack.c.l.b16 %v2643
        %v3161 = vunpack.c.l.b16 %v2644
        %v3162 = vunpack.c.l.b16 %v2645
        %v3163 = vunpack.c.l.b16 %v2646
        %v3164 = vunpack.c.l.b16 %v2647
        %v3165 = vunpack.c.l.b16 %v2648
        %v3166 = vunpack.c.l.b16 %v2649
        %v3167 = vunpack.c.l.b16 %v2650
        %v3168 = vunpack.c.l.b16 %v2651
        %v3169 = vunpack.c.l.b16 %v2652
        %v3170 = vunpack.c.l.b16 %v2653
        %v3171 = vunpack.c.l.b16 %v2654
        %v3172 = vunpack.c.l.b16 %v2655
        %v3173 = vunpack.c.l.b16 %v2656
        %v3174 = vunpack.c.l.b16 %v2657
        %v3175 = vunpack.c.l.b16 %v2658
        %v3176 = vunpack.c.l.b16 %v2659
        %v3177 = vunpack.c.l.b16 %v2660
        %v3178 = vunpack.c.l.b16 %v2661
        %v3179 = vunpack.c.l.b16 %v2662
        %v3180 = vunpack.c.l.b16 %v2663
        %v3181 = vunpack.c.l.b16 %v2664
        %v3182 = vunpack.c.l.b16 %v2665
        %v3183 = vunpack.c.l.b16 %v2666
        %v3184 = vunpack.c.l.b16 %v2667
        %v3185 = vunpack.c.l.b16 %v2668
        %v3186 = vunpack.c.l.b16 %v2669
        %v3187 = vunpack.c.l.b16 %v2670
        %v3188 = vunpack.c.l.b16 %v2671
        %v3189 = vunpack.c.l.b16 %v2672
        %v3190 = vunpack.c.l.b16 %v2673
        %v3191 = vunpack.c.l.b16 %v2674
        %v3192 = vunpack.c.l.b16 %v2675
        %v3193 = vunpack.c.l.b16 %v2676
        %v3194 = vunpack.c.l.b16 %v2677
        %v3195 = vunpack.c.l.b16 %v2678
        %v3196 = vunpack.c.l.b16 %v2679
        %v3197 = vunpack.c.l.b16 %v2680
        %v3198 = vunpack.c.l.b16 %v2681
        %v3199 = vunpack.c.l.b16 %v2682
        %v3200 = vunpack.c.l.b16 %v2683
        %v3201 = vunpack.c.l.b16 %v2684
        %v3202 = vunpack.c.l.b16 %v2685
        %v3203 = vunpack.c.l.b16 %v2686
        %v3204 = vunpack.c.l.b16 %v2687
        %v3205 = vunpack.c.l.b16 %v2688
        %v3206 = vunpack.c.l.b16 %v2689
        %v3207 = vunpack.c.l.b16 %v2690
        %v3208 = vunpack.c.l.b16 %v2691
        %v3209 = vunpack.c.l.b16 %v2692
        %v3210 = vunpack.c.l.b16 %v2693
        %v3211 = vunpack.c.l.b16 %v2694
        %v3212 = vunpack.c.l.b16 %v2695
        %v3213 = vunpack.c.l.b16 %v2696
        %v3214 = vunpack.c.l.b16 %v2697
        %v3215 = vunpack.c.l.b16 %v2698
        %v3216 = vunpack.c.l.b16 %v2699
        %v3217 = vunpack.c.l.b16 %v2700
        %v3218 = vunpack.c.l.b16 %v2701
        %v3219 = vunpack.c.l.b16 %v2702
        %v3220 = vunpack.c.l.b16 %v2703
        %v3221 = vunpack.c.l.b16 %v2704
        %v3222 = vunpack.c.l.b16 %v2705
        %v3223 = vunpack.c.l.b16 %v2706
        %v3224 = vunpack.c.l.b16 %v2707
        %v3225 = vunpack.c.l.b16 %v2708
        %v3226 = vunpack.c.l.b16 %v2709
        %v3227 = vunpack.c.l.b16 %v2710
        %v3228 = vunpack.c.l.b16 %v2711
        %v3229 = vunpack.c.l.b16 %v2712
        %v3230 = vunpack.c.l.b16 %v2713
        %v3231 = vunpack.c.l.b16 %v2714
        %v3232 = vunpack.c.l.b16 %v2715
        %v3233 = vunpack.c.l.b16 %v2716
        %v3234 = vunpack.c.l.b16 %v2717
        %v3235 = vunpack.c.l.b16 %v2718
        %v3236 = vunpack.c.l.b16 %v2719
        %v3237 = vunpack.c.l.b16 %v2720
        %v3238 = vunpack.c.l.b16 %v2721
        %v3239 = vunpack.c.l.b16 %v2722
        %v3240 = vunpack.c.l.b16 %v2723
        %v3241 = vunpack.c.l.b16 %v2724
        %v3242 = vunpack.c.l.b16 %v2725
        %v3243 = vunpack.c.l.b16 %v2726
        %v3244 = vunpack.c.l.b16 %v2727
        %v3245 = vunpack.c.l.b16 %v2728
        %v3246 = vunpack.c.l.b16 %v2729
        %v3247 = vunpack.c.l.b16 %v2730
        %v3248 = vunpack.c.l.b16 %v2731
        %v3249 = vunpack.c.l.b16 %v2732
        %v3250 = vunpack.c.l.b16 %v2733
        %v3251 = vunpack.c.l.b16 %v2734
        %v3252 = vunpack.c.l.b16 %v2735
        %v3253 = vunpack.c.l.b16 %v2736
        %v3254 = vunpack.c.l.b16 %v2737
        %v3255 = vunpack.c.l.b16 %v2738
        %v3256 = vunpack.c.l.b16 %v2739
        %v3257 = vunpack.c.l.b16 %v2740
        %v3258 = vunpack.c.l.b16 %v2741
        %v3259 = vunpack.c.l.b16 %v2742
        %v3260 = vunpack.c.l.b16 %v2743
        %v3261 = vunpack.c.l.b16 %v2744
        %v3262 = vunpack.c.l.b16 %v2745
        %v3263 = vunpack.c.l.b16 %v2746
        %v3264 = vunpack.c.l.b16 %v2747
        %v3265 = vunpack.c.l.b16 %v2748
        %v3266 = vunpack.c.l.b16 %v2749
        %v3267 = vunpack.c.l.b16 %v2750
        %v3268 = vunpack.c.l.b16 %v2751
        %v3269 = vunpack.c.l.b16 %v2752
        %v3270 = vunpack.c.l.b16 %v2753
        %v3271 = vunpack.c.l.b16 %v2754
        %v3272 = vunpack.c.l.b16 %v2755
        %v3273 = vunpack.c.l.b16 %v2756
        %v3274 = vunpack.c.l.b16 %v2757
        %v3275 = vunpack.c.l.b16 %v2758
        %v3276 = vunpack.c.l.b16 %v2759
        %v3277 = vunpack.c.l.b16 %v2760
        %v3278 = vunpack.c.l.b16 %v2761
        %v3279 = vunpack.c.l.b16 %v2762
        %v3280 = vunpack.c.l.b16 %v2763
        %v3281 = vunpack.c.l.b16 %v2764
        %v3282 = vunpack.c.l.b16 %v2765
        %v3283 = vunpack.c.l.b16 %v2766
        %v3284 = vunpack.c.l.b16 %v2767
        %v3285 = vunpack.c.l.b16 %v2768
        %v3286 = vunpack.c.l.b16 %v2769
        %v3287 = vunpack.c.l.b16 %v2770
        %v3288 = vunpack.c.l.b16 %v2771
        %v3289 = vunpack.c.l.b16 %v2772
        %v3290 = vunpack.c.l.b16 %v2773
        %v3291 = vunpack.c.l.b16 %v2774
        %v3292 = vunpack.c.l.b16 %v2775
        %v3293 = vunpack.c.l.b16 %v2776
        %v3294 = vunpack.c.l.b16 %v2777
        %v3295 = vunpack.c.l.b16 %v2778
        %v3296 = vunpack.c.l.b16 %v2779
        %v3297 = vunpack.c.l.b16 %v2780
        %v3298 = vunpack.c.l.b16 %v2781
        %v3299 = vunpack.c.l.b16 %v2782
        %v3300 = vunpack.c.l.b16 %v2783
        %v3301 = vunpack.c.l.b16 %v2784
        %v3302 = vunpack.c.l.b16 %v2785
        %v3303 = vunpack.c.l.b16 %v2786
        %v3304 = vunpack.c.l.b16 %v2787
        %v3305 = vunpack.c.l.b16 %v2788
        %v3306 = vunpack.c.l.b16 %v2789
        %v3307 = vunpack.c.l.b16 %v2790
        %v3308 = vunpack.c.l.b16 %v2791
        %v3309 = vunpack.c.l.b16 %v2792
        %v3310 = vunpack.c.l.b16 %v2793
        %v3311 = vunpack.c.l.b16 %v2794
        %v3312 = vunpack.c.l.b16 %v2795
        %v3313 = vunpack.c.l.b16 %v2796
        %v3314 = vunpack.c.l.b16 %v2797
        %v3315 = vunpack.c.l.b16 %v2798
        %v3316 = vunpack.c.l.b16 %v2799
        %v3317 = vunpack.c.l.b16 %v2800
        %v3318 = vunpack.c.l.b16 %v2801
        %v3319 = vunpack.c.l.b16 %v2802
        %v3320 = vunpack.c.l.b16 %v2803
        %v3321 = vunpack.c.l.b16 %v2804
        %v3322 = vunpack.c.l.b16 %v2805
        %v3323 = vunpack.c.l.b16 %v2806
        %v3324 = vunpack.c.l.b16 %v2807
        %v3325 = vunpack.c.l.b16 %v2808
        %v3326 = vunpack.c.l.b16 %v2809
        %v3327 = vunpack.c.l.b16 %v2810
        %v3328 = vunpack.c.l.b16 %v2811
        %v3329 = vunpack.c.l.b16 %v2812
        %v3330 = vunpack.c.l.b16 %v2813
        %v3331 = vunpack.c.l.b16 %v2814
        %v3332 = vunpack.c.l.b16 %v2815
        %v3333 = vpack.c.b16 %v3078, %v3077
        %v3334 = vpack.c.b16 %v3080, %v3079
        %v3335 = vpack.c.b16 %v3082, %v3081
        %v3336 = vpack.c.b16 %v3084, %v3083
        %v3337 = vpack.c.b16 %v3086, %v3085
        %v3338 = vpack.c.b16 %v3088, %v3087
        %v3339 = vpack.c.b16 %v3090, %v3089
        %v3340 = vpack.c.b16 %v3092, %v3091
        %v3341 = vpack.c.b16 %v3094, %v3093
        %v3342 = vpack.c.b16 %v3096, %v3095
        %v3343 = vpack.c.b16 %v3098, %v3097
        %v3344 = vpack.c.b16 %v3100, %v3099
        %v3345 = vpack.c.b16 %v3102, %v3101
        %v3346 = vpack.c.b16 %v3104, %v3103
        %v3347 = vpack.c.b16 %v3106, %v3105
        %v3348 = vpack.c.b16 %v3108, %v3107
        %v3349 = vpack.c.b16 %v3110, %v3109
        %v3350 = vpack.c.b16 %v3112, %v3111
        %v3351 = vpack.c.b16 %v3114, %v3113
        %v3352 = vpack.c.b16 %v3116, %v3115
        %v3353 = vpack.c.b16 %v3118, %v3117
        %v3354 = vpack.c.b16 %v3120, %v3119
        %v3355 = vpack.c.b16 %v3122, %v3121
        %v3356 = vpack.c.b16 %v3124, %v3123
        %v3357 = vpack.c.b16 %v3126, %v3125
        %v3358 = vpack.c.b16 %v3128, %v3127
        %v3359 = vpack.c.b16 %v3130, %v3129
        %v3360 = vpack.c.b16 %v3132, %v3131
        %v3361 = vpack.c.b16 %v3134, %v3133
        %v3362 = vpack.c.b16 %v3136, %v3135
        %v3363 = vpack.c.b16 %v3138, %v3137
        %v3364 = vpack.c.b16 %v3140, %v3139
        %v3365 = vpack.c.b16 %v3142, %v3141
        %v3366 = vpack.c.b16 %v3144, %v3143
        %v3367 = vpack.c.b16 %v3146, %v3145
        %v3368 = vpack.c.b16 %v3148, %v3147
        %v3369 = vpack.c.b16 %v3150, %v3149
        %v3370 = vpack.c.b16 %v3152, %v3151
        %v3371 = vpack.c.b16 %v3154, %v3153
        %v3372 = vpack.c.b16 %v3156, %v3155
        %v3373 = vpack.c.b16 %v3158, %v3157
        %v3374 = vpack.c.b16 %v3160, %v3159
        %v3375 = vpack.c.b16 %v3162, %v3161
        %v3376 = vpack.c.b16 %v3164, %v3163
        %v3377 = vpack.c.b16 %v3166, %v3165
        %v3378 = vpack.c.b16 %v3168, %v3167
        %v3379 = vpack.c.b16 %v3170, %v3169
        %v3380 = vpack.c.b16 %v3172, %v3171
        %v3381 = vpack.c.b16 %v3174, %v3173
        %v3382 = vpack.c.b16 %v3176, %v3175
        %v3383 = vpack.c.b16 %v3178, %v3177
        %v3384 = vpack.c.b16 %v3180, %v3179
        %v3385 = vpack.c.b16 %v3182, %v3181
        %v3386 = vpack.c.b16 %v3184, %v3183
        %v3387 = vpack.c.b16 %v3186, %v3185
        %v3388 = vpack.c.b16 %v3188, %v3187
        %v3389 = vpack.c.b16 %v3190, %v3189
        %v3390 = vpack.c.b16 %v3192, %v3191
        %v3391 = vpack.c.b16 %v3194, %v3193
        %v3392 = vpack.c.b16 %v3196, %v3195
        %v3393 = vpack.c.b16 %v3198, %v3197
        %v3394 = vpack.c.b16 %v3200, %v3199
        %v3395 = vpack.c.b16 %v3202, %v3201
        %v3396 = vpack.c.b16 %v3204, %v3203
        %v3397 = vpack.c.b16 %v3206, %v3205
        %v3398 = vpack.c.b16 %v3208, %v3207
        %v3399 = vpack.c.b16 %v3210, %v3209
        %v3400 = vpack.c.b16 %v3212, %v3211
        %v3401 = vpack.c.b16 %v3214, %v3213
        %v3402 = vpack.c.b16 %v3216, %v3215
        %v3403 = vpack.c.b16 %v3218, %v3217
        %v3404 = vpack.c.b16 %v3220, %v3219
        %v3405 = vpack.c.b16 %v3222, %v3221
        %v3406 = vpack.c.b16 %v3224, %v3223
        %v3407 = vpack.c.b16 %v3226, %v3225
        %v3408 = vpack.c.b16 %v3228, %v3227
        %v3409 = vpack.c.b16 %v3230, %v3229
        %v3410 = vpack.c.b16 %v3232, %v3231
        %v3411 = vpack.c.b16 %v3234, %v3233
        %v3412 = vpack.c.b16 %v3236, %v3235
        %v3413 = vpack.c.b16 %v3238, %v3237
        %v3414 = vpack.c.b16 %v3240, %v3239
        %v3415 = vpack.c.b16 %v3242, %v3241
        %v3416 = vpack.c.b16 %v3244, %v3243
        %v3417 = vpack.c.b16 %v3246, %v3245
        %v3418 = vpack.c.b16 %v3248, %v3247
        %v3419 = vpack.c.b16 %v3250, %v3249
        %v3420 = vpack.c.b16 %v3252, %v3251
        %v3421 = vpack.c.b16 %v3254, %v3253
        %v3422 = vpack.c.b16 %v3256, %v3255
        %v3423 = vpack.c.b16 %v3258, %v3257
        %v3424 = vpack.c.b16 %v3260, %v3259
        %v3425 = vpack.c.b16 %v3262, %v3261
        %v3426 = vpack.c.b16 %v3264, %v3263
        %v3427 = vpack.c.b16 %v3266, %v3265
        %v3428 = vpack.c.b16 %v3268, %v3267
        %v3429 = vpack.c.b16 %v3270, %v3269
        %v3430 = vpack.c.b16 %v3272, %v3271
        %v3431 = vpack.c.b16 %v3274, %v3273
        %v3432 = vpack.c.b16 %v3276, %v3275
        %v3433 = vpack.c.b16 %v3278, %v3277
        %v3434 = vpack.c.b16 %v3280, %v3279
        %v3435 = vpack.c.b16 %v3282, %v3281
        %v3436 = vpack.c.b16 %v3284, %v3283
        %v3437 = vpack.c.b16 %v3286, %v3285
        %v3438 = vpack.c.b16 %v3288, %v3287
        %v3439 = vpack.c.b16 %v3290, %v3289
        %v3440 = vpack.c.b16 %v3292, %v3291
        %v3441 = vpack.c.b16 %v3294, %v3293
        %v3442 = vpack.c.b16 %v3296, %v3295
        %v3443 = vpack.c.b16 %v3298, %v3297
        %v3444 = vpack.c.b16 %v3300, %v3299
        %v3445 = vpack.c.b16 %v3302, %v3301
        %v3446 = vpack.c.b16 %v3304, %v3303
        %v3447 = vpack.c.b16 %v3306, %v3305
        %v3448 = vpack.c.b16 %v3308, %v3307
        %v3449 = vpack.c.b16 %v3310, %v3309
        %v3450 = vpack.c.b16 %v3312, %v3311
        %v3451 = vpack.c.b16 %v3314, %v3313
        %v3452 = vpack.c.b16 %v3316, %v3315
        %v3453 = vpack.c.b16 %v3318, %v3317
        %v3454 = vpack.c.b16 %v3320, %v3319
        %v3455 = vpack.c.b16 %v3322, %v3321
        %v3456 = vpack.c.b16 %v3324, %v3323
        %v3457 = vpack.c.b16 %v3326, %v3325
        %v3458 = vpack.c.b16 %v3328, %v3327
        %v3459 = vpack.c.b16 %v3330, %v3329
        %v3460 = vpack.c.b16 %v3332, %v3331
        %3589 = vmatprep.subr.bf16.mxu0 0
        %3590 = vmatpush1.bf16.msra.mxu0 %v3340
        %3591 = vmatprep.subr.bf16.mxu0 0
        %3592 = vmatpush1.bf16.msra.mxu0 %v3339
        %3593 = vmatprep.subr.bf16.mxu0 0
        %3594 = vmatpush1.bf16.msra.mxu0 %v3338
        %3595 = vmatprep.subr.bf16.mxu0 0
        %3596 = vmatpush1.bf16.msra.mxu0 %v3337
        %3597 = vmatprep.subr.bf16.mxu0 0
        %3598 = vmatpush1.bf16.msra.mxu0 %v3336
        %3599 = vmatprep.subr.bf16.mxu0 0
        %3600 = vmatpush1.bf16.msra.mxu0 %v3335
        %3601 = vmatprep.subr.bf16.mxu0 0
        %3602 = vmatpush1.bf16.msra.mxu0 %v3334
        %3603 = vmatprep.subr.bf16.mxu0 0
        %3604 = vmatpush1.bf16.msra.mxu0 %v3333
        %3605 = vmatprep.subr.bf16.mxu0 0
        %3606 = vmatpush2.bf16.msra.mxu0 %v3348
        %3607 = vmatprep.subr.bf16.mxu0 0
        %3608 = vmatpush2.bf16.msra.mxu0 %v3347
        %3609 = vmatprep.subr.bf16.mxu0 0
        %3610 = vmatpush2.bf16.msra.mxu0 %v3346
        %3611 = vmatprep.subr.bf16.mxu0 0
        %3612 = vmatpush2.bf16.msra.mxu0 %v3345
        %3613 = vmatprep.subr.bf16.mxu0 0
        %3614 = vmatpush2.bf16.msra.mxu0 %v3344
        %3615 = vmatprep.subr.bf16.mxu0 0
        %3616 = vmatpush2.bf16.msra.mxu0 %v3343
        %3617 = vmatprep.subr.bf16.mxu0 0
        %3618 = vmatpush2.bf16.msra.mxu0 %v3342
        %3619 = vmatprep.subr.bf16.mxu0 0
        %3620 = vmatpush2.bf16.msra.mxu0 %v3341
        %3621 = vmatprep.mubr.bf16.mxu0 %v2545
        %3622 = vmatmul.mubr.bf16.gmra.mxu0 %v2544
        %v3623 = vpop.f32.mrf.mxu0
        %v3624 = vadd.f32 %v2820, %v3623
        %v3625 = vpop.f32.mrf.mxu0
        %v3626 = vpop.f32.mrf.mxu0
        %v3627 = vpop.f32.mrf.mxu0
        %3628 = vdwg.mxu0
        %3629 = vmatprep.subr.bf16.mxu0 0
        %3630 = vmatpush1.bf16.msra.mxu0 %v3356
        %3631 = vmatprep.subr.bf16.mxu0 0
        %3632 = vmatpush1.bf16.msra.mxu0 %v3355
        %3633 = vmatprep.subr.bf16.mxu0 0
        %3634 = vmatpush1.bf16.msra.mxu0 %v3354
        %3635 = vmatprep.subr.bf16.mxu0 0
        %3636 = vmatpush1.bf16.msra.mxu0 %v3353
        %3637 = vmatprep.subr.bf16.mxu0 0
        %3638 = vmatpush1.bf16.msra.mxu0 %v3352
        %3639 = vmatprep.subr.bf16.mxu0 0
        %3640 = vmatpush1.bf16.msra.mxu0 %v3351
        %3641 = vmatprep.subr.bf16.mxu0 0
        %3642 = vmatpush1.bf16.msra.mxu0 %v3350
        %3643 = vmatprep.subr.bf16.mxu0 0
        %3644 = vmatpush1.bf16.msra.mxu0 %v3349
        %3645 = vmatprep.subr.bf16.mxu0 0
        %3646 = vmatpush2.bf16.msra.mxu0 %v3364
        %3647 = vmatprep.subr.bf16.mxu0 0
        %3648 = vmatpush2.bf16.msra.mxu0 %v3363
        %3649 = vmatprep.subr.bf16.mxu0 0
        %3650 = vmatpush2.bf16.msra.mxu0 %v3362
        %3651 = vmatprep.subr.bf16.mxu0 0
        %3652 = vmatpush2.bf16.msra.mxu0 %v3361
        %3653 = vmatprep.subr.bf16.mxu0 0
        %3654 = vmatpush2.bf16.msra.mxu0 %v3360
        %3655 = vmatprep.subr.bf16.mxu0 0
        %3656 = vmatpush2.bf16.msra.mxu0 %v3359
        %3657 = vmatprep.subr.bf16.mxu0 0
        %3658 = vmatpush2.bf16.msra.mxu0 %v3358
        %3659 = vmatprep.subr.bf16.mxu0 0
        %3660 = vmatpush2.bf16.msra.mxu0 %v3357
        %3661 = vmatprep.mubr.bf16.mxu0 %v2547
        %3662 = vmatmul.mubr.bf16.gmra.mxu0 %v2546
        %v3663 = vpop.f32.mrf.mxu0
        %v3664 = vadd.f32 %v3624, %v3663
        %v3665 = vpop.f32.mrf.mxu0
        %v3666 = vpop.f32.mrf.mxu0
        %v3667 = vpop.f32.mrf.mxu0
        %3668 = vdwg.mxu0
        %3669 = vmatprep.subr.bf16.mxu0 0
        %3670 = vmatpush1.bf16.msra.mxu0 %v3372
        %3671 = vmatprep.subr.bf16.mxu0 0
        %3672 = vmatpush1.bf16.msra.mxu0 %v3371
        %3673 = vmatprep.subr.bf16.mxu0 0
        %3674 = vmatpush1.bf16.msra.mxu0 %v3370
        %3675 = vmatprep.subr.bf16.mxu0 0
        %3676 = vmatpush1.bf16.msra.mxu0 %v3369
        %3677 = vmatprep.subr.bf16.mxu0 0
        %3678 = vmatpush1.bf16.msra.mxu0 %v3368
        %3679 = vmatprep.subr.bf16.mxu0 0
        %3680 = vmatpush1.bf16.msra.mxu0 %v3367
        %3681 = vmatprep.subr.bf16.mxu0 0
        %3682 = vmatpush1.bf16.msra.mxu0 %v3366
        %3683 = vmatprep.subr.bf16.mxu0 0
        %3684 = vmatpush1.bf16.msra.mxu0 %v3365
        %3685 = vmatprep.subr.bf16.mxu0 0
        %3686 = vmatpush2.bf16.msra.mxu0 %v3380
        %3687 = vmatprep.subr.bf16.mxu0 0
        %3688 = vmatpush2.bf16.msra.mxu0 %v3379
        %3689 = vmatprep.subr.bf16.mxu0 0
        %3690 = vmatpush2.bf16.msra.mxu0 %v3378
        %3691 = vmatprep.subr.bf16.mxu0 0
        %3692 = vmatpush2.bf16.msra.mxu0 %v3377
        %3693 = vmatprep.subr.bf16.mxu0 0
        %3694 = vmatpush2.bf16.msra.mxu0 %v3376
        %3695 = vmatprep.subr.bf16.mxu0 0
        %3696 = vmatpush2.bf16.msra.mxu0 %v3375
        %3697 = vmatprep.subr.bf16.mxu0 0
        %3698 = vmatpush2.bf16.msra.mxu0 %v3374
        %3699 = vmatprep.subr.bf16.mxu0 0
        %3700 = vmatpush2.bf16.msra.mxu0 %v3373
        %3701 = vmatprep.mubr.bf16.mxu0 %v2549
        %3702 = vmatmul.mubr.bf16.gmra.mxu0 %v2548
        %v3703 = vpop.f32.mrf.mxu0
        %v3704 = vadd.f32 %v3664, %v3703
        %v3705 = vpop.f32.mrf.mxu0
        %v3706 = vpop.f32.mrf.mxu0
        %v3707 = vpop.f32.mrf.mxu0
        %3708 = vdwg.mxu0
        %3709 = vmatprep.subr.bf16.mxu0 0
        %3710 = vmatpush1.bf16.msra.mxu0 %v3388
        %3711 = vmatprep.subr.bf16.mxu0 0
        %3712 = vmatpush1.bf16.msra.mxu0 %v3387
        %3713 = vmatprep.subr.bf16.mxu0 0
        %3714 = vmatpush1.bf16.msra.mxu0 %v3386
        %3715 = vmatprep.subr.bf16.mxu0 0
        %3716 = vmatpush1.bf16.msra.mxu0 %v3385
        %3717 = vmatprep.subr.bf16.mxu0 0
        %3718 = vmatpush1.bf16.msra.mxu0 %v3384
        %3719 = vmatprep.subr.bf16.mxu0 0
        %3720 = vmatpush1.bf16.msra.mxu0 %v3383
        %3721 = vmatprep.subr.bf16.mxu0 0
        %3722 = vmatpush1.bf16.msra.mxu0 %v3382
        %3723 = vmatprep.subr.bf16.mxu0 0
        %3724 = vmatpush1.bf16.msra.mxu0 %v3381
        %3725 = vmatprep.subr.bf16.mxu0 0
        %3726 = vmatpush2.bf16.msra.mxu0 %v3396
        %3727 = vmatprep.subr.bf16.mxu0 0
        %3728 = vmatpush2.bf16.msra.mxu0 %v3395
        %3729 = vmatprep.subr.bf16.mxu0 0
        %3730 = vmatpush2.bf16.msra.mxu0 %v3394
        %3731 = vmatprep.subr.bf16.mxu0 0
        %3732 = vmatpush2.bf16.msra.mxu0 %v3393
        %3733 = vmatprep.subr.bf16.mxu0 0
        %3734 = vmatpush2.bf16.msra.mxu0 %v3392
        %3735 = vmatprep.subr.bf16.mxu0 0
        %3736 = vmatpush2.bf16.msra.mxu0 %v3391
        %3737 = vmatprep.subr.bf16.mxu0 0
        %3738 = vmatpush2.bf16.msra.mxu0 %v3390
        %3739 = vmatprep.subr.bf16.mxu0 0
        %3740 = vmatpush2.bf16.msra.mxu0 %v3389
        %3741 = vmatprep.mubr.bf16.mxu0 %v2551
        %3742 = vmatmul.mubr.bf16.gmra.mxu0 %v2550
        %v3743 = vpop.f32.mrf.mxu0
        %v3744 = vadd.f32 %v3704, %v3743
        %v3745 = vpop.f32.mrf.mxu0
        %v3746 = vpop.f32.mrf.mxu0
        %v3747 = vpop.f32.mrf.mxu0
        %3748 = vdwg.mxu0
        %3749 = vmatprep.subr.bf16.mxu0 0
        %3750 = vmatpush1.bf16.msra.mxu0 %v3404
        %3751 = vmatprep.subr.bf16.mxu0 0
        %3752 = vmatpush1.bf16.msra.mxu0 %v3403
        %3753 = vmatprep.subr.bf16.mxu0 0
        %3754 = vmatpush1.bf16.msra.mxu0 %v3402
        %3755 = vmatprep.subr.bf16.mxu0 0
        %3756 = vmatpush1.bf16.msra.mxu0 %v3401
        %3757 = vmatprep.subr.bf16.mxu0 0
        %3758 = vmatpush1.bf16.msra.mxu0 %v3400
        %3759 = vmatprep.subr.bf16.mxu0 0
        %3760 = vmatpush1.bf16.msra.mxu0 %v3399
        %3761 = vmatprep.subr.bf16.mxu0 0
        %3762 = vmatpush1.bf16.msra.mxu0 %v3398
        %3763 = vmatprep.subr.bf16.mxu0 0
        %3764 = vmatpush1.bf16.msra.mxu0 %v3397
        %3765 = vmatprep.subr.bf16.mxu0 0
        %3766 = vmatpush2.bf16.msra.mxu0 %v3412
        %3767 = vmatprep.subr.bf16.mxu0 0
        %3768 = vmatpush2.bf16.msra.mxu0 %v3411
        %3769 = vmatprep.subr.bf16.mxu0 0
        %3770 = vmatpush2.bf16.msra.mxu0 %v3410
        %3771 = vmatprep.subr.bf16.mxu0 0
        %3772 = vmatpush2.bf16.msra.mxu0 %v3409
        %3773 = vmatprep.subr.bf16.mxu0 0
        %3774 = vmatpush2.bf16.msra.mxu0 %v3408
        %3775 = vmatprep.subr.bf16.mxu0 0
        %3776 = vmatpush2.bf16.msra.mxu0 %v3407
        %3777 = vmatprep.subr.bf16.mxu0 0
        %3778 = vmatpush2.bf16.msra.mxu0 %v3406
        %3779 = vmatprep.subr.bf16.mxu0 0
        %3780 = vmatpush2.bf16.msra.mxu0 %v3405
        %3781 = vmatprep.mubr.bf16.mxu0 %v2553
        %3782 = vmatmul.mubr.bf16.gmra.mxu0 %v2552
        %v3783 = vpop.f32.mrf.mxu0
        %v3784 = vadd.f32 %v3744, %v3783
        %v3785 = vpop.f32.mrf.mxu0
        %v3786 = vpop.f32.mrf.mxu0
        %v3787 = vpop.f32.mrf.mxu0
        %3788 = vdwg.mxu0
        %3789 = vmatprep.subr.bf16.mxu0 0
        %3790 = vmatpush1.bf16.msra.mxu0 %v3420
        %3791 = vmatprep.subr.bf16.mxu0 0
        %3792 = vmatpush1.bf16.msra.mxu0 %v3419
        %3793 = vmatprep.subr.bf16.mxu0 0
        %3794 = vmatpush1.bf16.msra.mxu0 %v3418
        %3795 = vmatprep.subr.bf16.mxu0 0
        %3796 = vmatpush1.bf16.msra.mxu0 %v3417
        %3797 = vmatprep.subr.bf16.mxu0 0
        %3798 = vmatpush1.bf16.msra.mxu0 %v3416
        %3799 = vmatprep.subr.bf16.mxu0 0
        %3800 = vmatpush1.bf16.msra.mxu0 %v3415
        %3801 = vmatprep.subr.bf16.mxu0 0
        %3802 = vmatpush1.bf16.msra.mxu0 %v3414
        %3803 = vmatprep.subr.bf16.mxu0 0
        %3804 = vmatpush1.bf16.msra.mxu0 %v3413
        %3805 = vmatprep.subr.bf16.mxu0 0
        %3806 = vmatpush2.bf16.msra.mxu0 %v3428
        %3807 = vmatprep.subr.bf16.mxu0 0
        %3808 = vmatpush2.bf16.msra.mxu0 %v3427
        %3809 = vmatprep.subr.bf16.mxu0 0
        %3810 = vmatpush2.bf16.msra.mxu0 %v3426
        %3811 = vmatprep.subr.bf16.mxu0 0
        %3812 = vmatpush2.bf16.msra.mxu0 %v3425
        %3813 = vmatprep.subr.bf16.mxu0 0
        %3814 = vmatpush2.bf16.msra.mxu0 %v3424
        %3815 = vmatprep.subr.bf16.mxu0 0
        %3816 = vmatpush2.bf16.msra.mxu0 %v3423
        %3817 = vmatprep.subr.bf16.mxu0 0
        %3818 = vmatpush2.bf16.msra.mxu0 %v3422
        %3819 = vmatprep.subr.bf16.mxu0 0
        %3820 = vmatpush2.bf16.msra.mxu0 %v3421
        %3821 = vmatprep.mubr.bf16.mxu0 %v2555
        %3822 = vmatmul.mubr.bf16.gmra.mxu0 %v2554
        %v3823 = vpop.f32.mrf.mxu0
        %v3824 = vadd.f32 %v3784, %v3823
        %v3825 = vpop.f32.mrf.mxu0
        %v3826 = vpop.f32.mrf.mxu0
        %v3827 = vpop.f32.mrf.mxu0
        %3828 = vdwg.mxu0
        %3829 = vmatprep.subr.bf16.mxu0 0
        %3830 = vmatpush1.bf16.msra.mxu0 %v3436
        %3831 = vmatprep.subr.bf16.mxu0 0
        %3832 = vmatpush1.bf16.msra.mxu0 %v3435
        %3833 = vmatprep.subr.bf16.mxu0 0
        %3834 = vmatpush1.bf16.msra.mxu0 %v3434
        %3835 = vmatprep.subr.bf16.mxu0 0
        %3836 = vmatpush1.bf16.msra.mxu0 %v3433
        %3837 = vmatprep.subr.bf16.mxu0 0
        %3838 = vmatpush1.bf16.msra.mxu0 %v3432
        %3839 = vmatprep.subr.bf16.mxu0 0
        %3840 = vmatpush1.bf16.msra.mxu0 %v3431
        %3841 = vmatprep.subr.bf16.mxu0 0
        %3842 = vmatpush1.bf16.msra.mxu0 %v3430
        %3843 = vmatprep.subr.bf16.mxu0 0
        %3844 = vmatpush1.bf16.msra.mxu0 %v3429
        %3845 = vmatprep.subr.bf16.mxu0 0
        %3846 = vmatpush2.bf16.msra.mxu0 %v3444
        %3847 = vmatprep.subr.bf16.mxu0 0
        %3848 = vmatpush2.bf16.msra.mxu0 %v3443
        %3849 = vmatprep.subr.bf16.mxu0 0
        %3850 = vmatpush2.bf16.msra.mxu0 %v3442
        %3851 = vmatprep.subr.bf16.mxu0 0
        %3852 = vmatpush2.bf16.msra.mxu0 %v3441
        %3853 = vmatprep.subr.bf16.mxu0 0
        %3854 = vmatpush2.bf16.msra.mxu0 %v3440
        %3855 = vmatprep.subr.bf16.mxu0 0
        %3856 = vmatpush2.bf16.msra.mxu0 %v3439
        %3857 = vmatprep.subr.bf16.mxu0 0
        %3858 = vmatpush2.bf16.msra.mxu0 %v3438
        %3859 = vmatprep.subr.bf16.mxu0 0
        %3860 = vmatpush2.bf16.msra.mxu0 %v3437
        %3861 = vmatprep.mubr.bf16.mxu0 %v2557
        %3862 = vmatmul.mubr.bf16.gmra.mxu0 %v2556
        %v3863 = vpop.f32.mrf.mxu0
        %v3864 = vadd.f32 %v3824, %v3863
        %v3865 = vpop.f32.mrf.mxu0
        %v3866 = vpop.f32.mrf.mxu0
        %v3867 = vpop.f32.mrf.mxu0
        %3868 = vdwg.mxu0
        %3869 = vmatprep.subr.bf16.mxu0 0
        %3870 = vmatpush1.bf16.msra.mxu0 %v3452
        %3871 = vmatprep.subr.bf16.mxu0 0
        %3872 = vmatpush1.bf16.msra.mxu0 %v3451
        %3873 = vmatprep.subr.bf16.mxu0 0
        %3874 = vmatpush1.bf16.msra.mxu0 %v3450
        %3875 = vmatprep.subr.bf16.mxu0 0
        %3876 = vmatpush1.bf16.msra.mxu0 %v3449
        %3877 = vmatprep.subr.bf16.mxu0 0
        %3878 = vmatpush1.bf16.msra.mxu0 %v3448
        %3879 = vmatprep.subr.bf16.mxu0 0
        %3880 = vmatpush1.bf16.msra.mxu0 %v3447
        %3881 = vmatprep.subr.bf16.mxu0 0
        %3882 = vmatpush1.bf16.msra.mxu0 %v3446
        %3883 = vmatprep.subr.bf16.mxu0 0
        %3884 = vmatpush1.bf16.msra.mxu0 %v3445
        %3885 = vmatprep.subr.bf16.mxu0 0
        %3886 = vmatpush2.bf16.msra.mxu0 %v3460
        %3887 = vmatprep.subr.bf16.mxu0 0
        %3888 = vmatpush2.bf16.msra.mxu0 %v3459
        %3889 = vmatprep.subr.bf16.mxu0 0
        %3890 = vmatpush2.bf16.msra.mxu0 %v3458
        %3891 = vmatprep.subr.bf16.mxu0 0
        %3892 = vmatpush2.bf16.msra.mxu0 %v3457
        %3893 = vmatprep.subr.bf16.mxu0 0
        %3894 = vmatpush2.bf16.msra.mxu0 %v3456
        %3895 = vmatprep.subr.bf16.mxu0 0
        %3896 = vmatpush2.bf16.msra.mxu0 %v3455
        %3897 = vmatprep.subr.bf16.mxu0 0
        %3898 = vmatpush2.bf16.msra.mxu0 %v3454
        %3899 = vmatprep.subr.bf16.mxu0 0
        %3900 = vmatpush2.bf16.msra.mxu0 %v3453
        %3901 = vmatprep.mubr.bf16.mxu0 %v2559
        %3902 = vmatmul.mubr.bf16.gmra.mxu0 %v2558
        %v3903 = vpop.f32.mrf.mxu0
        %v3904 = vadd.f32 %v3864, %v3903
        %v3905 = vpop.f32.mrf.mxu0
        %v3906 = vpop.f32.mrf.mxu0
        %v3907 = vpop.f32.mrf.mxu0
        %3908 = vdwg.mxu0
        %v3909 = vadd.f32 %v1919, %v3904
        %v3910 = vsel %vm434, %v3909, 0.0
        %3911 = vadd.xlane.f32.xlu0 %v3910
        %v3912 = vpop.xlane.xlu0 %3911
        %v3913 = vmul.f32 %v3912, %v1142
        %v3914 = vsub.f32 %v3909, %v3913
        %v3915 = vmul.f32 %v3914, %v3914
        %v3916 = vsel %vm434, %v3915, 0.0
        %3917 = vadd.xlane.f32.xlu0 %v3916
        %v3918 = vpop.xlane.xlu0 %3917
        %v3919 = vmul.f32 %v3918, %v1142
        %v3920 = vadd.f32 %v3919, 1e-05
        %v3921 = vrsqrt.pop %v3920
        %v3922 = vmul.f32 %v3914, %v3921
        %v3923 = vld [vmem:[%s399 + $0xd] sm:$0x1]
        %v3924 = vlaneseq
        %v3925 = vshrl.u32 %v3924, 7
        %v3926 = vsub.s32 0, %v3925
        %v3927 = vrot.slane %v3923, %v3926
        %v3928 = vmul.f32 %v3922, %v3927
        %v3929 = vld [vmem:[%s399 + $0xe] sm:$0x1]
        %v3930 = vlaneseq
        %v3931 = vshrl.u32 %v3930, 7
        %v3932 = vsub.s32 0, %v3931
        %v3933 = vrot.slane %v3929, %v3932
        %v3934 = vadd.f32 %v3928, %v3933
        %3935 = vst.msk [vmem:[#allocation2] sm:$0xff] %vm434, %v3934
        %3936 = vst.msk [vmem:[%s367] sm:$0xff] %vm434, %v3934
        %s3937 = sand.u32 %s223, 1
        %s3938 = scalar_lea.sflag [#allocation4], %s3937
        %s3939 = sand.u32 %s223, 1
        %s3940 = smul.addr %s3939, 8
        %s3941 = scalar_lea.vmem [#allocation3], %s3940
        // Predicated region
        $region53: #{transformer_attention_forward.1} parent=47 // pred_check
          %p3942 = pneg %p233
        $region54: #{transformer_attention_forward.1} parent=47 // pred_check_branch
          %3944 = sbr.rel (%p3942) target = $region56
        $region55: #{transformer_attention_forward.1} parent=47 // pred_region
          %s3946 = ssub.s32 128, 128
          %3947 = vsyncadd %s3938, %s3946
          %s3948 = smul.addr %s25, 128
          %s3949 = scalar_lea.hbm %s7, %s3948
          %s3951 = sshll.u32 %s3941, 4
          %s3952 = int_to_ptr.vmem [resolvable:$true] %s3951
          %3954 = dma.vmem_to_hbm [thread:$0]  %s3952, 128, %s3949, %s3938
        $region56: #{transformer_attention_forward.1} parent=47 // pred_fallthru
          _
      $region48: #{transformer_attention_forward.1} parent=5 // pred_fallthru
        _
      %p3955 = scmp.le.s32.totalorder 2, %s16
      // Predicated region
      $region57: #{transformer_attention_forward.1} parent=5 // pred_check
        %p3956 = pneg %p3955
      $region58: #{transformer_attention_forward.1} parent=5 // pred_check_branch
        %3958 = sbr.rel (%p3956) target = $region60
      $region59: #{transformer_attention_forward.1} parent=5 // pred_region
        %s3959 = ssub.s32 %s16, 2
        // Predicated region
        $region61: #{transformer_attention_forward.1} parent=59 // pred_check
          %p3960 = pneg %p239
        $region62: #{transformer_attention_forward.1} parent=59 // pred_check_branch
          %3962 = sbr.rel (%p3960) target = $region64
        $region63: #{transformer_attention_forward.1} parent=59 // pred_region
          %s3963 = sand.u32 %s224, 1
          %s3964 = scalar_lea.sflag [#allocation4], %s3963
          %s3965 = sand.u32 %s224, 1
          %s3966 = smul.addr %s3965, 8
          %s3967 = scalar_lea.vmem [#allocation3], %s3966
          %3968 = dma.done %s3964, 128
        $region64: #{transformer_attention_forward.1} parent=59 // pred_fallthru
          _
      $region60: #{transformer_attention_forward.1} parent=5 // pred_fallthru
        _
    $region6: #{transformer_attention_forward.1} parent=1 // loop_footer
      %s20 = sadd.s32 1, %s16
    $region7: #{transformer_attention_forward.1} parent=1 // loop_footer_branch
      %15 = sbr.rel target = $region3
    $region8: #{transformer_attention_forward.1} parent=1 // loop_exit
      _
    %3969 = vsyncpa [#allocation4], 1
    %s3970 = scalar_lea.sflag [#allocation4], 1
    %3971 = vsyncpa %s3970, 1

</llo_original>
